<compile_context>
chip_gen: v7x
topology: tpu7x:2x2x1
jax: 0.10.0
libtpu: 0.0.40
codegen_flags: <defaults>
</compile_context>

<pallas_src>
import jax
import jax.numpy as jnp
from jax.experimental import pallas as pl
from jax.experimental.pallas import tpu as pltpu

SEQ = 8
INPUT_SIZE = 22
HIDDEN_SIZE = 46
OUTPUT_SIZE = 1
BN_EPS = 1e-5
GSTRIDE = 128                    # per-gate lane stride in the fused gate dim
FUSED = 4 * GSTRIDE              # fused gate dimension (i, f, g, o)


def _sigmoid(x):
    # sigmoid(x) == 0.5*(1 + tanh(x/2)); guarantees a single EUP op per call.
    return 0.5 * jnp.tanh(0.5 * x) + 0.5


def lstmnet_kernel(x_ref, wih_ref, whh_ref, b_ref, gamma_ref, beta_ref,
                   wfc_ref, bfc_ref, out_ref, xproj_ref, hs_ref):
    """Forward pass for one block of B_BLOCK independent sequences.

    x_ref:     (SEQ, B_BLOCK, INPUT) f32   time-major input block
    wih_ref:   (INPUT, FUSED)  bf16        fused input->gate weights (i|f|g|o)
    whh_ref:   (HIDDEN, FUSED) bf16        fused hidden->gate weights
    b_ref:     (1, FUSED)      f32         b_ih + b_hh, fused layout
    gamma/beta:(1, HIDDEN)     f32         BatchNorm1d affine params
    wfc_ref:   (1, HIDDEN), bfc_ref: (1,1) final Linear
    out_ref:   (B_BLOCK, SEQ)  f32         sigmoid outputs
    xproj_ref: (SEQ*B_BLOCK, FUSED) f32    VMEM scratch (hoisted input proj)
    hs_ref:    (SEQ, B_BLOCK, HIDDEN) f32  VMEM scratch (hidden states)
    """
    seq, bblk, isize = x_ref.shape
    hidden = whh_ref.shape[0]

    # ---- Hoisted input projection (+ fused bias): one bf16 MXU matmul for all
    # seq*bblk rows, spilled straight to VMEM scratch (review items 4, 6).
    x2d = x_ref[...].reshape(seq * bblk, isize).astype(jnp.bfloat16)
    xproj_ref[...] = (
        jnp.dot(x2d, wih_ref[...], preferred_element_type=jnp.float32)
        + b_ref[...])

    # ---- Fully unrolled recurrence: one fused (bblk,H)@(H,FUSED) bf16 matmul
    # per step; W_hh is re-read from VMEM each step (review items 1, 3, 4).
    h = jnp.zeros((bblk, hidden), jnp.float32)
    c = jnp.zeros((bblk, hidden), jnp.float32)
    for t in range(seq):                                  # SEQ static -> unrolled
        gates = xproj_ref[t * bblk:(t + 1) * bblk, :] + jnp.dot(
            h.astype(jnp.bfloat16), whh_ref[...],
            preferred_element_type=jnp.float32)           # (bblk, FUSED)
        # Each gate occupies its own 128-lane slot -> free aligned lane slices.
        i_g = _sigmoid(gates[:, 0 * GSTRIDE:0 * GSTRIDE + hidden])
        f_g = _sigmoid(gates[:, 1 * GSTRIDE:1 * GSTRIDE + hidden])
        g_g = jnp.tanh(gates[:, 2 * GSTRIDE:2 * GSTRIDE + hidden])
        o_g = _sigmoid(gates[:, 3 * GSTRIDE:3 * GSTRIDE + hidden])
        c = f_g * c + i_g * g_g
        h = o_g * jnp.tanh(c)
        hs_ref[t] = h                                     # spill row t (item 6)

    # ---- Epilogue: per-sequence BatchNorm1d (stats over the seq axis, biased
    # variance) folded into the Linear; evaluated as VPU mul + lane reduction,
    # no N=1 MXU matmuls (review item 5).
    hs = hs_ref[...]                                      # (seq, bblk, H) f32
    mean = jnp.mean(hs, axis=0)                           # (bblk, H)
    var = jnp.mean((hs - mean[None]) ** 2, axis=0)        # (bblk, H)
    s = gamma_ref[...] * jax.lax.rsqrt(var + BN_EPS)      # (bblk, H)
    wfc = wfc_ref[...]                                    # (1, H)
    w_eff = s * wfc                                       # (bblk, H)
    b_eff = bfc_ref[...] + jnp.sum((beta_ref[...] - mean * s) * wfc,
                                   axis=-1)[None, :]      # (1, bblk)
    y = jnp.sum(hs * w_eff[None], axis=-1) + b_eff        # (seq, bblk)
    out_ref[...] = _sigmoid(y).T                          # (bblk, seq)


def lstmnet_forward(x_batch, kparams, *, b_block=128):
    """x_batch: (B, SEQ, INPUT) f32 -> (B, SEQ, 1) f32.

    Each of the B sequences gets the PyTorch module's batch=1 semantics (LSTM
    from zero state; BatchNorm statistics over that sequence's own seq axis).
    b_block sequences are processed per grid step (up to ~128 is free on the
    MXU M dimension); the grid over batch blocks is marked "parallel" so v7x's
    two TensorCores split the work.
    """
    batch, seq, isize = x_batch.shape
    b_block = max(8, min(b_block, pl.cdiv(batch, 8) * 8))
    b_block = (b_block // 8) * 8                          # sublane multiple
    n_blocks = pl.cdiv(batch, b_block)
    b_pad = n_blocks * b_block
    if b_pad != batch:
        x_batch = jnp.pad(x_batch, ((0, b_pad - batch), (0, 0), (0, 0)))

    # Time-major layout so each step's rows are contiguous sublanes.
    x_t = jnp.transpose(x_batch, (1, 0, 2))               # (SEQ, B_pad, INPUT)

    def full2d(a):                                        # whole-array resident
        return pl.BlockSpec(a.shape, lambda i: (0, 0))

    out = pl.pallas_call(
        lstmnet_kernel,
        out_shape=jax.ShapeDtypeStruct((b_pad, seq), jnp.float32),
        grid=(n_blocks,),
        in_specs=[
            pl.BlockSpec((seq, b_block, isize), lambda i: (0, i, 0)),
            full2d(kparams["wih"]),
            full2d(kparams["whh"]),
            full2d(kparams["b"]),
            full2d(kparams["gamma"]),
            full2d(kparams["beta"]),
            full2d(kparams["wfc"]),
            full2d(kparams["bfc"]),
        ],
        out_specs=pl.BlockSpec((b_block, seq), lambda i: (i, 0)),
        scratch_shapes=[
            pltpu.VMEM((seq * b_block, FUSED), jnp.float32),      # xproj
            pltpu.VMEM((seq, b_block, HIDDEN_SIZE), jnp.float32),  # hidden states
        ],
        compiler_params=pltpu.CompilerParams(
            dimension_semantics=("parallel",)),           # v7x dual-TC sharding
    )(x_t, kparams["wih"], kparams["whh"], kparams["b"], kparams["gamma"],
      kparams["beta"], kparams["wfc"], kparams["bfc"])

    return out[:batch].reshape(batch, seq, OUTPUT_SIZE)


def init_raw_params(key):
    """Deterministic init matching the PyTorch parameter shapes (raw layout)."""
    k = 1.0 / jnp.sqrt(jnp.float32(HIDDEN_SIZE))
    ks = jax.random.split(key, 6)
    u = lambda kk, shape: jax.random.uniform(kk, shape, jnp.float32, -k, k)
    return {
        "w_ih": u(ks[0], (4 * HIDDEN_SIZE, INPUT_SIZE)),   # weight_ih_l0
        "w_hh": u(ks[1], (4 * HIDDEN_SIZE, HIDDEN_SIZE)),  # weight_hh_l0
        "b_ih": u(ks[2], (4 * HIDDEN_SIZE,)),
        "b_hh": u(ks[3], (4 * HIDDEN_SIZE,)),
        "fc_w": u(ks[4], (OUTPUT_SIZE, HIDDEN_SIZE)),      # fc.weight
        "fc_b": u(ks[5], (OUTPUT_SIZE,)),
        "gamma": jnp.ones((HIDDEN_SIZE,), jnp.float32),    # BatchNorm1d defaults
        "beta": jnp.zeros((HIDDEN_SIZE,), jnp.float32),
    }


def _fuse_and_pad(w):
    """(4H, K) PyTorch gate stack -> (K, 4*GSTRIDE) bf16, gate g at lanes [g*128, g*128+H)."""
    w4 = w.reshape(4, HIDDEN_SIZE, -1)                           # (4, H, K)
    w4 = jnp.transpose(w4, (0, 2, 1))                            # (4, K, H)
    w4 = jnp.pad(w4, ((0, 0), (0, 0), (0, GSTRIDE - HIDDEN_SIZE)))
    fused = jnp.transpose(w4, (1, 0, 2)).reshape(w4.shape[1], FUSED)
    return fused.astype(jnp.bfloat16)                            # bf16 MXU operand


def pack_params(raw):
    """Raw PyTorch-layout params -> fused/padded kernel layout (weights in bf16)."""
    b = (raw["b_ih"] + raw["b_hh"]).reshape(4, HIDDEN_SIZE)
    b = jnp.pad(b, ((0, 0), (0, GSTRIDE - HIDDEN_SIZE))).reshape(1, FUSED)
    return {
        "wih": _fuse_and_pad(raw["w_ih"]),                 # (INPUT, FUSED) bf16
        "whh": _fuse_and_pad(raw["w_hh"]),                 # (HIDDEN, FUSED) bf16
        "b": b.astype(jnp.float32),                        # (1, FUSED)
        "gamma": raw["gamma"].reshape(1, HIDDEN_SIZE),
        "beta": raw["beta"].reshape(1, HIDDEN_SIZE),
        "wfc": raw["fc_w"].reshape(1, HIDDEN_SIZE),        # (1, HIDDEN)
        "bfc": raw["fc_b"].reshape(1, OUTPUT_SIZE),        # (1, 1)
    }


def reference_forward(x_seq, raw, matmul_dtype=jnp.float32):
    """Pure-JAX transcription of LSTMNet.forward for ONE (SEQ, INPUT) sequence.

    matmul_dtype controls the dtype of the matmul operands (f32 accumulation),
    so the same function serves as the exact-f32 reference and as the
    bf16-operand reference matching the kernel's precision policy.
    """
    H = HIDDEN_SIZE
    w_ih_t = raw["w_ih"].T.astype(matmul_dtype)            # (INPUT, 4H)
    w_hh_t = raw["w_hh"].T.astype(matmul_dtype)            # (H, 4H)
    b = raw["b_ih"] + raw["b_hh"]

    def step(carry, x_t):
        h, c = carry
        gates = (jnp.dot(x_t.astype(matmul_dtype), w_ih_t,
                         preferred_element_type=jnp.float32)
                 + jnp.dot(h.astype(matmul_dtype), w_hh_t,
                           preferred_element_type=jnp.float32)
                 + b)
        i_g = jax.nn.sigmoid(gates[0:H])
        f_g = jax.nn.sigmoid(gates[H:2 * H])
        g_g = jnp.tanh(gates[2 * H:3 * H])
        o_g = jax.nn.sigmoid(gates[3 * H:4 * H])
        c_new = f_g * c + i_g * g_g
        h_new = o_g * jnp.tanh(c_new)
        return (h_new, c_new), h_new

    h0 = jnp.zeros((H,), jnp.float32)
    c0 = jnp.zeros((H,), jnp.float32)
    _, hs = jax.lax.scan(step, (h0, c0), x_seq)             # (SEQ, H)
    mean = jnp.mean(hs, axis=0, keepdims=True)
    var = jnp.mean((hs - mean) ** 2, axis=0, keepdims=True)
    normed = (hs - mean) / jnp.sqrt(var + BN_EPS) * raw["gamma"] + raw["beta"]
    return jax.nn.sigmoid(normed @ raw["fc_w"].T + raw["fc_b"])   # (SEQ, 1)


if __name__ == "__main__":
    key = jax.random.PRNGKey(0)
    key_x, key_p = jax.random.split(key)

    BATCH = 16                                              # 16 independent sequences
    x_batch = jax.random.normal(key_x, (BATCH, SEQ, INPUT_SIZE), jnp.float32)

    raw = init_raw_params(key_p)
    kparams = pack_params(raw)

    # b_block=8 -> grid=(2,), exercising the multi-block / parallel path at small size.
    out = jax.block_until_ready(lstmnet_forward(x_batch, kparams, b_block=8))
    assert out.shape == (BATCH, SEQ, OUTPUT_SIZE)

    # Per-sequence pure-JAX references (PyTorch batch=1 semantics).
    ref_bf16 = jax.vmap(lambda xs: reference_forward(xs, raw, jnp.bfloat16))(x_batch)
    ref_f32 = jax.vmap(lambda xs: reference_forward(xs, raw, jnp.float32))(x_batch)

    # Tight check: kernel vs a reference with the identical bf16-operand matmul policy.
    assert jnp.allclose(out, ref_bf16, rtol=5e-3, atol=5e-3), \
        float(jnp.max(jnp.abs(out - ref_bf16)))
    # Loose check: bf16 MXU operands vs the exact f32 module (tolerance relaxed
    # from 1e-5, as flagged in the review when adopting bf16 matmuls).
    assert jnp.allclose(out, ref_f32, rtol=0.0, atol=5e-2), \
        float(jnp.max(jnp.abs(out - ref_f32)))

    print("KERNEL_OK")
</pallas_src>

<mosaic_0001>
module attributes {stable_mosaic.version = 11 : i64} {
  func.func @lstmnet_kernel(%arg0: i32, %arg1: memref<8x8x22xf32, #tpu.memory_space<vmem>>, %arg2: memref<22x512xbf16, #tpu.memory_space<vmem>>, %arg3: memref<46x512xbf16, #tpu.memory_space<vmem>>, %arg4: memref<1x512xf32, #tpu.memory_space<vmem>>, %arg5: memref<1x46xf32, #tpu.memory_space<vmem>>, %arg6: memref<1x46xf32, #tpu.memory_space<vmem>>, %arg7: memref<1x46xf32, #tpu.memory_space<vmem>>, %arg8: memref<1x1xf32, #tpu.memory_space<vmem>>, %arg9: memref<8x8xf32, #tpu.memory_space<vmem>>, %arg10: memref<64x512xf32, #tpu.memory_space<vmem>>, %arg11: memref<8x8x46xf32, #tpu.memory_space<vmem>>) attributes {dimension_semantics = [#tpu.dimension_semantics<parallel>], iteration_bounds = array<i64: 2>, scalar_prefetch = 0 : i64, scratch_operands = 2 : i64, tpu.core_type = #tpu.core_type<tc>, window_params = [{transform_indices = @transform_0, window_bounds = array<i64: 8, 8, 22>}, {pipeline_mode = #tpu.pipeline_mode<synchronous>, transform_indices = @transform_1, window_bounds = array<i64: 22, 512>}, {pipeline_mode = #tpu.pipeline_mode<synchronous>, transform_indices = @transform_2, window_bounds = array<i64: 46, 512>}, {pipeline_mode = #tpu.pipeline_mode<synchronous>, transform_indices = @transform_3, window_bounds = array<i64: 1, 512>}, {pipeline_mode = #tpu.pipeline_mode<synchronous>, transform_indices = @transform_4, window_bounds = array<i64: 1, 46>}, {pipeline_mode = #tpu.pipeline_mode<synchronous>, transform_indices = @transform_5, window_bounds = array<i64: 1, 46>}, {pipeline_mode = #tpu.pipeline_mode<synchronous>, transform_indices = @transform_6, window_bounds = array<i64: 1, 46>}, {pipeline_mode = #tpu.pipeline_mode<synchronous>, transform_indices = @transform_7, window_bounds = array<i64: 1, 1>}, {transform_indices = @transform_8, window_bounds = array<i64: 8, 8>}]} {
    %c0 = arith.constant 0 : index
    %c0_0 = arith.constant 0 : index
    %c0_1 = arith.constant 0 : index
    %0 = vector.load %arg1[%c0, %c0_0, %c0_1] : memref<8x8x22xf32, #tpu.memory_space<vmem>>, vector<8x8x22xf32>
    %1 = vector.shape_cast %0 : vector<8x8x22xf32> to vector<64x22xf32>
    %2 = arith.truncf %1 : vector<64x22xf32> to vector<64x22xbf16>
    %c0_2 = arith.constant 0 : index
    %c0_3 = arith.constant 0 : index
    %3 = vector.load %arg2[%c0_2, %c0_3] : memref<22x512xbf16, #tpu.memory_space<vmem>>, vector<22x512xbf16>
    %cst = arith.constant dense<0.000000e+00> : vector<64x512xf32>
    %4 = tpu.matmul %2, %3, %cst {dimension_numbers = #tpu.dot_dimension_numbers<[1], [0], [0], [1], [0, 0, 1, 1], [], []>} : vector<64x22xbf16>, vector<22x512xbf16>, vector<64x512xf32> -> vector<64x512xf32>
    %c0_4 = arith.constant 0 : index
    %c0_5 = arith.constant 0 : index
    %5 = vector.load %arg4[%c0_4, %c0_5] : memref<1x512xf32, #tpu.memory_space<vmem>>, vector<1x512xf32>
    %6 = vector.broadcast %5 : vector<1x512xf32> to vector<64x512xf32>
    %7 = arith.addf %4, %6 : vector<64x512xf32>
    %c0_6 = arith.constant 0 : index
    %c0_7 = arith.constant 0 : index
    %8 = vector.load %arg10[%c0_6, %c0_7] : memref<64x512xf32, #tpu.memory_space<vmem>>, vector<64x512xf32>
    tpu.vector_store %arg10[%c0_6, %c0_7], %7 {strides = array<i32>} : memref<64x512xf32, #tpu.memory_space<vmem>>, vector<64x512xf32>,
    %cst_8 = arith.constant 0.000000e+00 : f32
    %9 = vector.broadcast %cst_8 : f32 to vector<8x46xf32>
    %cst_9 = arith.constant 0.000000e+00 : f32
    %10 = vector.broadcast %cst_9 : f32 to vector<8x46xf32>
    %c0_10 = arith.constant 0 : index
    %c0_11 = arith.constant 0 : index
    %11 = vector.load %arg10[%c0_10, %c0_11] : memref<64x512xf32, #tpu.memory_space<vmem>>, vector<8x512xf32>
    %12 = arith.truncf %9 : vector<8x46xf32> to vector<8x46xbf16>
    %c0_12 = arith.constant 0 : index
    %c0_13 = arith.constant 0 : index
    %13 = vector.load %arg3[%c0_12, %c0_13] : memref<46x512xbf16, #tpu.memory_space<vmem>>, vector<46x512xbf16>
    %cst_14 = arith.constant dense<0.000000e+00> : vector<8x512xf32>
    %14 = tpu.matmul %12, %13, %cst_14 {dimension_numbers = #tpu.dot_dimension_numbers<[1], [0], [0], [1], [0, 0, 1, 1], [], []>} : vector<8x46xbf16>, vector<46x512xbf16>, vector<8x512xf32> -> vector<8x512xf32>
    %15 = arith.addf %11, %14 : vector<8x512xf32>
    %16 = vector.extract_strided_slice %15 {offsets = [0, 0], sizes = [8, 46], strides = [1, 1]} : vector<8x512xf32> to vector<8x46xf32>
    %cst_15 = arith.constant 5.000000e-01 : f32
    %17 = vector.broadcast %cst_15 : f32 to vector<8x46xf32>
    %18 = arith.mulf %17, %16 : vector<8x46xf32>
    %19 = math.tanh %18 : vector<8x46xf32>
    %cst_16 = arith.constant 5.000000e-01 : f32
    %20 = vector.broadcast %cst_16 : f32 to vector<8x46xf32>
    %21 = arith.mulf %20, %19 : vector<8x46xf32>
    %cst_17 = arith.constant 5.000000e-01 : f32
    %22 = vector.broadcast %cst_17 : f32 to vector<8x46xf32>
    %23 = arith.addf %21, %22 : vector<8x46xf32>
    %24 = vector.extract_strided_slice %15 {offsets = [0, 128], sizes = [8, 46], strides = [1, 1]} : vector<8x512xf32> to vector<8x46xf32>
    %cst_18 = arith.constant 5.000000e-01 : f32
    %25 = vector.broadcast %cst_18 : f32 to vector<8x46xf32>
    %26 = arith.mulf %25, %24 : vector<8x46xf32>
    %27 = math.tanh %26 : vector<8x46xf32>
    %cst_19 = arith.constant 5.000000e-01 : f32
    %28 = vector.broadcast %cst_19 : f32 to vector<8x46xf32>
    %29 = arith.mulf %28, %27 : vector<8x46xf32>
    %cst_20 = arith.constant 5.000000e-01 : f32
    %30 = vector.broadcast %cst_20 : f32 to vector<8x46xf32>
    %31 = arith.addf %29, %30 : vector<8x46xf32>
    %32 = vector.extract_strided_slice %15 {offsets = [0, 256], sizes = [8, 46], strides = [1, 1]} : vector<8x512xf32> to vector<8x46xf32>
    %33 = math.tanh %32 : vector<8x46xf32>
    %34 = vector.extract_strided_slice %15 {offsets = [0, 384], sizes = [8, 46], strides = [1, 1]} : vector<8x512xf32> to vector<8x46xf32>
    %cst_21 = arith.constant 5.000000e-01 : f32
    %35 = vector.broadcast %cst_21 : f32 to vector<8x46xf32>
    %36 = arith.mulf %35, %34 : vector<8x46xf32>
    %37 = math.tanh %36 : vector<8x46xf32>
    %cst_22 = arith.constant 5.000000e-01 : f32
    %38 = vector.broadcast %cst_22 : f32 to vector<8x46xf32>
    %39 = arith.mulf %38, %37 : vector<8x46xf32>
    %cst_23 = arith.constant 5.000000e-01 : f32
    %40 = vector.broadcast %cst_23 : f32 to vector<8x46xf32>
    %41 = arith.addf %39, %40 : vector<8x46xf32>
    %42 = arith.mulf %31, %10 : vector<8x46xf32>
    %43 = arith.mulf %23, %33 : vector<8x46xf32>
    %44 = arith.addf %42, %43 : vector<8x46xf32>
    %45 = math.tanh %44 : vector<8x46xf32>
    %46 = arith.mulf %41, %45 : vector<8x46xf32>
    %c0_24 = arith.constant 0 : index
    %c0_25 = arith.constant 0 : index
    %c0_26 = arith.constant 0 : index
    %47 = vector.load %arg11[%c0_24, %c0_25, %c0_26] : memref<8x8x46xf32, #tpu.memory_space<vmem>>, vector<1x8x46xf32>
    %48 = vector.shape_cast %47 : vector<1x8x46xf32> to vector<8x46xf32>
    %49 = vector.shape_cast %46 : vector<8x46xf32> to vector<1x8x46xf32>
    tpu.vector_store %arg11[%c0_24, %c0_25, %c0_26], %49 {strides = array<i32>} : memref<8x8x46xf32, #tpu.memory_space<vmem>>, vector<1x8x46xf32>,
    %c8 = arith.constant 8 : index
    %c0_27 = arith.constant 0 : index
    %50 = vector.load %arg10[%c8, %c0_27] : memref<64x512xf32, #tpu.memory_space<vmem>>, vector<8x512xf32>
    %51 = arith.truncf %46 : vector<8x46xf32> to vector<8x46xbf16>
    %c0_28 = arith.constant 0 : index
    %c0_29 = arith.constant 0 : index
    %52 = vector.load %arg3[%c0_28, %c0_29] : memref<46x512xbf16, #tpu.memory_space<vmem>>, vector<46x512xbf16>
    %cst_30 = arith.constant dense<0.000000e+00> : vector<8x512xf32>
    %53 = tpu.matmul %51, %52, %cst_30 {dimension_numbers = #tpu.dot_dimension_numbers<[1], [0], [0], [1], [0, 0, 1, 1], [], []>} : vector<8x46xbf16>, vector<46x512xbf16>, vector<8x512xf32> -> vector<8x512xf32>
    %54 = arith.addf %50, %53 : vector<8x512xf32>
    %55 = vector.extract_strided_slice %54 {offsets = [0, 0], sizes = [8, 46], strides = [1, 1]} : vector<8x512xf32> to vector<8x46xf32>
    %cst_31 = arith.constant 5.000000e-01 : f32
    %56 = vector.broadcast %cst_31 : f32 to vector<8x46xf32>
    %57 = arith.mulf %56, %55 : vector<8x46xf32>
    %58 = math.tanh %57 : vector<8x46xf32>
    %cst_32 = arith.constant 5.000000e-01 : f32
    %59 = vector.broadcast %cst_32 : f32 to vector<8x46xf32>
    %60 = arith.mulf %59, %58 : vector<8x46xf32>
    %cst_33 = arith.constant 5.000000e-01 : f32
    %61 = vector.broadcast %cst_33 : f32 to vector<8x46xf32>
    %62 = arith.addf %60, %61 : vector<8x46xf32>
    %63 = vector.extract_strided_slice %54 {offsets = [0, 128], sizes = [8, 46], strides = [1, 1]} : vector<8x512xf32> to vector<8x46xf32>
    %cst_34 = arith.constant 5.000000e-01 : f32
    %64 = vector.broadcast %cst_34 : f32 to vector<8x46xf32>
    %65 = arith.mulf %64, %63 : vector<8x46xf32>
    %66 = math.tanh %65 : vector<8x46xf32>
    %cst_35 = arith.constant 5.000000e-01 : f32
    %67 = vector.broadcast %cst_35 : f32 to vector<8x46xf32>
    %68 = arith.mulf %67, %66 : vector<8x46xf32>
    %cst_36 = arith.constant 5.000000e-01 : f32
    %69 = vector.broadcast %cst_36 : f32 to vector<8x46xf32>
    %70 = arith.addf %68, %69 : vector<8x46xf32>
    %71 = vector.extract_strided_slice %54 {offsets = [0, 256], sizes = [8, 46], strides = [1, 1]} : vector<8x512xf32> to vector<8x46xf32>
    %72 = math.tanh %71 : vector<8x46xf32>
    %73 = vector.extract_strided_slice %54 {offsets = [0, 384], sizes = [8, 46], strides = [1, 1]} : vector<8x512xf32> to vector<8x46xf32>
    %cst_37 = arith.constant 5.000000e-01 : f32
    %74 = vector.broadcast %cst_37 : f32 to vector<8x46xf32>
    %75 = arith.mulf %74, %73 : vector<8x46xf32>
    %76 = math.tanh %75 : vector<8x46xf32>
    %cst_38 = arith.constant 5.000000e-01 : f32
    %77 = vector.broadcast %cst_38 : f32 to vector<8x46xf32>
    %78 = arith.mulf %77, %76 : vector<8x46xf32>
    %cst_39 = arith.constant 5.000000e-01 : f32
    %79 = vector.broadcast %cst_39 : f32 to vector<8x46xf32>
    %80 = arith.addf %78, %79 : vector<8x46xf32>
    %81 = arith.mulf %70, %44 : vector<8x46xf32>
    %82 = arith.mulf %62, %72 : vector<8x46xf32>
    %83 = arith.addf %81, %82 : vector<8x46xf32>
    %84 = math.tanh %83 : vector<8x46xf32>
    %85 = arith.mulf %80, %84 : vector<8x46xf32>
    %c1 = arith.constant 1 : index
    %c0_40 = arith.constant 0 : index
    %c0_41 = arith.constant 0 : index
    %86 = vector.load %arg11[%c1, %c0_40, %c0_41] : memref<8x8x46xf32, #tpu.memory_space<vmem>>, vector<1x8x46xf32>
    %87 = vector.shape_cast %86 : vector<1x8x46xf32> to vector<8x46xf32>
    %88 = vector.shape_cast %85 : vector<8x46xf32> to vector<1x8x46xf32>
    tpu.vector_store %arg11[%c1, %c0_40, %c0_41], %88 {strides = array<i32>} : memref<8x8x46xf32, #tpu.memory_space<vmem>>, vector<1x8x46xf32>,
    %c16 = arith.constant 16 : index
    %c0_42 = arith.constant 0 : index
    %89 = vector.load %arg10[%c16, %c0_42] : memref<64x512xf32, #tpu.memory_space<vmem>>, vector<8x512xf32>
    %90 = arith.truncf %85 : vector<8x46xf32> to vector<8x46xbf16>
    %c0_43 = arith.constant 0 : index
    %c0_44 = arith.constant 0 : index
    %91 = vector.load %arg3[%c0_43, %c0_44] : memref<46x512xbf16, #tpu.memory_space<vmem>>, vector<46x512xbf16>
    %cst_45 = arith.constant dense<0.000000e+00> : vector<8x512xf32>
    %92 = tpu.matmul %90, %91, %cst_45 {dimension_numbers = #tpu.dot_dimension_numbers<[1], [0], [0], [1], [0, 0, 1, 1], [], []>} : vector<8x46xbf16>, vector<46x512xbf16>, vector<8x512xf32> -> vector<8x512xf32>
    %93 = arith.addf %89, %92 : vector<8x512xf32>
    %94 = vector.extract_strided_slice %93 {offsets = [0, 0], sizes = [8, 46], strides = [1, 1]} : vector<8x512xf32> to vector<8x46xf32>
    %cst_46 = arith.constant 5.000000e-01 : f32
    %95 = vector.broadcast %cst_46 : f32 to vector<8x46xf32>
    %96 = arith.mulf %95, %94 : vector<8x46xf32>
    %97 = math.tanh %96 : vector<8x46xf32>
    %cst_47 = arith.constant 5.000000e-01 : f32
    %98 = vector.broadcast %cst_47 : f32 to vector<8x46xf32>
    %99 = arith.mulf %98, %97 : vector<8x46xf32>
    %cst_48 = arith.constant 5.000000e-01 : f32
    %100 = vector.broadcast %cst_48 : f32 to vector<8x46xf32>
    %101 = arith.addf %99, %100 : vector<8x46xf32>
    %102 = vector.extract_strided_slice %93 {offsets = [0, 128], sizes = [8, 46], strides = [1, 1]} : vector<8x512xf32> to vector<8x46xf32>
    %cst_49 = arith.constant 5.000000e-01 : f32
    %103 = vector.broadcast %cst_49 : f32 to vector<8x46xf32>
    %104 = arith.mulf %103, %102 : vector<8x46xf32>
    %105 = math.tanh %104 : vector<8x46xf32>
    %cst_50 = arith.constant 5.000000e-01 : f32
    %106 = vector.broadcast %cst_50 : f32 to vector<8x46xf32>
    %107 = arith.mulf %106, %105 : vector<8x46xf32>
    %cst_51 = arith.constant 5.000000e-01 : f32
    %108 = vector.broadcast %cst_51 : f32 to vector<8x46xf32>
    %109 = arith.addf %107, %108 : vector<8x46xf32>
    %110 = vector.extract_strided_slice %93 {offsets = [0, 256], sizes = [8, 46], strides = [1, 1]} : vector<8x512xf32> to vector<8x46xf32>
    %111 = math.tanh %110 : vector<8x46xf32>
    %112 = vector.extract_strided_slice %93 {offsets = [0, 384], sizes = [8, 46], strides = [1, 1]} : vector<8x512xf32> to vector<8x46xf32>
    %cst_52 = arith.constant 5.000000e-01 : f32
    %113 = vector.broadcast %cst_52 : f32 to vector<8x46xf32>
    %114 = arith.mulf %113, %112 : vector<8x46xf32>
    %115 = math.tanh %114 : vector<8x46xf32>
    %cst_53 = arith.constant 5.000000e-01 : f32
    %116 = vector.broadcast %cst_53 : f32 to vector<8x46xf32>
    %117 = arith.mulf %116, %115 : vector<8x46xf32>
    %cst_54 = arith.constant 5.000000e-01 : f32
    %118 = vector.broadcast %cst_54 : f32 to vector<8x46xf32>
    %119 = arith.addf %117, %118 : vector<8x46xf32>
    %120 = arith.mulf %109, %83 : vector<8x46xf32>
    %121 = arith.mulf %101, %111 : vector<8x46xf32>
    %122 = arith.addf %120, %121 : vector<8x46xf32>
    %123 = math.tanh %122 : vector<8x46xf32>
    %124 = arith.mulf %119, %123 : vector<8x46xf32>
    %c2 = arith.constant 2 : index
    %c0_55 = arith.constant 0 : index
    %c0_56 = arith.constant 0 : index
    %125 = vector.load %arg11[%c2, %c0_55, %c0_56] : memref<8x8x46xf32, #tpu.memory_space<vmem>>, vector<1x8x46xf32>
    %126 = vector.shape_cast %125 : vector<1x8x46xf32> to vector<8x46xf32>
    %127 = vector.shape_cast %124 : vector<8x46xf32> to vector<1x8x46xf32>
    tpu.vector_store %arg11[%c2, %c0_55, %c0_56], %127 {strides = array<i32>} : memref<8x8x46xf32, #tpu.memory_space<vmem>>, vector<1x8x46xf32>,
    %c24 = arith.constant 24 : index
    %c0_57 = arith.constant 0 : index
    %128 = vector.load %arg10[%c24, %c0_57] : memref<64x512xf32, #tpu.memory_space<vmem>>, vector<8x512xf32>
    %129 = arith.truncf %124 : vector<8x46xf32> to vector<8x46xbf16>
    %c0_58 = arith.constant 0 : index
    %c0_59 = arith.constant 0 : index
    %130 = vector.load %arg3[%c0_58, %c0_59] : memref<46x512xbf16, #tpu.memory_space<vmem>>, vector<46x512xbf16>
    %cst_60 = arith.constant dense<0.000000e+00> : vector<8x512xf32>
    %131 = tpu.matmul %129, %130, %cst_60 {dimension_numbers = #tpu.dot_dimension_numbers<[1], [0], [0], [1], [0, 0, 1, 1], [], []>} : vector<8x46xbf16>, vector<46x512xbf16>, vector<8x512xf32> -> vector<8x512xf32>
    %132 = arith.addf %128, %131 : vector<8x512xf32>
    %133 = vector.extract_strided_slice %132 {offsets = [0, 0], sizes = [8, 46], strides = [1, 1]} : vector<8x512xf32> to vector<8x46xf32>
    %cst_61 = arith.constant 5.000000e-01 : f32
    %134 = vector.broadcast %cst_61 : f32 to vector<8x46xf32>
    %135 = arith.mulf %134, %133 : vector<8x46xf32>
    %136 = math.tanh %135 : vector<8x46xf32>
    %cst_62 = arith.constant 5.000000e-01 : f32
    %137 = vector.broadcast %cst_62 : f32 to vector<8x46xf32>
    %138 = arith.mulf %137, %136 : vector<8x46xf32>
    %cst_63 = arith.constant 5.000000e-01 : f32
    %139 = vector.broadcast %cst_63 : f32 to vector<8x46xf32>
    %140 = arith.addf %138, %139 : vector<8x46xf32>
    %141 = vector.extract_strided_slice %132 {offsets = [0, 128], sizes = [8, 46], strides = [1, 1]} : vector<8x512xf32> to vector<8x46xf32>
    %cst_64 = arith.constant 5.000000e-01 : f32
    %142 = vector.broadcast %cst_64 : f32 to vector<8x46xf32>
    %143 = arith.mulf %142, %141 : vector<8x46xf32>
    %144 = math.tanh %143 : vector<8x46xf32>
    %cst_65 = arith.constant 5.000000e-01 : f32
    %145 = vector.broadcast %cst_65 : f32 to vector<8x46xf32>
    %146 = arith.mulf %145, %144 : vector<8x46xf32>
    %cst_66 = arith.constant 5.000000e-01 : f32
    %147 = vector.broadcast %cst_66 : f32 to vector<8x46xf32>
    %148 = arith.addf %146, %147 : vector<8x46xf32>
    %149 = vector.extract_strided_slice %132 {offsets = [0, 256], sizes = [8, 46], strides = [1, 1]} : vector<8x512xf32> to vector<8x46xf32>
    %150 = math.tanh %149 : vector<8x46xf32>
    %151 = vector.extract_strided_slice %132 {offsets = [0, 384], sizes = [8, 46], strides = [1, 1]} : vector<8x512xf32> to vector<8x46xf32>
    %cst_67 = arith.constant 5.000000e-01 : f32
    %152 = vector.broadcast %cst_67 : f32 to vector<8x46xf32>
    %153 = arith.mulf %152, %151 : vector<8x46xf32>
    %154 = math.tanh %153 : vector<8x46xf32>
    %cst_68 = arith.constant 5.000000e-01 : f32
    %155 = vector.broadcast %cst_68 : f32 to vector<8x46xf32>
    %156 = arith.mulf %155, %154 : vector<8x46xf32>
    %cst_69 = arith.constant 5.000000e-01 : f32
    %157 = vector.broadcast %cst_69 : f32 to vector<8x46xf32>
    %158 = arith.addf %156, %157 : vector<8x46xf32>
    %159 = arith.mulf %148, %122 : vector<8x46xf32>
    %160 = arith.mulf %140, %150 : vector<8x46xf32>
    %161 = arith.addf %159, %160 : vector<8x46xf32>
    %162 = math.tanh %161 : vector<8x46xf32>
    %163 = arith.mulf %158, %162 : vector<8x46xf32>
    %c3 = arith.constant 3 : index
    %c0_70 = arith.constant 0 : index
    %c0_71 = arith.constant 0 : index
    %164 = vector.load %arg11[%c3, %c0_70, %c0_71] : memref<8x8x46xf32, #tpu.memory_space<vmem>>, vector<1x8x46xf32>
    %165 = vector.shape_cast %164 : vector<1x8x46xf32> to vector<8x46xf32>
    %166 = vector.shape_cast %163 : vector<8x46xf32> to vector<1x8x46xf32>
    tpu.vector_store %arg11[%c3, %c0_70, %c0_71], %166 {strides = array<i32>} : memref<8x8x46xf32, #tpu.memory_space<vmem>>, vector<1x8x46xf32>,
    %c32 = arith.constant 32 : index
    %c0_72 = arith.constant 0 : index
    %167 = vector.load %arg10[%c32, %c0_72] : memref<64x512xf32, #tpu.memory_space<vmem>>, vector<8x512xf32>
    %168 = arith.truncf %163 : vector<8x46xf32> to vector<8x46xbf16>
    %c0_73 = arith.constant 0 : index
    %c0_74 = arith.constant 0 : index
    %169 = vector.load %arg3[%c0_73, %c0_74] : memref<46x512xbf16, #tpu.memory_space<vmem>>, vector<46x512xbf16>
    %cst_75 = arith.constant dense<0.000000e+00> : vector<8x512xf32>
    %170 = tpu.matmul %168, %169, %cst_75 {dimension_numbers = #tpu.dot_dimension_numbers<[1], [0], [0], [1], [0, 0, 1, 1], [], []>} : vector<8x46xbf16>, vector<46x512xbf16>, vector<8x512xf32> -> vector<8x512xf32>
    %171 = arith.addf %167, %170 : vector<8x512xf32>
    %172 = vector.extract_strided_slice %171 {offsets = [0, 0], sizes = [8, 46], strides = [1, 1]} : vector<8x512xf32> to vector<8x46xf32>
    %cst_76 = arith.constant 5.000000e-01 : f32
    %173 = vector.broadcast %cst_76 : f32 to vector<8x46xf32>
    %174 = arith.mulf %173, %172 : vector<8x46xf32>
    %175 = math.tanh %174 : vector<8x46xf32>
    %cst_77 = arith.constant 5.000000e-01 : f32
    %176 = vector.broadcast %cst_77 : f32 to vector<8x46xf32>
    %177 = arith.mulf %176, %175 : vector<8x46xf32>
    %cst_78 = arith.constant 5.000000e-01 : f32
    %178 = vector.broadcast %cst_78 : f32 to vector<8x46xf32>
    %179 = arith.addf %177, %178 : vector<8x46xf32>
    %180 = vector.extract_strided_slice %171 {offsets = [0, 128], sizes = [8, 46], strides = [1, 1]} : vector<8x512xf32> to vector<8x46xf32>
    %cst_79 = arith.constant 5.000000e-01 : f32
    %181 = vector.broadcast %cst_79 : f32 to vector<8x46xf32>
    %182 = arith.mulf %181, %180 : vector<8x46xf32>
    %183 = math.tanh %182 : vector<8x46xf32>
    %cst_80 = arith.constant 5.000000e-01 : f32
    %184 = vector.broadcast %cst_80 : f32 to vector<8x46xf32>
    %185 = arith.mulf %184, %183 : vector<8x46xf32>
    %cst_81 = arith.constant 5.000000e-01 : f32
    %186 = vector.broadcast %cst_81 : f32 to vector<8x46xf32>
    %187 = arith.addf %185, %186 : vector<8x46xf32>
    %188 = vector.extract_strided_slice %171 {offsets = [0, 256], sizes = [8, 46], strides = [1, 1]} : vector<8x512xf32> to vector<8x46xf32>
    %189 = math.tanh %188 : vector<8x46xf32>
    %190 = vector.extract_strided_slice %171 {offsets = [0, 384], sizes = [8, 46], strides = [1, 1]} : vector<8x512xf32> to vector<8x46xf32>
    %cst_82 = arith.constant 5.000000e-01 : f32
    %191 = vector.broadcast %cst_82 : f32 to vector<8x46xf32>
    %192 = arith.mulf %191, %190 : vector<8x46xf32>
    %193 = math.tanh %192 : vector<8x46xf32>
    %cst_83 = arith.constant 5.000000e-01 : f32
    %194 = vector.broadcast %cst_83 : f32 to vector<8x46xf32>
    %195 = arith.mulf %194, %193 : vector<8x46xf32>
    %cst_84 = arith.constant 5.000000e-01 : f32
    %196 = vector.broadcast %cst_84 : f32 to vector<8x46xf32>
    %197 = arith.addf %195, %196 : vector<8x46xf32>
    %198 = arith.mulf %187, %161 : vector<8x46xf32>
    %199 = arith.mulf %179, %189 : vector<8x46xf32>
    %200 = arith.addf %198, %199 : vector<8x46xf32>
    %201 = math.tanh %200 : vector<8x46xf32>
    %202 = arith.mulf %197, %201 : vector<8x46xf32>
    %c4 = arith.constant 4 : index
    %c0_85 = arith.constant 0 : index
    %c0_86 = arith.constant 0 : index
    %203 = vector.load %arg11[%c4, %c0_85, %c0_86] : memref<8x8x46xf32, #tpu.memory_space<vmem>>, vector<1x8x46xf32>
    %204 = vector.shape_cast %203 : vector<1x8x46xf32> to vector<8x46xf32>
    %205 = vector.shape_cast %202 : vector<8x46xf32> to vector<1x8x46xf32>
    tpu.vector_store %arg11[%c4, %c0_85, %c0_86], %205 {strides = array<i32>} : memref<8x8x46xf32, #tpu.memory_space<vmem>>, vector<1x8x46xf32>,
    %c40 = arith.constant 40 : index
    %c0_87 = arith.constant 0 : index
    %206 = vector.load %arg10[%c40, %c0_87] : memref<64x512xf32, #tpu.memory_space<vmem>>, vector<8x512xf32>
    %207 = arith.truncf %202 : vector<8x46xf32> to vector<8x46xbf16>
    %c0_88 = arith.constant 0 : index
    %c0_89 = arith.constant 0 : index
    %208 = vector.load %arg3[%c0_88, %c0_89] : memref<46x512xbf16, #tpu.memory_space<vmem>>, vector<46x512xbf16>
    %cst_90 = arith.constant dense<0.000000e+00> : vector<8x512xf32>
    %209 = tpu.matmul %207, %208, %cst_90 {dimension_numbers = #tpu.dot_dimension_numbers<[1], [0], [0], [1], [0, 0, 1, 1], [], []>} : vector<8x46xbf16>, vector<46x512xbf16>, vector<8x512xf32> -> vector<8x512xf32>
    %210 = arith.addf %206, %209 : vector<8x512xf32>
    %211 = vector.extract_strided_slice %210 {offsets = [0, 0], sizes = [8, 46], strides = [1, 1]} : vector<8x512xf32> to vector<8x46xf32>
    %cst_91 = arith.constant 5.000000e-01 : f32
    %212 = vector.broadcast %cst_91 : f32 to vector<8x46xf32>
    %213 = arith.mulf %212, %211 : vector<8x46xf32>
    %214 = math.tanh %213 : vector<8x46xf32>
    %cst_92 = arith.constant 5.000000e-01 : f32
    %215 = vector.broadcast %cst_92 : f32 to vector<8x46xf32>
    %216 = arith.mulf %215, %214 : vector<8x46xf32>
    %cst_93 = arith.constant 5.000000e-01 : f32
    %217 = vector.broadcast %cst_93 : f32 to vector<8x46xf32>
    %218 = arith.addf %216, %217 : vector<8x46xf32>
    %219 = vector.extract_strided_slice %210 {offsets = [0, 128], sizes = [8, 46], strides = [1, 1]} : vector<8x512xf32> to vector<8x46xf32>
    %cst_94 = arith.constant 5.000000e-01 : f32
    %220 = vector.broadcast %cst_94 : f32 to vector<8x46xf32>
    %221 = arith.mulf %220, %219 : vector<8x46xf32>
    %222 = math.tanh %221 : vector<8x46xf32>
    %cst_95 = arith.constant 5.000000e-01 : f32
    %223 = vector.broadcast %cst_95 : f32 to vector<8x46xf32>
    %224 = arith.mulf %223, %222 : vector<8x46xf32>
    %cst_96 = arith.constant 5.000000e-01 : f32
    %225 = vector.broadcast %cst_96 : f32 to vector<8x46xf32>
    %226 = arith.addf %224, %225 : vector<8x46xf32>
    %227 = vector.extract_strided_slice %210 {offsets = [0, 256], sizes = [8, 46], strides = [1, 1]} : vector<8x512xf32> to vector<8x46xf32>
    %228 = math.tanh %227 : vector<8x46xf32>
    %229 = vector.extract_strided_slice %210 {offsets = [0, 384], sizes = [8, 46], strides = [1, 1]} : vector<8x512xf32> to vector<8x46xf32>
    %cst_97 = arith.constant 5.000000e-01 : f32
    %230 = vector.broadcast %cst_97 : f32 to vector<8x46xf32>
    %231 = arith.mulf %230, %229 : vector<8x46xf32>
    %232 = math.tanh %231 : vector<8x46xf32>
    %cst_98 = arith.constant 5.000000e-01 : f32
    %233 = vector.broadcast %cst_98 : f32 to vector<8x46xf32>
    %234 = arith.mulf %233, %232 : vector<8x46xf32>
    %cst_99 = arith.constant 5.000000e-01 : f32
    %235 = vector.broadcast %cst_99 : f32 to vector<8x46xf32>
    %236 = arith.addf %234, %235 : vector<8x46xf32>
    %237 = arith.mulf %226, %200 : vector<8x46xf32>
    %238 = arith.mulf %218, %228 : vector<8x46xf32>
    %239 = arith.addf %237, %238 : vector<8x46xf32>
    %240 = math.tanh %239 : vector<8x46xf32>
    %241 = arith.mulf %236, %240 : vector<8x46xf32>
    %c5 = arith.constant 5 : index
    %c0_100 = arith.constant 0 : index
    %c0_101 = arith.constant 0 : index
    %242 = vector.load %arg11[%c5, %c0_100, %c0_101] : memref<8x8x46xf32, #tpu.memory_space<vmem>>, vector<1x8x46xf32>
    %243 = vector.shape_cast %242 : vector<1x8x46xf32> to vector<8x46xf32>
    %244 = vector.shape_cast %241 : vector<8x46xf32> to vector<1x8x46xf32>
    tpu.vector_store %arg11[%c5, %c0_100, %c0_101], %244 {strides = array<i32>} : memref<8x8x46xf32, #tpu.memory_space<vmem>>, vector<1x8x46xf32>,
    %c48 = arith.constant 48 : index
    %c0_102 = arith.constant 0 : index
    %245 = vector.load %arg10[%c48, %c0_102] : memref<64x512xf32, #tpu.memory_space<vmem>>, vector<8x512xf32>
    %246 = arith.truncf %241 : vector<8x46xf32> to vector<8x46xbf16>
    %c0_103 = arith.constant 0 : index
    %c0_104 = arith.constant 0 : index
    %247 = vector.load %arg3[%c0_103, %c0_104] : memref<46x512xbf16, #tpu.memory_space<vmem>>, vector<46x512xbf16>
    %cst_105 = arith.constant dense<0.000000e+00> : vector<8x512xf32>
    %248 = tpu.matmul %246, %247, %cst_105 {dimension_numbers = #tpu.dot_dimension_numbers<[1], [0], [0], [1], [0, 0, 1, 1], [], []>} : vector<8x46xbf16>, vector<46x512xbf16>, vector<8x512xf32> -> vector<8x512xf32>
    %249 = arith.addf %245, %248 : vector<8x512xf32>
    %250 = vector.extract_strided_slice %249 {offsets = [0, 0], sizes = [8, 46], strides = [1, 1]} : vector<8x512xf32> to vector<8x46xf32>
    %cst_106 = arith.constant 5.000000e-01 : f32
    %251 = vector.broadcast %cst_106 : f32 to vector<8x46xf32>
    %252 = arith.mulf %251, %250 : vector<8x46xf32>
    %253 = math.tanh %252 : vector<8x46xf32>
    %cst_107 = arith.constant 5.000000e-01 : f32
    %254 = vector.broadcast %cst_107 : f32 to vector<8x46xf32>
    %255 = arith.mulf %254, %253 : vector<8x46xf32>
    %cst_108 = arith.constant 5.000000e-01 : f32
    %256 = vector.broadcast %cst_108 : f32 to vector<8x46xf32>
    %257 = arith.addf %255, %256 : vector<8x46xf32>
    %258 = vector.extract_strided_slice %249 {offsets = [0, 128], sizes = [8, 46], strides = [1, 1]} : vector<8x512xf32> to vector<8x46xf32>
    %cst_109 = arith.constant 5.000000e-01 : f32
    %259 = vector.broadcast %cst_109 : f32 to vector<8x46xf32>
    %260 = arith.mulf %259, %258 : vector<8x46xf32>
    %261 = math.tanh %260 : vector<8x46xf32>
    %cst_110 = arith.constant 5.000000e-01 : f32
    %262 = vector.broadcast %cst_110 : f32 to vector<8x46xf32>
    %263 = arith.mulf %262, %261 : vector<8x46xf32>
    %cst_111 = arith.constant 5.000000e-01 : f32
    %264 = vector.broadcast %cst_111 : f32 to vector<8x46xf32>
    %265 = arith.addf %263, %264 : vector<8x46xf32>
    %266 = vector.extract_strided_slice %249 {offsets = [0, 256], sizes = [8, 46], strides = [1, 1]} : vector<8x512xf32> to vector<8x46xf32>
    %267 = math.tanh %266 : vector<8x46xf32>
    %268 = vector.extract_strided_slice %249 {offsets = [0, 384], sizes = [8, 46], strides = [1, 1]} : vector<8x512xf32> to vector<8x46xf32>
    %cst_112 = arith.constant 5.000000e-01 : f32
    %269 = vector.broadcast %cst_112 : f32 to vector<8x46xf32>
    %270 = arith.mulf %269, %268 : vector<8x46xf32>
    %271 = math.tanh %270 : vector<8x46xf32>
    %cst_113 = arith.constant 5.000000e-01 : f32
    %272 = vector.broadcast %cst_113 : f32 to vector<8x46xf32>
    %273 = arith.mulf %272, %271 : vector<8x46xf32>
    %cst_114 = arith.constant 5.000000e-01 : f32
    %274 = vector.broadcast %cst_114 : f32 to vector<8x46xf32>
    %275 = arith.addf %273, %274 : vector<8x46xf32>
    %276 = arith.mulf %265, %239 : vector<8x46xf32>
    %277 = arith.mulf %257, %267 : vector<8x46xf32>
    %278 = arith.addf %276, %277 : vector<8x46xf32>
    %279 = math.tanh %278 : vector<8x46xf32>
    %280 = arith.mulf %275, %279 : vector<8x46xf32>
    %c6 = arith.constant 6 : index
    %c0_115 = arith.constant 0 : index
    %c0_116 = arith.constant 0 : index
    %281 = vector.load %arg11[%c6, %c0_115, %c0_116] : memref<8x8x46xf32, #tpu.memory_space<vmem>>, vector<1x8x46xf32>
    %282 = vector.shape_cast %281 : vector<1x8x46xf32> to vector<8x46xf32>
    %283 = vector.shape_cast %280 : vector<8x46xf32> to vector<1x8x46xf32>
    tpu.vector_store %arg11[%c6, %c0_115, %c0_116], %283 {strides = array<i32>} : memref<8x8x46xf32, #tpu.memory_space<vmem>>, vector<1x8x46xf32>,
    %c56 = arith.constant 56 : index
    %c0_117 = arith.constant 0 : index
    %284 = vector.load %arg10[%c56, %c0_117] : memref<64x512xf32, #tpu.memory_space<vmem>>, vector<8x512xf32>
    %285 = arith.truncf %280 : vector<8x46xf32> to vector<8x46xbf16>
    %c0_118 = arith.constant 0 : index
    %c0_119 = arith.constant 0 : index
    %286 = vector.load %arg3[%c0_118, %c0_119] : memref<46x512xbf16, #tpu.memory_space<vmem>>, vector<46x512xbf16>
    %cst_120 = arith.constant dense<0.000000e+00> : vector<8x512xf32>
    %287 = tpu.matmul %285, %286, %cst_120 {dimension_numbers = #tpu.dot_dimension_numbers<[1], [0], [0], [1], [0, 0, 1, 1], [], []>} : vector<8x46xbf16>, vector<46x512xbf16>, vector<8x512xf32> -> vector<8x512xf32>
    %288 = arith.addf %284, %287 : vector<8x512xf32>
    %289 = vector.extract_strided_slice %288 {offsets = [0, 0], sizes = [8, 46], strides = [1, 1]} : vector<8x512xf32> to vector<8x46xf32>
    %cst_121 = arith.constant 5.000000e-01 : f32
    %290 = vector.broadcast %cst_121 : f32 to vector<8x46xf32>
    %291 = arith.mulf %290, %289 : vector<8x46xf32>
    %292 = math.tanh %291 : vector<8x46xf32>
    %cst_122 = arith.constant 5.000000e-01 : f32
    %293 = vector.broadcast %cst_122 : f32 to vector<8x46xf32>
    %294 = arith.mulf %293, %292 : vector<8x46xf32>
    %cst_123 = arith.constant 5.000000e-01 : f32
    %295 = vector.broadcast %cst_123 : f32 to vector<8x46xf32>
    %296 = arith.addf %294, %295 : vector<8x46xf32>
    %297 = vector.extract_strided_slice %288 {offsets = [0, 128], sizes = [8, 46], strides = [1, 1]} : vector<8x512xf32> to vector<8x46xf32>
    %cst_124 = arith.constant 5.000000e-01 : f32
    %298 = vector.broadcast %cst_124 : f32 to vector<8x46xf32>
    %299 = arith.mulf %298, %297 : vector<8x46xf32>
    %300 = math.tanh %299 : vector<8x46xf32>
    %cst_125 = arith.constant 5.000000e-01 : f32
    %301 = vector.broadcast %cst_125 : f32 to vector<8x46xf32>
    %302 = arith.mulf %301, %300 : vector<8x46xf32>
    %cst_126 = arith.constant 5.000000e-01 : f32
    %303 = vector.broadcast %cst_126 : f32 to vector<8x46xf32>
    %304 = arith.addf %302, %303 : vector<8x46xf32>
    %305 = vector.extract_strided_slice %288 {offsets = [0, 256], sizes = [8, 46], strides = [1, 1]} : vector<8x512xf32> to vector<8x46xf32>
    %306 = math.tanh %305 : vector<8x46xf32>
    %307 = vector.extract_strided_slice %288 {offsets = [0, 384], sizes = [8, 46], strides = [1, 1]} : vector<8x512xf32> to vector<8x46xf32>
    %cst_127 = arith.constant 5.000000e-01 : f32
    %308 = vector.broadcast %cst_127 : f32 to vector<8x46xf32>
    %309 = arith.mulf %308, %307 : vector<8x46xf32>
    %310 = math.tanh %309 : vector<8x46xf32>
    %cst_128 = arith.constant 5.000000e-01 : f32
    %311 = vector.broadcast %cst_128 : f32 to vector<8x46xf32>
    %312 = arith.mulf %311, %310 : vector<8x46xf32>
    %cst_129 = arith.constant 5.000000e-01 : f32
    %313 = vector.broadcast %cst_129 : f32 to vector<8x46xf32>
    %314 = arith.addf %312, %313 : vector<8x46xf32>
    %315 = arith.mulf %304, %278 : vector<8x46xf32>
    %316 = arith.mulf %296, %306 : vector<8x46xf32>
    %317 = arith.addf %315, %316 : vector<8x46xf32>
    %318 = math.tanh %317 : vector<8x46xf32>
    %319 = arith.mulf %314, %318 : vector<8x46xf32>
    %c7 = arith.constant 7 : index
    %c0_130 = arith.constant 0 : index
    %c0_131 = arith.constant 0 : index
    %320 = vector.load %arg11[%c7, %c0_130, %c0_131] : memref<8x8x46xf32, #tpu.memory_space<vmem>>, vector<1x8x46xf32>
    %321 = vector.shape_cast %320 : vector<1x8x46xf32> to vector<8x46xf32>
    %322 = vector.shape_cast %319 : vector<8x46xf32> to vector<1x8x46xf32>
    tpu.vector_store %arg11[%c7, %c0_130, %c0_131], %322 {strides = array<i32>} : memref<8x8x46xf32, #tpu.memory_space<vmem>>, vector<1x8x46xf32>,
    %c0_132 = arith.constant 0 : index
    %c0_133 = arith.constant 0 : index
    %c0_134 = arith.constant 0 : index
    %323 = vector.load %arg11[%c0_132, %c0_133, %c0_134] : memref<8x8x46xf32, #tpu.memory_space<vmem>>, vector<8x8x46xf32>
    %cst_135 = arith.constant dense<0.000000e+00> : vector<8x46xf32>
    %324 = vector.multi_reduction <add>, %323, %cst_135 [0] : vector<8x8x46xf32> to vector<8x46xf32>
    %cst_136 = arith.constant 8.000000e+00 : f32
    %325 = vector.broadcast %cst_136 : f32 to vector<8x46xf32>
    %326 = arith.divf %324, %325 : vector<8x46xf32>
    %327 = vector.shape_cast %326 : vector<8x46xf32> to vector<1x8x46xf32>
    %328 = vector.broadcast %327 : vector<1x8x46xf32> to vector<8x8x46xf32>
    %329 = arith.subf %323, %328 : vector<8x8x46xf32>
    %330 = arith.mulf %329, %329 : vector<8x8x46xf32>
    %cst_137 = arith.constant dense<0.000000e+00> : vector<8x46xf32>
    %331 = vector.multi_reduction <add>, %330, %cst_137 [0] : vector<8x8x46xf32> to vector<8x46xf32>
    %cst_138 = arith.constant 8.000000e+00 : f32
    %332 = vector.broadcast %cst_138 : f32 to vector<8x46xf32>
    %333 = arith.divf %331, %332 : vector<8x46xf32>
    %c0_139 = arith.constant 0 : index
    %c0_140 = arith.constant 0 : index
    %334 = vector.load %arg5[%c0_139, %c0_140] : memref<1x46xf32, #tpu.memory_space<vmem>>, vector<1x46xf32>
    %cst_141 = arith.constant 9.99999974E-6 : f32
    %335 = vector.broadcast %cst_141 : f32 to vector<8x46xf32>
    %336 = arith.addf %333, %335 : vector<8x46xf32>
    %337 = math.rsqrt %336 : vector<8x46xf32>
    %338 = vector.broadcast %334 : vector<1x46xf32> to vector<8x46xf32>
    %339 = arith.mulf %338, %337 : vector<8x46xf32>
    %c0_142 = arith.constant 0 : index
    %c0_143 = arith.constant 0 : index
    %340 = vector.load %arg7[%c0_142, %c0_143] : memref<1x46xf32, #tpu.memory_space<vmem>>, vector<1x46xf32>
    %341 = vector.broadcast %340 : vector<1x46xf32> to vector<8x46xf32>
    %342 = arith.mulf %339, %341 : vector<8x46xf32>
    %c0_144 = arith.constant 0 : index
    %c0_145 = arith.constant 0 : index
    %343 = vector.load %arg8[%c0_144, %c0_145] : memref<1x1xf32, #tpu.memory_space<vmem>>, vector<1x1xf32>
    %c0_146 = arith.constant 0 : index
    %c0_147 = arith.constant 0 : index
    %344 = vector.load %arg6[%c0_146, %c0_147] : memref<1x46xf32, #tpu.memory_space<vmem>>, vector<1x46xf32>
    %345 = arith.mulf %326, %339 : vector<8x46xf32>
    %346 = vector.broadcast %344 : vector<1x46xf32> to vector<8x46xf32>
    %347 = arith.subf %346, %345 : vector<8x46xf32>
    %348 = vector.broadcast %340 : vector<1x46xf32> to vector<8x46xf32>
    %349 = arith.mulf %347, %348 : vector<8x46xf32>
    %cst_148 = arith.constant dense<0.000000e+00> : vector<8xf32>
    %350 = vector.multi_reduction <add>, %349, %cst_148 [1] : vector<8x46xf32> to vector<8xf32>
    %351 = vector.shape_cast %350 : vector<8xf32> to vector<1x8xf32>
    %352 = vector.broadcast %343 : vector<1x1xf32> to vector<1x8xf32>
    %353 = arith.addf %352, %351 : vector<1x8xf32>
    %354 = vector.shape_cast %342 : vector<8x46xf32> to vector<1x8x46xf32>
    %355 = vector.broadcast %354 : vector<1x8x46xf32> to vector<8x8x46xf32>
    %356 = arith.mulf %323, %355 : vector<8x8x46xf32>
    %cst_149 = arith.constant dense<0.000000e+00> : vector<8x8xf32>
    %357 = vector.multi_reduction <add>, %356, %cst_149 [2] : vector<8x8x46xf32> to vector<8x8xf32>
    %358 = vector.broadcast %353 : vector<1x8xf32> to vector<8x8xf32>
    %359 = arith.addf %357, %358 : vector<8x8xf32>
    %cst_150 = arith.constant 5.000000e-01 : f32
    %360 = vector.broadcast %cst_150 : f32 to vector<8x8xf32>
    %361 = arith.mulf %360, %359 : vector<8x8xf32>
    %362 = math.tanh %361 : vector<8x8xf32>
    %cst_151 = arith.constant 5.000000e-01 : f32
    %363 = vector.broadcast %cst_151 : f32 to vector<8x8xf32>
    %364 = arith.mulf %363, %362 : vector<8x8xf32>
    %cst_152 = arith.constant 5.000000e-01 : f32
    %365 = vector.broadcast %cst_152 : f32 to vector<8x8xf32>
    %366 = arith.addf %364, %365 : vector<8x8xf32>
    %367 = tpu.transpose %366, [1, 0] : vector<8x8xf32> -> vector<8x8xf32>
    %c0_153 = arith.constant 0 : index
    %c0_154 = arith.constant 0 : index
    %368 = vector.load %arg9[%c0_153, %c0_154] : memref<8x8xf32, #tpu.memory_space<vmem>>, vector<8x8xf32>
    tpu.vector_store %arg9[%c0_153, %c0_154], %367 {strides = array<i32>} : memref<8x8xf32, #tpu.memory_space<vmem>>, vector<8x8xf32>,
    return
  }
  func.func @transform_0(%arg0: i32) -> (i32, i32, i32) {
    %c0_i32 = arith.constant 0 : i32
    %c0_i32_0 = arith.constant 0 : i32
    %c0_i32_1 = arith.constant 0 : i32
    return %c0_i32, %arg0, %c0_i32_0 : i32, i32, i32
  }
  func.func @transform_1(%arg0: i32) -> (i32, i32) {
    %c0_i32 = arith.constant 0 : i32
    %c0_i32_0 = arith.constant 0 : i32
    %c0_i32_1 = arith.constant 0 : i32
    return %c0_i32, %c0_i32_0 : i32, i32
  }
  func.func @transform_2(%arg0: i32) -> (i32, i32) {
    %c0_i32 = arith.constant 0 : i32
    %c0_i32_0 = arith.constant 0 : i32
    %c0_i32_1 = arith.constant 0 : i32
    return %c0_i32, %c0_i32_0 : i32, i32
  }
  func.func @transform_3(%arg0: i32) -> (i32, i32) {
    %c0_i32 = arith.constant 0 : i32
    %c0_i32_0 = arith.constant 0 : i32
    %c0_i32_1 = arith.constant 0 : i32
    return %c0_i32, %c0_i32_0 : i32, i32
  }
  func.func @transform_4(%arg0: i32) -> (i32, i32) {
    %c0_i32 = arith.constant 0 : i32
    %c0_i32_0 = arith.constant 0 : i32
    %c0_i32_1 = arith.constant 0 : i32
    return %c0_i32, %c0_i32_0 : i32, i32
  }
  func.func @transform_5(%arg0: i32) -> (i32, i32) {
    %c0_i32 = arith.constant 0 : i32
    %c0_i32_0 = arith.constant 0 : i32
    %c0_i32_1 = arith.constant 0 : i32
    return %c0_i32, %c0_i32_0 : i32, i32
  }
  func.func @transform_6(%arg0: i32) -> (i32, i32) {
    %c0_i32 = arith.constant 0 : i32
    %c0_i32_0 = arith.constant 0 : i32
    %c0_i32_1 = arith.constant 0 : i32
    return %c0_i32, %c0_i32_0 : i32, i32
  }
  func.func @transform_7(%arg0: i32) -> (i32, i32) {
    %c0_i32 = arith.constant 0 : i32
    %c0_i32_0 = arith.constant 0 : i32
    %c0_i32_1 = arith.constant 0 : i32
    return %c0_i32, %c0_i32_0 : i32, i32
  }
  func.func @transform_8(%arg0: i32) -> (i32, i32) {
    %c0_i32 = arith.constant 0 : i32
    %c0_i32_0 = arith.constant 0 : i32
    return %arg0, %c0_i32 : i32, i32
  }
}

</mosaic_0001>

<llo_original>
// kernel: tpu_custom_call.1
$region0: #{tpu_custom_call.1}
  #allocation0 [shape = 'u32[]', space=smem, size = 0x4, offset = 0x4, fixed_abs, tag = 'smem constant byte address 0x4 - core index']
  #allocation1 [shape = 'u32[144,128]{1,0:T(1,128)}', space=vmem, size = 0x12000, scoped, tag = 'internal scratch']
  #allocation2 [shape = 'f32[64,512]{1,0:T(8,128)}', space=vmem, size = 0x20000, scoped, tag = 'scratch operand']
  #allocation3 [shape = 'f32[8,8,46]{2,1,0:T(8,128)}', space=vmem, size = 0x8000, scoped, tag = 'scratch operand']
  #allocation4 [shape = 'f32[1,1]{1,0:T(1,128)S(1)}', space=vmem, size = 0x200, scoped, tag = 'scoped memory for tpu_custom_call.1']
  %s0 = inlined_call_operand.hbm [shape: f32[8,16,22], index: 0, kind: input, shape index: {}]
  %s1 = inlined_call_operand.hbm [shape: bf16[22,512], index: 1, kind: input, shape index: {}]
  %s2 = inlined_call_operand.hbm [shape: bf16[46,512], index: 2, kind: input, shape index: {}]
  %s3 = inlined_call_operand.vmem [shape: f32[1,512], index: 3, kind: input, shape index: {}]
  %s4 = inlined_call_operand.vmem [shape: f32[1,46], index: 4, kind: input, shape index: {}]
  %s5 = inlined_call_operand.vmem [shape: f32[1,46], index: 5, kind: input, shape index: {}]
  %s6 = inlined_call_operand.vmem [shape: f32[1,46], index: 6, kind: input, shape index: {}]
  %s7 = inlined_call_operand.<no memory space> [shape: f32[1,1], index: 7, kind: input, shape index: {}]
  %s8 = inlined_call_operand.vmem [shape: f32[16,8], index: 8, kind: output, shape index: {}]
  %s9 = sld [smem:[#allocation0]]
  $region77: #{tpu_custom_call.1} parent=0
    _
  %s11 = ssub.s32 1, %s9
  %s12 = scalar_select 0, %s11, %s9
  %v13 = vstv %s7
  %14 = vst [vmem:[#allocation4] sm:$0x1] %v13
  $region1: #{tpu_custom_call.1} parent=0
    #allocation5 [shape = 'u8[65536]{0}', space=vmem, size = 0x10000, scoped, tag = 'input window, operand 0']
    #allocation6 [shape = 's32[2]{0}', space=sflag, size = 0x8, scoped, tag = 'scoped memory for tpu_custom_call.1']
    #allocation7 [shape = 'u8[24576]{0}', space=vmem, size = 0x6000, scoped, tag = 'input window, operand 1, single buffered']
    #allocation8 [shape = 's32[1]{0}', space=sflag, size = 0x4, scoped, tag = 'scoped memory for tpu_custom_call.1']
    #allocation9 [shape = 'u8[49152]{0}', space=vmem, size = 0xc000, scoped, tag = 'input window, operand 2, single buffered']
    %15 = vsyncpa [#allocation6], 0
    %s16 = scalar_lea.sflag [#allocation6], 1
    %17 = vsyncpa %s16, 0
    %18 = vsyncpa [#allocation8], 0
    loop: start=0, step=1, limit=4
    $region2: #{tpu_custom_call.1} parent=1 // loop_pre_header
      _
    $region3: #{tpu_custom_call.1} parent=1 // loop_header
      %s20 = sphi 0, %s24
      %p21 = scmp.ge.s32.totalorder %s20, 4
      %s30 = sphi 0, %s32
      %s33 = sphi 0, %s30
      %s34 = sphi 0, %s33
      %s50 = sphi 0, %s34
      %s54 = sphi 0, %s54
      %s56 = sphi 0, %s54
      %s57 = sphi 0, %s56
      %s71 = sphi 0, %s57
      %s75 = sphi 0, %s75
      %s77 = sphi 0, %s75
      %s78 = sphi 0, %s77
      %s92 = sphi 0, %s78
      %s96 = sphi 0, %s96
      %s98 = sphi 0, %s96
      %s99 = sphi 0, %s98
      %s113 = sphi 0, %s99
      %s117 = sphi 0, %s117
      %s119 = sphi 0, %s117
      %s120 = sphi 0, %s119
      %s134 = sphi 0, %s120
      %s138 = sphi 0, %s138
      %s140 = sphi 0, %s138
      %s141 = sphi 0, %s140
      %s155 = sphi 0, %s141
      %s159 = sphi 0, %s159
      %s161 = sphi 0, %s159
      %s162 = sphi 0, %s161
      %s176 = sphi 0, %s162
      %s180 = sphi 0, %s180
      %s182 = sphi 0, %s180
      %s183 = sphi 0, %s182
      %s197 = sphi 0, %s183
      %s203 = sphi 0, %s205
      %s206 = sphi 0, %s203
      %s207 = sphi 0, %s206
      %s223 = sphi 0, %s207
    $region4: #{tpu_custom_call.1} parent=1 // loop_header_branch
      %23 = sbr.rel (%p21) target = $region8
    $region5: #{tpu_custom_call.1} parent=1 // loop_body
      %s25 = ssub.s32 %s20, 1
      %s26 = ssub.s32 %s20, 2
      %s27 = sadd.s32 %s20, 1
      %s28 = ssub.s32 %s20, %s27
      %p29 = scmp.eq.s32.totalorder %s28, 0
      %s31 = sadd.s32 %s30, 1
      %s32 = scalar_select %p29, %s30, %s31
      %p35 = pneg %p29
      %p36 = scmp.eq.s32.totalorder %s20, 1
      %p37 = por %p35, %p36
      %p38 = scmp.ne.s32.totalorder %s30, %s33
      %p39 = scmp.eq.s32.totalorder %s20, 0
      %p40 = por %p38, %p39
      %p41 = scmp.ne.s32.totalorder %s30, %s33
      %p42 = scmp.eq.s32.totalorder %s25, 1
      %p43 = por %p41, %p42
      %p44 = scmp.ne.s32.totalorder %s33, %s34
      %p45 = scmp.eq.s32.totalorder %s25, 0
      %p46 = por %p44, %p45
      %p47 = scmp.ne.s32.totalorder %s33, %s34
      %p48 = scmp.eq.s32.totalorder %s26, 1
      %p49 = por %p47, %p48
      %p51 = scmp.ne.s32.totalorder %s34, %s50
      %p52 = scmp.eq.s32.totalorder %s26, 0
      %p53 = por %p51, %p52
      %s55 = sadd.s32 %s54, 1
      %p58 = scmp.eq.s32.totalorder %s20, 1
      %p59 = scmp.ne.s32.totalorder %s54, %s56
      %p60 = scmp.eq.s32.totalorder %s20, 0
      %p61 = por %p59, %p60
      %p62 = scmp.ne.s32.totalorder %s54, %s56
      %p63 = scmp.eq.s32.totalorder %s25, 1
      %p64 = por %p62, %p63
      %p65 = scmp.ne.s32.totalorder %s56, %s57
      %p66 = scmp.eq.s32.totalorder %s25, 0
      %p67 = por %p65, %p66
      %p68 = scmp.ne.s32.totalorder %s56, %s57
      %p69 = scmp.eq.s32.totalorder %s26, 1
      %p70 = por %p68, %p69
      %p72 = scmp.ne.s32.totalorder %s57, %s71
      %p73 = scmp.eq.s32.totalorder %s26, 0
      %p74 = por %p72, %p73
      %s76 = sadd.s32 %s75, 1
      %p79 = scmp.eq.s32.totalorder %s20, 1
      %p80 = scmp.ne.s32.totalorder %s75, %s77
      %p81 = scmp.eq.s32.totalorder %s20, 0
      %p82 = por %p80, %p81
      %p83 = scmp.ne.s32.totalorder %s75, %s77
      %p84 = scmp.eq.s32.totalorder %s25, 1
      %p85 = por %p83, %p84
      %p86 = scmp.ne.s32.totalorder %s77, %s78
      %p87 = scmp.eq.s32.totalorder %s25, 0
      %p88 = por %p86, %p87
      %p89 = scmp.ne.s32.totalorder %s77, %s78
      %p90 = scmp.eq.s32.totalorder %s26, 1
      %p91 = por %p89, %p90
      %p93 = scmp.ne.s32.totalorder %s78, %s92
      %p94 = scmp.eq.s32.totalorder %s26, 0
      %p95 = por %p93, %p94
      %s97 = sadd.s32 %s96, 1
      %p100 = scmp.eq.s32.totalorder %s20, 1
      %p101 = scmp.ne.s32.totalorder %s96, %s98
      %p102 = scmp.eq.s32.totalorder %s20, 0
      %p103 = por %p101, %p102
      %p104 = scmp.ne.s32.totalorder %s96, %s98
      %p105 = scmp.eq.s32.totalorder %s25, 1
      %p106 = por %p104, %p105
      %p107 = scmp.ne.s32.totalorder %s98, %s99
      %p108 = scmp.eq.s32.totalorder %s25, 0
      %p109 = por %p107, %p108
      %p110 = scmp.ne.s32.totalorder %s98, %s99
      %p111 = scmp.eq.s32.totalorder %s26, 1
      %p112 = por %p110, %p111
      %p114 = scmp.ne.s32.totalorder %s99, %s113
      %p115 = scmp.eq.s32.totalorder %s26, 0
      %p116 = por %p114, %p115
      %s118 = sadd.s32 %s117, 1
      %p121 = scmp.eq.s32.totalorder %s20, 1
      %p122 = scmp.ne.s32.totalorder %s117, %s119
      %p123 = scmp.eq.s32.totalorder %s20, 0
      %p124 = por %p122, %p123
      %p125 = scmp.ne.s32.totalorder %s117, %s119
      %p126 = scmp.eq.s32.totalorder %s25, 1
      %p127 = por %p125, %p126
      %p128 = scmp.ne.s32.totalorder %s119, %s120
      %p129 = scmp.eq.s32.totalorder %s25, 0
      %p130 = por %p128, %p129
      %p131 = scmp.ne.s32.totalorder %s119, %s120
      %p132 = scmp.eq.s32.totalorder %s26, 1
      %p133 = por %p131, %p132
      %p135 = scmp.ne.s32.totalorder %s120, %s134
      %p136 = scmp.eq.s32.totalorder %s26, 0
      %p137 = por %p135, %p136
      %s139 = sadd.s32 %s138, 1
      %p142 = scmp.eq.s32.totalorder %s20, 1
      %p143 = scmp.ne.s32.totalorder %s138, %s140
      %p144 = scmp.eq.s32.totalorder %s20, 0
      %p145 = por %p143, %p144
      %p146 = scmp.ne.s32.totalorder %s138, %s140
      %p147 = scmp.eq.s32.totalorder %s25, 1
      %p148 = por %p146, %p147
      %p149 = scmp.ne.s32.totalorder %s140, %s141
      %p150 = scmp.eq.s32.totalorder %s25, 0
      %p151 = por %p149, %p150
      %p152 = scmp.ne.s32.totalorder %s140, %s141
      %p153 = scmp.eq.s32.totalorder %s26, 1
      %p154 = por %p152, %p153
      %p156 = scmp.ne.s32.totalorder %s141, %s155
      %p157 = scmp.eq.s32.totalorder %s26, 0
      %p158 = por %p156, %p157
      %s160 = sadd.s32 %s159, 1
      %p163 = scmp.eq.s32.totalorder %s20, 1
      %p164 = scmp.ne.s32.totalorder %s159, %s161
      %p165 = scmp.eq.s32.totalorder %s20, 0
      %p166 = por %p164, %p165
      %p167 = scmp.ne.s32.totalorder %s159, %s161
      %p168 = scmp.eq.s32.totalorder %s25, 1
      %p169 = por %p167, %p168
      %p170 = scmp.ne.s32.totalorder %s161, %s162
      %p171 = scmp.eq.s32.totalorder %s25, 0
      %p172 = por %p170, %p171
      %p173 = scmp.ne.s32.totalorder %s161, %s162
      %p174 = scmp.eq.s32.totalorder %s26, 1
      %p175 = por %p173, %p174
      %p177 = scmp.ne.s32.totalorder %s162, %s176
      %p178 = scmp.eq.s32.totalorder %s26, 0
      %p179 = por %p177, %p178
      %s181 = sadd.s32 %s180, 1
      %p184 = scmp.eq.s32.totalorder %s20, 1
      %p185 = scmp.ne.s32.totalorder %s180, %s182
      %p186 = scmp.eq.s32.totalorder %s20, 0
      %p187 = por %p185, %p186
      %p188 = scmp.ne.s32.totalorder %s180, %s182
      %p189 = scmp.eq.s32.totalorder %s25, 1
      %p190 = por %p188, %p189
      %p191 = scmp.ne.s32.totalorder %s182, %s183
      %p192 = scmp.eq.s32.totalorder %s25, 0
      %p193 = por %p191, %p192
      %p194 = scmp.ne.s32.totalorder %s182, %s183
      %p195 = scmp.eq.s32.totalorder %s26, 1
      %p196 = por %p194, %p195
      %p198 = scmp.ne.s32.totalorder %s183, %s197
      %p199 = scmp.eq.s32.totalorder %s26, 0
      %p200 = por %p198, %p199
      %s201 = ssub.s32 %s20, %s27
      %p202 = scmp.eq.s32.totalorder %s201, 0
      %s204 = sadd.s32 %s203, 1
      %s205 = scalar_select %p202, %s203, %s204
      %p208 = pneg %p202
      %p209 = scmp.eq.s32.totalorder %s20, 1
      %p210 = por %p208, %p209
      %p211 = scmp.ne.s32.totalorder %s203, %s206
      %p212 = scmp.eq.s32.totalorder %s20, 0
      %p213 = por %p211, %p212
      %p214 = scmp.ne.s32.totalorder %s203, %s206
      %p215 = scmp.eq.s32.totalorder %s25, 1
      %p216 = por %p214, %p215
      %p217 = scmp.ne.s32.totalorder %s206, %s207
      %p218 = scmp.eq.s32.totalorder %s25, 0
      %p219 = por %p217, %p218
      %p220 = scmp.ne.s32.totalorder %s206, %s207
      %p221 = scmp.eq.s32.totalorder %s26, 1
      %p222 = por %p220, %p221
      %p224 = scmp.ne.s32.totalorder %s207, %s223
      %p225 = scmp.eq.s32.totalorder %s26, 0
      %p226 = por %p224, %p225
      %p227 = scmp.le.s32.totalorder 1, %s20
      %p228 = scmp.lt.s32.totalorder %s20, 3
      %p229 = pnand %p227, %p228
      %p230 = pneg %p229
      // Predicated region
      $region9: #{tpu_custom_call.1} parent=5 // pred_check
        _
      $region10: #{tpu_custom_call.1} parent=5 // pred_check_branch
        %232 = sbr.rel (%p229) target = $region12
      $region11: #{tpu_custom_call.1} parent=5 // pred_region
        %s233 = ssub.s32 %s20, 1
        // Predicated region
        $region13: #{tpu_custom_call.1} parent=11 // pred_check
          %p234 = pneg %p67
        $region14: #{tpu_custom_call.1} parent=11 // pred_check_branch
          %236 = sbr.rel (%p234) target = $region16
        $region15: #{tpu_custom_call.1} parent=11 // pred_region
          %s238 = ssub.s32 768, 768
          %239 = vsyncadd [#allocation8], %s238
          %s240 = sshll.u32 [#allocation7], 4
          %s241 = int_to_ptr.vmem [resolvable:$true] %s240
          %246 = dma.hbm_to_vmem [thread:$0]  %s1, 768, %s241, [#allocation8], 256, 256, 16
        $region16: #{tpu_custom_call.1} parent=11 // pred_fallthru
          _
        // Predicated region
        $region17: #{tpu_custom_call.1} parent=11 // pred_check
          %p247 = pneg %p88
        $region18: #{tpu_custom_call.1} parent=11 // pred_check_branch
          %249 = sbr.rel (%p247) target = $region20
        $region19: #{tpu_custom_call.1} parent=11 // pred_region
          %s251 = ssub.s32 1536, 1536
          %252 = vsyncadd [#allocation8], %s251
          %s253 = sshll.u32 [#allocation9], 4
          %s254 = int_to_ptr.vmem [resolvable:$true] %s253
          %259 = dma.hbm_to_vmem [thread:$0]  %s2, 1536, %s254, [#allocation8], 256, 256, 16
        $region20: #{tpu_custom_call.1} parent=11 // pred_fallthru
          _
        // Predicated region
        $region21: #{tpu_custom_call.1} parent=11 // pred_check
          %p260 = pneg %p109
        $region22: #{tpu_custom_call.1} parent=11 // pred_check_branch
          %262 = sbr.rel (%p260) target = $region24
        $region23: #{tpu_custom_call.1} parent=11 // pred_region
          _
        $region24: #{tpu_custom_call.1} parent=11 // pred_fallthru
          _
        // Predicated region
        $region25: #{tpu_custom_call.1} parent=11 // pred_check
          %p263 = pneg %p130
        $region26: #{tpu_custom_call.1} parent=11 // pred_check_branch
          %265 = sbr.rel (%p263) target = $region28
        $region27: #{tpu_custom_call.1} parent=11 // pred_region
          _
        $region28: #{tpu_custom_call.1} parent=11 // pred_fallthru
          _
        // Predicated region
        $region29: #{tpu_custom_call.1} parent=11 // pred_check
          %p266 = pneg %p151
        $region30: #{tpu_custom_call.1} parent=11 // pred_check_branch
          %268 = sbr.rel (%p266) target = $region32
        $region31: #{tpu_custom_call.1} parent=11 // pred_region
          _
        $region32: #{tpu_custom_call.1} parent=11 // pred_fallthru
          _
        // Predicated region
        $region33: #{tpu_custom_call.1} parent=11 // pred_check
          %p269 = pneg %p172
        $region34: #{tpu_custom_call.1} parent=11 // pred_check_branch
          %271 = sbr.rel (%p269) target = $region36
        $region35: #{tpu_custom_call.1} parent=11 // pred_region
          _
        $region36: #{tpu_custom_call.1} parent=11 // pred_fallthru
          _
        // Predicated region
        $region37: #{tpu_custom_call.1} parent=11 // pred_check
          %p272 = pneg %p193
        $region38: #{tpu_custom_call.1} parent=11 // pred_check_branch
          %274 = sbr.rel (%p272) target = $region40
        $region39: #{tpu_custom_call.1} parent=11 // pred_region
          _
        $region40: #{tpu_custom_call.1} parent=11 // pred_fallthru
          _
      $region12: #{tpu_custom_call.1} parent=5 // pred_fallthru
        _
      %p275 = scmp.lt.s32.totalorder %s20, 2
      // Predicated region
      $region41: #{tpu_custom_call.1} parent=5 // pred_check
        %p276 = pneg %p275
      $region42: #{tpu_custom_call.1} parent=5 // pred_check_branch
        %278 = sbr.rel (%p276) target = $region44
      $region43: #{tpu_custom_call.1} parent=5 // pred_region
        // Predicated region
        $region45: #{tpu_custom_call.1} parent=43 // pred_check
          %p279 = pneg %p40
        $region46: #{tpu_custom_call.1} parent=43 // pred_check_branch
          %281 = sbr.rel (%p279) target = $region48
        $region47: #{tpu_custom_call.1} parent=43 // pred_region
          %s282 = sand.u32 %s30, 1
          %s283 = scalar_lea.sflag [#allocation6], %s282
          %s284 = sand.u32 %s30, 1
          %s285 = smul.addr %s284, 64
          %s286 = scalar_lea.vmem [#allocation5], %s285
          %s288 = ssub.s32 1024, 1024
          %289 = vsyncadd %s283, %s288
          %s290 = smul.addr %s20, 128
          %s291 = scalar_lea.hbm %s0, %s290
          %s292 = sshll.u32 %s286, 4
          %s293 = int_to_ptr.vmem [resolvable:$true] %s292
          %298 = dma.hbm_to_vmem [thread:$0]  %s291, 1024, %s293, %s283, 256, 128, 8
        $region48: #{tpu_custom_call.1} parent=43 // pred_fallthru
          _
      $region44: #{tpu_custom_call.1} parent=5 // pred_fallthru
        _
      %p299 = scmp.le.s32.totalorder 1, %s20
      %p300 = scmp.lt.s32.totalorder %s20, 3
      %p301 = pnand %p299, %p300
      %p302 = pneg %p301
      // Predicated region
      $region49: #{tpu_custom_call.1} parent=5 // pred_check
        _
      $region50: #{tpu_custom_call.1} parent=5 // pred_check_branch
        %304 = sbr.rel (%p301) target = $region52
      $region51: #{tpu_custom_call.1} parent=5 // pred_region
        %s305 = ssub.s32 %s20, 1
        %s306 = sand.u32 %s33, 1
        %s307 = scalar_lea.sflag [#allocation6], %s306
        %s308 = sand.u32 %s33, 1
        %s309 = smul.addr %s308, 64
        %s310 = scalar_lea.vmem [#allocation5], %s309
        // Predicated region
        $region53: #{tpu_custom_call.1} parent=51 // pred_check
          %p311 = pneg %p46
        $region54: #{tpu_custom_call.1} parent=51 // pred_check_branch
          %313 = sbr.rel (%p311) target = $region56
        $region55: #{tpu_custom_call.1} parent=51 // pred_region
          %314 = dma.done %s307, 1024
        $region56: #{tpu_custom_call.1} parent=51 // pred_fallthru
          _
        // Predicated region
        $region57: #{tpu_custom_call.1} parent=51 // pred_check
          %p315 = pneg %p67
        $region58: #{tpu_custom_call.1} parent=51 // pred_check_branch
          %317 = sbr.rel (%p315) target = $region60
        $region59: #{tpu_custom_call.1} parent=51 // pred_region
          %318 = dma.done [#allocation8], 768
        $region60: #{tpu_custom_call.1} parent=51 // pred_fallthru
          _
        // Predicated region
        $region61: #{tpu_custom_call.1} parent=51 // pred_check
          %p319 = pneg %p88
        $region62: #{tpu_custom_call.1} parent=51 // pred_check_branch
          %321 = sbr.rel (%p319) target = $region64
        $region63: #{tpu_custom_call.1} parent=51 // pred_region
          %322 = dma.done [#allocation8], 1536
        $region64: #{tpu_custom_call.1} parent=51 // pred_fallthru
          _
        %s323 = sand.u32 %s33, 1
        %s324 = scalar_lea.sflag [#allocation6], %s323
        %s325 = sand.u32 %s33, 1
        %s326 = smul.addr %s325, 64
        %s327 = scalar_lea.vmem [#allocation5], %s326
        %p328 = pneg %p46
        %p329 = pneg %p43
        %p330 = pneg %p67
        %p331 = pneg %p64
        %p332 = pneg %p88
        %p333 = pneg %p85
        %p334 = pneg %p109
        %p335 = pneg %p106
        %p336 = pneg %p130
        %p337 = pneg %p127
        %p338 = pneg %p151
        %p339 = pneg %p148
        %p340 = pneg %p172
        %p341 = pneg %p169
        %p342 = pneg %p193
        %p343 = pneg %p190
        %p344 = pneg %p219
        %p345 = pneg %p216
        %p346 = scmp.lt.s32.totalorder %s25, 1
        %s347 = scalar_select %p346, %s25, 1
        %s348 = smul.addr %s347, 8
        %s349 = scalar_lea.vmem %s8, %s348
        %p350 = scmp.lt.s32.totalorder %s25, 1
        %s351 = scalar_select %p350, %s25, 1
        %s352 = smul.addr %s351, 8
        %s353 = scalar_lea.vmem %s8, %s352
        %v355 = vld [vmem:[%s310] sm:$0xff]
        %v356 = vld [vmem:[%s310 + $0x8] sm:$0xff]
        %v357 = vld [vmem:[%s310 + $0x10] sm:$0xff]
        %v358 = vld [vmem:[%s310 + $0x18] sm:$0xff]
        %v359 = vld [vmem:[%s310 + $0x20] sm:$0xff]
        %v360 = vld [vmem:[%s310 + $0x28] sm:$0xff]
        %v361 = vld [vmem:[%s310 + $0x30] sm:$0xff]
        %v362 = vld [vmem:[%s310 + $0x38] sm:$0xff]
        %v363 = vpack.c.bf16 %v356, %v355
        %v364 = vpack.c.bf16 %v358, %v357
        %v365 = vpack.c.bf16 %v360, %v359
        %v366 = vpack.c.bf16 %v362, %v361
        %v367 = vld [vmem:[#allocation7] sm:$0xff]
        %v368 = vld [vmem:[#allocation7 + $0x8] sm:$0xff]
        %v369 = vld [vmem:[#allocation7 + $0x10] sm:$0xff]
        %v370 = vld [vmem:[#allocation7 + $0x18] sm:$0xff]
        %v371 = vld [vmem:[#allocation7 + $0x20] sm:$0x77]
        %v372 = vld [vmem:[#allocation7 + $0x28] sm:$0x77]
        %v373 = vld [vmem:[%s3] sm:$0xf]
        %v375 = vlaneseq
        %v376 = vshrl.u32 %v375, 7
        %v377 = vsub.s32 0, %v376
        %v378 = vrot.slane %v373, %v377
        %v379 = vlaneseq
        %v380 = vshrl.u32 %v379, 7
        %v381 = vsub.s32 1, %v380
        %v382 = vrot.slane %v373, %v381
        %v383 = vlaneseq
        %v384 = vshrl.u32 %v383, 7
        %v385 = vsub.s32 2, %v384
        %v386 = vrot.slane %v373, %v385
        %v387 = vlaneseq
        %v388 = vshrl.u32 %v387, 7
        %v389 = vsub.s32 3, %v388
        %v390 = vrot.slane %v373, %v389
        %v401 = vunpack.c.l.b16 %v367
        %v402 = vunpack.c.h.b16 %v367
        %v403 = vunpack.c.l.b16 %v368
        %v404 = vunpack.c.h.b16 %v368
        %v405 = vunpack.c.l.b16 %v369
        %v406 = vunpack.c.h.b16 %v369
        %v407 = vunpack.c.l.b16 %v370
        %v408 = vunpack.c.h.b16 %v370
        %v409 = vunpack.c.l.b16 %v371
        %v410 = vunpack.c.h.b16 %v371
        %v411 = vunpack.c.l.b16 %v372
        %v412 = vunpack.c.h.b16 %v372
        %v413 = vpack.c.b16 %v405, %v401
        %v414 = vpack.c.b16 %v406, %v402
        %v415 = vpack.c.b16 %v407, %v403
        %v416 = vpack.c.b16 %v408, %v404
        %v417 = vpack.c.b16 %v409, %v409
        %v418 = vpack.c.b16 %v410, %v410
        %v419 = vpack.c.b16 %v411, %v411
        %v420 = vpack.c.b16 %v412, %v412
        %vm425 = vcmask 179200
        %v427 = vsel %vm425, %v363, 0
        %v430 = vsel %vm425, %v364, 0
        %v433 = vsel %vm425, %v365, 0
        %v436 = vsel %vm425, %v366, 0
        %vm438 = vcmask 1042432
        %v440 = vsel %vm438, %v417, 0
        %v443 = vsel %vm438, %v418, 0
        %v446 = vsel %vm438, %v419, 0
        %v449 = vsel %vm438, %v420, 0
        %451 = vmatprep.subr.bf16.mxu0 %v414
        %452 = vmatpush1.bf16.msra.mxu0 %v413
        %453 = vmatprep.subr.bf16.mxu0 %v443
        %454 = vmatpush1.bf16.msra.mxu0 %v440
        %455 = vmatprep.subr.bf16.mxu0 0
        %456 = vmatpush1.bf16.msra.mxu0 0
        %457 = vmatprep.subr.bf16.mxu0 0
        %458 = vmatpush1.bf16.msra.mxu0 0
        %459 = vmatprep.subr.bf16.mxu0 0
        %460 = vmatpush1.bf16.msra.mxu0 0
        %461 = vmatprep.subr.bf16.mxu0 0
        %462 = vmatpush1.bf16.msra.mxu0 0
        %463 = vmatprep.subr.bf16.mxu0 0
        %464 = vmatpush1.bf16.msra.mxu0 0
        %465 = vmatprep.subr.bf16.mxu0 0
        %466 = vmatpush1.bf16.msra.mxu0 0
        %467 = vmatprep.subr.bf16.mxu0 0
        %468 = vmatpush1.bf16.msra.mxu0 0
        %469 = vmatprep.subr.bf16.mxu0 0
        %470 = vmatpush1.bf16.msra.mxu0 0
        %471 = vmatprep.subr.bf16.mxu0 0
        %472 = vmatpush1.bf16.msra.mxu0 0
        %473 = vmatprep.subr.bf16.mxu0 0
        %474 = vmatpush1.bf16.msra.mxu0 0
        %475 = vmatprep.subr.bf16.mxu0 0
        %476 = vmatpush1.bf16.msra.mxu0 0
        %477 = vmatprep.subr.bf16.mxu0 0
        %478 = vmatpush1.bf16.msra.mxu0 0
        %479 = vmatprep.subr.bf16.mxu0 0
        %480 = vmatpush1.bf16.msra.mxu0 0
        %481 = vmatprep.subr.bf16.mxu0 0
        %482 = vmatpush1.bf16.msra.mxu0 0
        %483 = vmatprep.mubr.bf16.mxu0 0
        %484 = vmatmul.mubr.bf16.gmra.mrb[0].mxu0 %v427
        %v485 = vpop.f32.mrb[0].mxu0
        %v486 = vadd.f32 %v378, %v485
        %v487 = vpop.f32.mrb[0].mxu0
        %v488 = vadd.f32 %v382, %v487
        %v489 = vpop.f32.mrb[0].mxu0
        %v490 = vadd.f32 %v378, %v489
        %v491 = vpop.f32.mrb[0].mxu0
        %v492 = vadd.f32 %v382, %v491
        %493 = vmatprep.mubr.bf16.mxu0 0
        %494 = vmatmul.mubr.bf16.gmra.mrb[0].mxu0 %v430
        %v495 = vpop.f32.mrb[0].mxu0
        %v496 = vadd.f32 %v378, %v495
        %v497 = vpop.f32.mrb[0].mxu0
        %v498 = vadd.f32 %v382, %v497
        %v499 = vpop.f32.mrb[0].mxu0
        %v500 = vadd.f32 %v378, %v499
        %v501 = vpop.f32.mrb[0].mxu0
        %v502 = vadd.f32 %v382, %v501
        %503 = vmatprep.mubr.bf16.mxu0 0
        %504 = vmatmul.mubr.bf16.gmra.mrb[0].mxu0 %v433
        %v505 = vpop.f32.mrb[0].mxu0
        %v506 = vadd.f32 %v378, %v505
        %v507 = vpop.f32.mrb[0].mxu0
        %v508 = vadd.f32 %v382, %v507
        %v509 = vpop.f32.mrb[0].mxu0
        %v510 = vadd.f32 %v378, %v509
        %v511 = vpop.f32.mrb[0].mxu0
        %v512 = vadd.f32 %v382, %v511
        %513 = vmatprep.mubr.bf16.mxu0 0
        %514 = vmatmul.mubr.bf16.gmra.mrb[0].mxu0 %v436
        %v515 = vpop.f32.mrb[0].mxu0
        %v516 = vadd.f32 %v378, %v515
        %v517 = vpop.f32.mrb[0].mxu0
        %v518 = vadd.f32 %v382, %v517
        %v519 = vpop.f32.mrb[0].mxu0
        %v520 = vadd.f32 %v378, %v519
        %v521 = vpop.f32.mrb[0].mxu0
        %v522 = vadd.f32 %v382, %v521
        %523 = vdwg.mxu0
        %524 = vmatprep.subr.bf16.mxu0 %v416
        %525 = vmatpush1.bf16.msra.mxu0 %v415
        %526 = vmatprep.subr.bf16.mxu0 %v449
        %527 = vmatpush1.bf16.msra.mxu0 %v446
        %528 = vmatprep.subr.bf16.mxu0 0
        %529 = vmatpush1.bf16.msra.mxu0 0
        %530 = vmatprep.subr.bf16.mxu0 0
        %531 = vmatpush1.bf16.msra.mxu0 0
        %532 = vmatprep.subr.bf16.mxu0 0
        %533 = vmatpush1.bf16.msra.mxu0 0
        %534 = vmatprep.subr.bf16.mxu0 0
        %535 = vmatpush1.bf16.msra.mxu0 0
        %536 = vmatprep.subr.bf16.mxu0 0
        %537 = vmatpush1.bf16.msra.mxu0 0
        %538 = vmatprep.subr.bf16.mxu0 0
        %539 = vmatpush1.bf16.msra.mxu0 0
        %540 = vmatprep.subr.bf16.mxu0 0
        %541 = vmatpush1.bf16.msra.mxu0 0
        %542 = vmatprep.subr.bf16.mxu0 0
        %543 = vmatpush1.bf16.msra.mxu0 0
        %544 = vmatprep.subr.bf16.mxu0 0
        %545 = vmatpush1.bf16.msra.mxu0 0
        %546 = vmatprep.subr.bf16.mxu0 0
        %547 = vmatpush1.bf16.msra.mxu0 0
        %548 = vmatprep.subr.bf16.mxu0 0
        %549 = vmatpush1.bf16.msra.mxu0 0
        %550 = vmatprep.subr.bf16.mxu0 0
        %551 = vmatpush1.bf16.msra.mxu0 0
        %552 = vmatprep.subr.bf16.mxu0 0
        %553 = vmatpush1.bf16.msra.mxu0 0
        %554 = vmatprep.subr.bf16.mxu0 0
        %555 = vmatpush1.bf16.msra.mxu0 0
        %556 = vmatprep.mubr.bf16.mxu0 0
        %557 = vmatmul.mubr.bf16.gmra.mrb[0].mxu0 %v427
        %v558 = vpop.f32.mrb[0].mxu0
        %v559 = vadd.f32 %v386, %v558
        %v560 = vpop.f32.mrb[0].mxu0
        %v561 = vadd.f32 %v390, %v560
        %v562 = vpop.f32.mrb[0].mxu0
        %v563 = vadd.f32 %v386, %v562
        %v564 = vpop.f32.mrb[0].mxu0
        %v565 = vadd.f32 %v390, %v564
        %566 = vmatprep.mubr.bf16.mxu0 0
        %567 = vmatmul.mubr.bf16.gmra.mrb[0].mxu0 %v430
        %v568 = vpop.f32.mrb[0].mxu0
        %v569 = vadd.f32 %v386, %v568
        %v570 = vpop.f32.mrb[0].mxu0
        %v571 = vadd.f32 %v390, %v570
        %v572 = vpop.f32.mrb[0].mxu0
        %v573 = vadd.f32 %v386, %v572
        %v574 = vpop.f32.mrb[0].mxu0
        %v575 = vadd.f32 %v390, %v574
        %576 = vmatprep.mubr.bf16.mxu0 0
        %577 = vmatmul.mubr.bf16.gmra.mrb[0].mxu0 %v433
        %v578 = vpop.f32.mrb[0].mxu0
        %v579 = vadd.f32 %v386, %v578
        %v580 = vpop.f32.mrb[0].mxu0
        %v581 = vadd.f32 %v390, %v580
        %v582 = vpop.f32.mrb[0].mxu0
        %v583 = vadd.f32 %v386, %v582
        %v584 = vpop.f32.mrb[0].mxu0
        %v585 = vadd.f32 %v390, %v584
        %586 = vmatprep.mubr.bf16.mxu0 0
        %587 = vmatmul.mubr.bf16.gmra.mrb[0].mxu0 %v436
        %v588 = vpop.f32.mrb[0].mxu0
        %v589 = vadd.f32 %v386, %v588
        %v590 = vpop.f32.mrb[0].mxu0
        %v591 = vadd.f32 %v390, %v590
        %v592 = vpop.f32.mrb[0].mxu0
        %v593 = vadd.f32 %v386, %v592
        %v594 = vpop.f32.mrb[0].mxu0
        %v595 = vadd.f32 %v390, %v594
        %596 = vdwg.mxu0
        %597 = vst [vmem:[#allocation2] sm:$0xff] %v486
        %598 = vst [vmem:[#allocation2 + $0x8] sm:$0xff] %v488
        %599 = vst [vmem:[#allocation2 + $0x10] sm:$0xff] %v559
        %600 = vst [vmem:[#allocation2 + $0x18] sm:$0xff] %v561
        %601 = vst [vmem:[#allocation2 + $0x20] sm:$0xff] %v490
        %602 = vst [vmem:[#allocation2 + $0x28] sm:$0xff] %v492
        %603 = vst [vmem:[#allocation2 + $0x30] sm:$0xff] %v563
        %604 = vst [vmem:[#allocation2 + $0x38] sm:$0xff] %v565
        %605 = vst [vmem:[#allocation2 + $0x40] sm:$0xff] %v496
        %606 = vst [vmem:[#allocation2 + $0x48] sm:$0xff] %v498
        %607 = vst [vmem:[#allocation2 + $0x50] sm:$0xff] %v569
        %608 = vst [vmem:[#allocation2 + $0x58] sm:$0xff] %v571
        %609 = vst [vmem:[#allocation2 + $0x60] sm:$0xff] %v500
        %610 = vst [vmem:[#allocation2 + $0x68] sm:$0xff] %v502
        %611 = vst [vmem:[#allocation2 + $0x70] sm:$0xff] %v573
        %612 = vst [vmem:[#allocation2 + $0x78] sm:$0xff] %v575
        %613 = vst [vmem:[#allocation2 + $0x80] sm:$0xff] %v506
        %614 = vst [vmem:[#allocation2 + $0x88] sm:$0xff] %v508
        %615 = vst [vmem:[#allocation2 + $0x90] sm:$0xff] %v579
        %616 = vst [vmem:[#allocation2 + $0x98] sm:$0xff] %v581
        %617 = vst [vmem:[#allocation2 + $0xa0] sm:$0xff] %v510
        %618 = vst [vmem:[#allocation2 + $0xa8] sm:$0xff] %v512
        %619 = vst [vmem:[#allocation2 + $0xb0] sm:$0xff] %v583
        %620 = vst [vmem:[#allocation2 + $0xb8] sm:$0xff] %v585
        %621 = vst [vmem:[#allocation2 + $0xc0] sm:$0xff] %v516
        %622 = vst [vmem:[#allocation2 + $0xc8] sm:$0xff] %v518
        %623 = vst [vmem:[#allocation2 + $0xd0] sm:$0xff] %v589
        %624 = vst [vmem:[#allocation2 + $0xd8] sm:$0xff] %v591
        %625 = vst [vmem:[#allocation2 + $0xe0] sm:$0xff] %v520
        %626 = vst [vmem:[#allocation2 + $0xe8] sm:$0xff] %v522
        %627 = vst [vmem:[#allocation2 + $0xf0] sm:$0xff] %v593
        %628 = vst [vmem:[#allocation2 + $0xf8] sm:$0xff] %v595
        %v629 = vld [vmem:[#allocation2] sm:$0xff]
        %v630 = vld [vmem:[#allocation2 + $0x8] sm:$0xff]
        %v631 = vld [vmem:[#allocation2 + $0x10] sm:$0xff]
        %v632 = vld [vmem:[#allocation2 + $0x18] sm:$0xff]
        %v633 = vld [vmem:[#allocation9] sm:$0xff]
        %v634 = vld [vmem:[#allocation9 + $0x8] sm:$0xff]
        %v635 = vld [vmem:[#allocation9 + $0x10] sm:$0xff]
        %v636 = vld [vmem:[#allocation9 + $0x18] sm:$0xff]
        %v637 = vld [vmem:[#allocation9 + $0x20] sm:$0xff]
        %v638 = vld [vmem:[#allocation9 + $0x28] sm:$0xff]
        %v639 = vld [vmem:[#allocation9 + $0x30] sm:$0xff]
        %v640 = vld [vmem:[#allocation9 + $0x38] sm:$0xff]
        %v641 = vld [vmem:[#allocation9 + $0x40] sm:$0xff]
        %v642 = vld [vmem:[#allocation9 + $0x48] sm:$0xff]
        %v643 = vld [vmem:[#allocation9 + $0x50] sm:$0x77]
        %v644 = vld [vmem:[#allocation9 + $0x58] sm:$0x77]
        %v657 = vunpack.c.l.b16 %v633
        %v658 = vunpack.c.h.b16 %v633
        %v659 = vunpack.c.l.b16 %v634
        %v660 = vunpack.c.h.b16 %v634
        %v661 = vunpack.c.l.b16 %v635
        %v662 = vunpack.c.h.b16 %v635
        %v663 = vunpack.c.l.b16 %v636
        %v664 = vunpack.c.h.b16 %v636
        %v665 = vunpack.c.l.b16 %v637
        %v666 = vunpack.c.h.b16 %v637
        %v667 = vunpack.c.l.b16 %v638
        %v668 = vunpack.c.h.b16 %v638
        %v669 = vunpack.c.l.b16 %v639
        %v670 = vunpack.c.h.b16 %v639
        %v671 = vunpack.c.l.b16 %v640
        %v672 = vunpack.c.h.b16 %v640
        %v673 = vunpack.c.l.b16 %v641
        %v674 = vunpack.c.h.b16 %v641
        %v675 = vunpack.c.l.b16 %v642
        %v676 = vunpack.c.h.b16 %v642
        %v677 = vunpack.c.l.b16 %v643
        %v678 = vunpack.c.h.b16 %v643
        %v679 = vunpack.c.l.b16 %v644
        %v680 = vunpack.c.h.b16 %v644
        %v681 = vpack.c.b16 %v661, %v657
        %v682 = vpack.c.b16 %v662, %v658
        %v683 = vpack.c.b16 %v663, %v659
        %v684 = vpack.c.b16 %v664, %v660
        %v685 = vpack.c.b16 %v669, %v665
        %v686 = vpack.c.b16 %v670, %v666
        %v687 = vpack.c.b16 %v671, %v667
        %v688 = vpack.c.b16 %v672, %v668
        %v689 = vpack.c.b16 %v677, %v673
        %v690 = vpack.c.b16 %v678, %v674
        %v691 = vpack.c.b16 %v679, %v675
        %v692 = vpack.c.b16 %v680, %v676
        %vm701 = vcmask 375808
        %v703 = vsel %vm701, 0, 0
        %vm705 = vcmask 1046528
        %v707 = vsel %vm705, %v689, 0
        %v710 = vsel %vm705, %v690, 0
        %v713 = vsel %vm705, %v691, 0
        %v716 = vsel %vm705, %v692, 0
        %718 = vmatprep.subr.bf16.mxu0 %v682
        %719 = vmatpush1.bf16.msra.mxu0 %v681
        %720 = vmatprep.subr.bf16.mxu0 %v686
        %721 = vmatpush1.bf16.msra.mxu0 %v685
        %722 = vmatprep.subr.bf16.mxu0 %v710
        %723 = vmatpush1.bf16.msra.mxu0 %v707
        %724 = vmatprep.subr.bf16.mxu0 0
        %725 = vmatpush1.bf16.msra.mxu0 0
        %726 = vmatprep.subr.bf16.mxu0 0
        %727 = vmatpush1.bf16.msra.mxu0 0
        %728 = vmatprep.subr.bf16.mxu0 0
        %729 = vmatpush1.bf16.msra.mxu0 0
        %730 = vmatprep.subr.bf16.mxu0 0
        %731 = vmatpush1.bf16.msra.mxu0 0
        %732 = vmatprep.subr.bf16.mxu0 0
        %733 = vmatpush1.bf16.msra.mxu0 0
        %734 = vmatprep.subr.bf16.mxu0 0
        %735 = vmatpush1.bf16.msra.mxu0 0
        %736 = vmatprep.subr.bf16.mxu0 0
        %737 = vmatpush1.bf16.msra.mxu0 0
        %738 = vmatprep.subr.bf16.mxu0 0
        %739 = vmatpush1.bf16.msra.mxu0 0
        %740 = vmatprep.subr.bf16.mxu0 0
        %741 = vmatpush1.bf16.msra.mxu0 0
        %742 = vmatprep.subr.bf16.mxu0 0
        %743 = vmatpush1.bf16.msra.mxu0 0
        %744 = vmatprep.subr.bf16.mxu0 0
        %745 = vmatpush1.bf16.msra.mxu0 0
        %746 = vmatprep.subr.bf16.mxu0 0
        %747 = vmatpush1.bf16.msra.mxu0 0
        %748 = vmatprep.subr.bf16.mxu0 0
        %749 = vmatpush1.bf16.msra.mxu0 0
        %750 = vmatprep.mubr.bf16.mxu0 0
        %751 = vmatmul.mubr.bf16.gmra.mrb[0].mxu0 %v703
        %v752 = vpop.f32.mrb[0].mxu0
        %v753 = vadd.f32 0.0, %v752
        %v754 = vpop.f32.mrb[0].mxu0
        %v755 = vadd.f32 0.0, %v754
        %v756 = vpop.f32.mrb[0].mxu0
        %v757 = vpop.f32.mrb[0].mxu0
        %758 = vdwg.mxu0
        %759 = vmatprep.subr.bf16.mxu0 %v684
        %760 = vmatpush1.bf16.msra.mxu0 %v683
        %761 = vmatprep.subr.bf16.mxu0 %v688
        %762 = vmatpush1.bf16.msra.mxu0 %v687
        %763 = vmatprep.subr.bf16.mxu0 %v716
        %764 = vmatpush1.bf16.msra.mxu0 %v713
        %765 = vmatprep.subr.bf16.mxu0 0
        %766 = vmatpush1.bf16.msra.mxu0 0
        %767 = vmatprep.subr.bf16.mxu0 0
        %768 = vmatpush1.bf16.msra.mxu0 0
        %769 = vmatprep.subr.bf16.mxu0 0
        %770 = vmatpush1.bf16.msra.mxu0 0
        %771 = vmatprep.subr.bf16.mxu0 0
        %772 = vmatpush1.bf16.msra.mxu0 0
        %773 = vmatprep.subr.bf16.mxu0 0
        %774 = vmatpush1.bf16.msra.mxu0 0
        %775 = vmatprep.subr.bf16.mxu0 0
        %776 = vmatpush1.bf16.msra.mxu0 0
        %777 = vmatprep.subr.bf16.mxu0 0
        %778 = vmatpush1.bf16.msra.mxu0 0
        %779 = vmatprep.subr.bf16.mxu0 0
        %780 = vmatpush1.bf16.msra.mxu0 0
        %781 = vmatprep.subr.bf16.mxu0 0
        %782 = vmatpush1.bf16.msra.mxu0 0
        %783 = vmatprep.subr.bf16.mxu0 0
        %784 = vmatpush1.bf16.msra.mxu0 0
        %785 = vmatprep.subr.bf16.mxu0 0
        %786 = vmatpush1.bf16.msra.mxu0 0
        %787 = vmatprep.subr.bf16.mxu0 0
        %788 = vmatpush1.bf16.msra.mxu0 0
        %789 = vmatprep.subr.bf16.mxu0 0
        %790 = vmatpush1.bf16.msra.mxu0 0
        %791 = vmatprep.mubr.bf16.mxu0 0
        %792 = vmatmul.mubr.bf16.gmra.mrb[0].mxu0 %v703
        %v793 = vpop.f32.mrb[0].mxu0
        %v794 = vadd.f32 0.0, %v793
        %v795 = vpop.f32.mrb[0].mxu0
        %v796 = vadd.f32 0.0, %v795
        %v797 = vpop.f32.mrb[0].mxu0
        %v798 = vpop.f32.mrb[0].mxu0
        %799 = vdwg.mxu0
        %v800 = vadd.f32 %v629, %v753
        %v801 = vadd.f32 %v630, %v755
        %v802 = vadd.f32 %v631, %v794
        %v803 = vadd.f32 %v632, %v796
        %v804 = vmul.f32 %v800, 0.5
        %v805 = vtanh.pop %v804
        %v806 = vmul.f32 %v805, 0.5
        %v807 = vadd.f32 %v806, 0.5
        %v808 = vmul.f32 %v801, 0.5
        %v809 = vtanh.pop %v808
        %v810 = vmul.f32 %v809, 0.5
        %v811 = vadd.f32 %v810, 0.5
        %v812 = vtanh.pop %v802
        %v813 = vmul.f32 %v803, 0.5
        %v814 = vtanh.pop %v813
        %v815 = vmul.f32 %v814, 0.5
        %v816 = vadd.f32 %v815, 0.5
        %v817 = vmul.f32 %v811, 0.0
        %v818 = vmul.f32 %v807, %v812
        %v819 = vadd.f32 %v817, %v818
        %v820 = vtanh.pop %v819
        %v821 = vmul.f32 %v816, %v820
        %822 = vst.msk [vmem:[#allocation3] sm:$0xff] %vm701, %v821
        %v823 = vld [vmem:[#allocation2 + $0x20] sm:$0xff]
        %v824 = vld [vmem:[#allocation2 + $0x28] sm:$0xff]
        %v825 = vld [vmem:[#allocation2 + $0x30] sm:$0xff]
        %v826 = vld [vmem:[#allocation2 + $0x38] sm:$0xff]
        %v827 = vpack.c.bf16 %v821, %v821
        %v828 = vld [vmem:[#allocation9] sm:$0xff]
        %v829 = vld [vmem:[#allocation9 + $0x8] sm:$0xff]
        %v830 = vld [vmem:[#allocation9 + $0x10] sm:$0xff]
        %v831 = vld [vmem:[#allocation9 + $0x18] sm:$0xff]
        %v832 = vld [vmem:[#allocation9 + $0x20] sm:$0xff]
        %v833 = vld [vmem:[#allocation9 + $0x28] sm:$0xff]
        %v834 = vld [vmem:[#allocation9 + $0x30] sm:$0xff]
        %v835 = vld [vmem:[#allocation9 + $0x38] sm:$0xff]
        %v836 = vld [vmem:[#allocation9 + $0x40] sm:$0xff]
        %v837 = vld [vmem:[#allocation9 + $0x48] sm:$0xff]
        %v838 = vld [vmem:[#allocation9 + $0x50] sm:$0x77]
        %v839 = vld [vmem:[#allocation9 + $0x58] sm:$0x77]
        %v852 = vunpack.c.l.b16 %v828
        %v853 = vunpack.c.h.b16 %v828
        %v854 = vunpack.c.l.b16 %v829
        %v855 = vunpack.c.h.b16 %v829
        %v856 = vunpack.c.l.b16 %v830
        %v857 = vunpack.c.h.b16 %v830
        %v858 = vunpack.c.l.b16 %v831
        %v859 = vunpack.c.h.b16 %v831
        %v860 = vunpack.c.l.b16 %v832
        %v861 = vunpack.c.h.b16 %v832
        %v862 = vunpack.c.l.b16 %v833
        %v863 = vunpack.c.h.b16 %v833
        %v864 = vunpack.c.l.b16 %v834
        %v865 = vunpack.c.h.b16 %v834
        %v866 = vunpack.c.l.b16 %v835
        %v867 = vunpack.c.h.b16 %v835
        %v868 = vunpack.c.l.b16 %v836
        %v869 = vunpack.c.h.b16 %v836
        %v870 = vunpack.c.l.b16 %v837
        %v871 = vunpack.c.h.b16 %v837
        %v872 = vunpack.c.l.b16 %v838
        %v873 = vunpack.c.h.b16 %v838
        %v874 = vunpack.c.l.b16 %v839
        %v875 = vunpack.c.h.b16 %v839
        %v876 = vpack.c.b16 %v856, %v852
        %v877 = vpack.c.b16 %v857, %v853
        %v878 = vpack.c.b16 %v858, %v854
        %v879 = vpack.c.b16 %v859, %v855
        %v880 = vpack.c.b16 %v864, %v860
        %v881 = vpack.c.b16 %v865, %v861
        %v882 = vpack.c.b16 %v866, %v862
        %v883 = vpack.c.b16 %v867, %v863
        %v884 = vpack.c.b16 %v872, %v868
        %v885 = vpack.c.b16 %v873, %v869
        %v886 = vpack.c.b16 %v874, %v870
        %v887 = vpack.c.b16 %v875, %v871
        %v897 = vsel %vm701, %v827, 0
        %v900 = vsel %vm705, %v884, 0
        %v903 = vsel %vm705, %v885, 0
        %v906 = vsel %vm705, %v886, 0
        %v909 = vsel %vm705, %v887, 0
        %911 = vmatprep.subr.bf16.mxu0 %v877
        %912 = vmatpush1.bf16.msra.mxu0 %v876
        %913 = vmatprep.subr.bf16.mxu0 %v881
        %914 = vmatpush1.bf16.msra.mxu0 %v880
        %915 = vmatprep.subr.bf16.mxu0 %v903
        %916 = vmatpush1.bf16.msra.mxu0 %v900
        %917 = vmatprep.subr.bf16.mxu0 0
        %918 = vmatpush1.bf16.msra.mxu0 0
        %919 = vmatprep.subr.bf16.mxu0 0
        %920 = vmatpush1.bf16.msra.mxu0 0
        %921 = vmatprep.subr.bf16.mxu0 0
        %922 = vmatpush1.bf16.msra.mxu0 0
        %923 = vmatprep.subr.bf16.mxu0 0
        %924 = vmatpush1.bf16.msra.mxu0 0
        %925 = vmatprep.subr.bf16.mxu0 0
        %926 = vmatpush1.bf16.msra.mxu0 0
        %927 = vmatprep.subr.bf16.mxu0 0
        %928 = vmatpush1.bf16.msra.mxu0 0
        %929 = vmatprep.subr.bf16.mxu0 0
        %930 = vmatpush1.bf16.msra.mxu0 0
        %931 = vmatprep.subr.bf16.mxu0 0
        %932 = vmatpush1.bf16.msra.mxu0 0
        %933 = vmatprep.subr.bf16.mxu0 0
        %934 = vmatpush1.bf16.msra.mxu0 0
        %935 = vmatprep.subr.bf16.mxu0 0
        %936 = vmatpush1.bf16.msra.mxu0 0
        %937 = vmatprep.subr.bf16.mxu0 0
        %938 = vmatpush1.bf16.msra.mxu0 0
        %939 = vmatprep.subr.bf16.mxu0 0
        %940 = vmatpush1.bf16.msra.mxu0 0
        %941 = vmatprep.subr.bf16.mxu0 0
        %942 = vmatpush1.bf16.msra.mxu0 0
        %943 = vmatprep.mubr.bf16.mxu0 0
        %944 = vmatmul.mubr.bf16.gmra.mrb[0].mxu0 %v897
        %v945 = vpop.f32.mrb[0].mxu0
        %v946 = vadd.f32 0.0, %v945
        %v947 = vpop.f32.mrb[0].mxu0
        %v948 = vadd.f32 0.0, %v947
        %v949 = vpop.f32.mrb[0].mxu0
        %v950 = vpop.f32.mrb[0].mxu0
        %951 = vdwg.mxu0
        %952 = vmatprep.subr.bf16.mxu0 %v879
        %953 = vmatpush1.bf16.msra.mxu0 %v878
        %954 = vmatprep.subr.bf16.mxu0 %v883
        %955 = vmatpush1.bf16.msra.mxu0 %v882
        %956 = vmatprep.subr.bf16.mxu0 %v909
        %957 = vmatpush1.bf16.msra.mxu0 %v906
        %958 = vmatprep.subr.bf16.mxu0 0
        %959 = vmatpush1.bf16.msra.mxu0 0
        %960 = vmatprep.subr.bf16.mxu0 0
        %961 = vmatpush1.bf16.msra.mxu0 0
        %962 = vmatprep.subr.bf16.mxu0 0
        %963 = vmatpush1.bf16.msra.mxu0 0
        %964 = vmatprep.subr.bf16.mxu0 0
        %965 = vmatpush1.bf16.msra.mxu0 0
        %966 = vmatprep.subr.bf16.mxu0 0
        %967 = vmatpush1.bf16.msra.mxu0 0
        %968 = vmatprep.subr.bf16.mxu0 0
        %969 = vmatpush1.bf16.msra.mxu0 0
        %970 = vmatprep.subr.bf16.mxu0 0
        %971 = vmatpush1.bf16.msra.mxu0 0
        %972 = vmatprep.subr.bf16.mxu0 0
        %973 = vmatpush1.bf16.msra.mxu0 0
        %974 = vmatprep.subr.bf16.mxu0 0
        %975 = vmatpush1.bf16.msra.mxu0 0
        %976 = vmatprep.subr.bf16.mxu0 0
        %977 = vmatpush1.bf16.msra.mxu0 0
        %978 = vmatprep.subr.bf16.mxu0 0
        %979 = vmatpush1.bf16.msra.mxu0 0
        %980 = vmatprep.subr.bf16.mxu0 0
        %981 = vmatpush1.bf16.msra.mxu0 0
        %982 = vmatprep.subr.bf16.mxu0 0
        %983 = vmatpush1.bf16.msra.mxu0 0
        %984 = vmatprep.mubr.bf16.mxu0 0
        %985 = vmatmul.mubr.bf16.gmra.mrb[0].mxu0 %v897
        %v986 = vpop.f32.mrb[0].mxu0
        %v987 = vadd.f32 0.0, %v986
        %v988 = vpop.f32.mrb[0].mxu0
        %v989 = vadd.f32 0.0, %v988
        %v990 = vpop.f32.mrb[0].mxu0
        %v991 = vpop.f32.mrb[0].mxu0
        %992 = vdwg.mxu0
        %v993 = vadd.f32 %v823, %v946
        %v994 = vadd.f32 %v824, %v948
        %v995 = vadd.f32 %v825, %v987
        %v996 = vadd.f32 %v826, %v989
        %v997 = vmul.f32 %v993, 0.5
        %v998 = vtanh.pop %v997
        %v999 = vmul.f32 %v998, 0.5
        %v1000 = vadd.f32 %v999, 0.5
        %v1001 = vmul.f32 %v994, 0.5
        %v1002 = vtanh.pop %v1001
        %v1003 = vmul.f32 %v1002, 0.5
        %v1004 = vadd.f32 %v1003, 0.5
        %v1005 = vtanh.pop %v995
        %v1006 = vmul.f32 %v996, 0.5
        %v1007 = vtanh.pop %v1006
        %v1008 = vmul.f32 %v1007, 0.5
        %v1009 = vadd.f32 %v1008, 0.5
        %v1010 = vmul.f32 %v1004, %v819
        %v1011 = vmul.f32 %v1000, %v1005
        %v1012 = vadd.f32 %v1010, %v1011
        %v1013 = vtanh.pop %v1012
        %v1014 = vmul.f32 %v1009, %v1013
        %s1015 = scalar_lea.vmem [#allocation3], 8
        %1016 = vst.msk [vmem:[%s1015] sm:$0xff] %vm701, %v1014
        %v1017 = vld [vmem:[#allocation2 + $0x40] sm:$0xff]
        %v1018 = vld [vmem:[#allocation2 + $0x48] sm:$0xff]
        %v1019 = vld [vmem:[#allocation2 + $0x50] sm:$0xff]
        %v1020 = vld [vmem:[#allocation2 + $0x58] sm:$0xff]
        %v1021 = vpack.c.bf16 %v1014, %v1014
        %v1022 = vld [vmem:[#allocation9] sm:$0xff]
        %v1023 = vld [vmem:[#allocation9 + $0x8] sm:$0xff]
        %v1024 = vld [vmem:[#allocation9 + $0x10] sm:$0xff]
        %v1025 = vld [vmem:[#allocation9 + $0x18] sm:$0xff]
        %v1026 = vld [vmem:[#allocation9 + $0x20] sm:$0xff]
        %v1027 = vld [vmem:[#allocation9 + $0x28] sm:$0xff]
        %v1028 = vld [vmem:[#allocation9 + $0x30] sm:$0xff]
        %v1029 = vld [vmem:[#allocation9 + $0x38] sm:$0xff]
        %v1030 = vld [vmem:[#allocation9 + $0x40] sm:$0xff]
        %v1031 = vld [vmem:[#allocation9 + $0x48] sm:$0xff]
        %v1032 = vld [vmem:[#allocation9 + $0x50] sm:$0x77]
        %v1033 = vld [vmem:[#allocation9 + $0x58] sm:$0x77]
        %v1046 = vunpack.c.l.b16 %v1022
        %v1047 = vunpack.c.h.b16 %v1022
        %v1048 = vunpack.c.l.b16 %v1023
        %v1049 = vunpack.c.h.b16 %v1023
        %v1050 = vunpack.c.l.b16 %v1024
        %v1051 = vunpack.c.h.b16 %v1024
        %v1052 = vunpack.c.l.b16 %v1025
        %v1053 = vunpack.c.h.b16 %v1025
        %v1054 = vunpack.c.l.b16 %v1026
        %v1055 = vunpack.c.h.b16 %v1026
        %v1056 = vunpack.c.l.b16 %v1027
        %v1057 = vunpack.c.h.b16 %v1027
        %v1058 = vunpack.c.l.b16 %v1028
        %v1059 = vunpack.c.h.b16 %v1028
        %v1060 = vunpack.c.l.b16 %v1029
        %v1061 = vunpack.c.h.b16 %v1029
        %v1062 = vunpack.c.l.b16 %v1030
        %v1063 = vunpack.c.h.b16 %v1030
        %v1064 = vunpack.c.l.b16 %v1031
        %v1065 = vunpack.c.h.b16 %v1031
        %v1066 = vunpack.c.l.b16 %v1032
        %v1067 = vunpack.c.h.b16 %v1032
        %v1068 = vunpack.c.l.b16 %v1033
        %v1069 = vunpack.c.h.b16 %v1033
        %v1070 = vpack.c.b16 %v1050, %v1046
        %v1071 = vpack.c.b16 %v1051, %v1047
        %v1072 = vpack.c.b16 %v1052, %v1048
        %v1073 = vpack.c.b16 %v1053, %v1049
        %v1074 = vpack.c.b16 %v1058, %v1054
        %v1075 = vpack.c.b16 %v1059, %v1055
        %v1076 = vpack.c.b16 %v1060, %v1056
        %v1077 = vpack.c.b16 %v1061, %v1057
        %v1078 = vpack.c.b16 %v1066, %v1062
        %v1079 = vpack.c.b16 %v1067, %v1063
        %v1080 = vpack.c.b16 %v1068, %v1064
        %v1081 = vpack.c.b16 %v1069, %v1065
        %v1091 = vsel %vm701, %v1021, 0
        %v1094 = vsel %vm705, %v1078, 0
        %v1097 = vsel %vm705, %v1079, 0
        %v1100 = vsel %vm705, %v1080, 0
        %v1103 = vsel %vm705, %v1081, 0
        %1105 = vmatprep.subr.bf16.mxu0 %v1071
        %1106 = vmatpush1.bf16.msra.mxu0 %v1070
        %1107 = vmatprep.subr.bf16.mxu0 %v1075
        %1108 = vmatpush1.bf16.msra.mxu0 %v1074
        %1109 = vmatprep.subr.bf16.mxu0 %v1097
        %1110 = vmatpush1.bf16.msra.mxu0 %v1094
        %1111 = vmatprep.subr.bf16.mxu0 0
        %1112 = vmatpush1.bf16.msra.mxu0 0
        %1113 = vmatprep.subr.bf16.mxu0 0
        %1114 = vmatpush1.bf16.msra.mxu0 0
        %1115 = vmatprep.subr.bf16.mxu0 0
        %1116 = vmatpush1.bf16.msra.mxu0 0
        %1117 = vmatprep.subr.bf16.mxu0 0
        %1118 = vmatpush1.bf16.msra.mxu0 0
        %1119 = vmatprep.subr.bf16.mxu0 0
        %1120 = vmatpush1.bf16.msra.mxu0 0
        %1121 = vmatprep.subr.bf16.mxu0 0
        %1122 = vmatpush1.bf16.msra.mxu0 0
        %1123 = vmatprep.subr.bf16.mxu0 0
        %1124 = vmatpush1.bf16.msra.mxu0 0
        %1125 = vmatprep.subr.bf16.mxu0 0
        %1126 = vmatpush1.bf16.msra.mxu0 0
        %1127 = vmatprep.subr.bf16.mxu0 0
        %1128 = vmatpush1.bf16.msra.mxu0 0
        %1129 = vmatprep.subr.bf16.mxu0 0
        %1130 = vmatpush1.bf16.msra.mxu0 0
        %1131 = vmatprep.subr.bf16.mxu0 0
        %1132 = vmatpush1.bf16.msra.mxu0 0
        %1133 = vmatprep.subr.bf16.mxu0 0
        %1134 = vmatpush1.bf16.msra.mxu0 0
        %1135 = vmatprep.subr.bf16.mxu0 0
        %1136 = vmatpush1.bf16.msra.mxu0 0
        %1137 = vmatprep.mubr.bf16.mxu0 0
        %1138 = vmatmul.mubr.bf16.gmra.mrb[0].mxu0 %v1091
        %v1139 = vpop.f32.mrb[0].mxu0
        %v1140 = vadd.f32 0.0, %v1139
        %v1141 = vpop.f32.mrb[0].mxu0
        %v1142 = vadd.f32 0.0, %v1141
        %v1143 = vpop.f32.mrb[0].mxu0
        %v1144 = vpop.f32.mrb[0].mxu0
        %1145 = vdwg.mxu0
        %1146 = vmatprep.subr.bf16.mxu0 %v1073
        %1147 = vmatpush1.bf16.msra.mxu0 %v1072
        %1148 = vmatprep.subr.bf16.mxu0 %v1077
        %1149 = vmatpush1.bf16.msra.mxu0 %v1076
        %1150 = vmatprep.subr.bf16.mxu0 %v1103
        %1151 = vmatpush1.bf16.msra.mxu0 %v1100
        %1152 = vmatprep.subr.bf16.mxu0 0
        %1153 = vmatpush1.bf16.msra.mxu0 0
        %1154 = vmatprep.subr.bf16.mxu0 0
        %1155 = vmatpush1.bf16.msra.mxu0 0
        %1156 = vmatprep.subr.bf16.mxu0 0
        %1157 = vmatpush1.bf16.msra.mxu0 0
        %1158 = vmatprep.subr.bf16.mxu0 0
        %1159 = vmatpush1.bf16.msra.mxu0 0
        %1160 = vmatprep.subr.bf16.mxu0 0
        %1161 = vmatpush1.bf16.msra.mxu0 0
        %1162 = vmatprep.subr.bf16.mxu0 0
        %1163 = vmatpush1.bf16.msra.mxu0 0
        %1164 = vmatprep.subr.bf16.mxu0 0
        %1165 = vmatpush1.bf16.msra.mxu0 0
        %1166 = vmatprep.subr.bf16.mxu0 0
        %1167 = vmatpush1.bf16.msra.mxu0 0
        %1168 = vmatprep.subr.bf16.mxu0 0
        %1169 = vmatpush1.bf16.msra.mxu0 0
        %1170 = vmatprep.subr.bf16.mxu0 0
        %1171 = vmatpush1.bf16.msra.mxu0 0
        %1172 = vmatprep.subr.bf16.mxu0 0
        %1173 = vmatpush1.bf16.msra.mxu0 0
        %1174 = vmatprep.subr.bf16.mxu0 0
        %1175 = vmatpush1.bf16.msra.mxu0 0
        %1176 = vmatprep.subr.bf16.mxu0 0
        %1177 = vmatpush1.bf16.msra.mxu0 0
        %1178 = vmatprep.mubr.bf16.mxu0 0
        %1179 = vmatmul.mubr.bf16.gmra.mrb[0].mxu0 %v1091
        %v1180 = vpop.f32.mrb[0].mxu0
        %v1181 = vadd.f32 0.0, %v1180
        %v1182 = vpop.f32.mrb[0].mxu0
        %v1183 = vadd.f32 0.0, %v1182
        %v1184 = vpop.f32.mrb[0].mxu0
        %v1185 = vpop.f32.mrb[0].mxu0
        %1186 = vdwg.mxu0
        %v1187 = vadd.f32 %v1017, %v1140
        %v1188 = vadd.f32 %v1018, %v1142
        %v1189 = vadd.f32 %v1019, %v1181
        %v1190 = vadd.f32 %v1020, %v1183
        %v1191 = vmul.f32 %v1187, 0.5
        %v1192 = vtanh.pop %v1191
        %v1193 = vmul.f32 %v1192, 0.5
        %v1194 = vadd.f32 %v1193, 0.5
        %v1195 = vmul.f32 %v1188, 0.5
        %v1196 = vtanh.pop %v1195
        %v1197 = vmul.f32 %v1196, 0.5
        %v1198 = vadd.f32 %v1197, 0.5
        %v1199 = vtanh.pop %v1189
        %v1200 = vmul.f32 %v1190, 0.5
        %v1201 = vtanh.pop %v1200
        %v1202 = vmul.f32 %v1201, 0.5
        %v1203 = vadd.f32 %v1202, 0.5
        %v1204 = vmul.f32 %v1198, %v1012
        %v1205 = vmul.f32 %v1194, %v1199
        %v1206 = vadd.f32 %v1204, %v1205
        %v1207 = vtanh.pop %v1206
        %v1208 = vmul.f32 %v1203, %v1207
        %s1209 = scalar_lea.vmem [#allocation3], 16
        %1210 = vst.msk [vmem:[%s1209] sm:$0xff] %vm701, %v1208
        %v1211 = vld [vmem:[#allocation2 + $0x60] sm:$0xff]
        %v1212 = vld [vmem:[#allocation2 + $0x68] sm:$0xff]
        %v1213 = vld [vmem:[#allocation2 + $0x70] sm:$0xff]
        %v1214 = vld [vmem:[#allocation2 + $0x78] sm:$0xff]
        %v1215 = vpack.c.bf16 %v1208, %v1208
        %v1216 = vld [vmem:[#allocation9] sm:$0xff]
        %v1217 = vld [vmem:[#allocation9 + $0x8] sm:$0xff]
        %v1218 = vld [vmem:[#allocation9 + $0x10] sm:$0xff]
        %v1219 = vld [vmem:[#allocation9 + $0x18] sm:$0xff]
        %v1220 = vld [vmem:[#allocation9 + $0x20] sm:$0xff]
        %v1221 = vld [vmem:[#allocation9 + $0x28] sm:$0xff]
        %v1222 = vld [vmem:[#allocation9 + $0x30] sm:$0xff]
        %v1223 = vld [vmem:[#allocation9 + $0x38] sm:$0xff]
        %v1224 = vld [vmem:[#allocation9 + $0x40] sm:$0xff]
        %v1225 = vld [vmem:[#allocation9 + $0x48] sm:$0xff]
        %v1226 = vld [vmem:[#allocation9 + $0x50] sm:$0x77]
        %v1227 = vld [vmem:[#allocation9 + $0x58] sm:$0x77]
        %v1240 = vunpack.c.l.b16 %v1216
        %v1241 = vunpack.c.h.b16 %v1216
        %v1242 = vunpack.c.l.b16 %v1217
        %v1243 = vunpack.c.h.b16 %v1217
        %v1244 = vunpack.c.l.b16 %v1218
        %v1245 = vunpack.c.h.b16 %v1218
        %v1246 = vunpack.c.l.b16 %v1219
        %v1247 = vunpack.c.h.b16 %v1219
        %v1248 = vunpack.c.l.b16 %v1220
        %v1249 = vunpack.c.h.b16 %v1220
        %v1250 = vunpack.c.l.b16 %v1221
        %v1251 = vunpack.c.h.b16 %v1221
        %v1252 = vunpack.c.l.b16 %v1222
        %v1253 = vunpack.c.h.b16 %v1222
        %v1254 = vunpack.c.l.b16 %v1223
        %v1255 = vunpack.c.h.b16 %v1223
        %v1256 = vunpack.c.l.b16 %v1224
        %v1257 = vunpack.c.h.b16 %v1224
        %v1258 = vunpack.c.l.b16 %v1225
        %v1259 = vunpack.c.h.b16 %v1225
        %v1260 = vunpack.c.l.b16 %v1226
        %v1261 = vunpack.c.h.b16 %v1226
        %v1262 = vunpack.c.l.b16 %v1227
        %v1263 = vunpack.c.h.b16 %v1227
        %v1264 = vpack.c.b16 %v1244, %v1240
        %v1265 = vpack.c.b16 %v1245, %v1241
        %v1266 = vpack.c.b16 %v1246, %v1242
        %v1267 = vpack.c.b16 %v1247, %v1243
        %v1268 = vpack.c.b16 %v1252, %v1248
        %v1269 = vpack.c.b16 %v1253, %v1249
        %v1270 = vpack.c.b16 %v1254, %v1250
        %v1271 = vpack.c.b16 %v1255, %v1251
        %v1272 = vpack.c.b16 %v1260, %v1256
        %v1273 = vpack.c.b16 %v1261, %v1257
        %v1274 = vpack.c.b16 %v1262, %v1258
        %v1275 = vpack.c.b16 %v1263, %v1259
        %v1285 = vsel %vm701, %v1215, 0
        %v1288 = vsel %vm705, %v1272, 0
        %v1291 = vsel %vm705, %v1273, 0
        %v1294 = vsel %vm705, %v1274, 0
        %v1297 = vsel %vm705, %v1275, 0
        %1299 = vmatprep.subr.bf16.mxu0 %v1265
        %1300 = vmatpush1.bf16.msra.mxu0 %v1264
        %1301 = vmatprep.subr.bf16.mxu0 %v1269
        %1302 = vmatpush1.bf16.msra.mxu0 %v1268
        %1303 = vmatprep.subr.bf16.mxu0 %v1291
        %1304 = vmatpush1.bf16.msra.mxu0 %v1288
        %1305 = vmatprep.subr.bf16.mxu0 0
        %1306 = vmatpush1.bf16.msra.mxu0 0
        %1307 = vmatprep.subr.bf16.mxu0 0
        %1308 = vmatpush1.bf16.msra.mxu0 0
        %1309 = vmatprep.subr.bf16.mxu0 0
        %1310 = vmatpush1.bf16.msra.mxu0 0
        %1311 = vmatprep.subr.bf16.mxu0 0
        %1312 = vmatpush1.bf16.msra.mxu0 0
        %1313 = vmatprep.subr.bf16.mxu0 0
        %1314 = vmatpush1.bf16.msra.mxu0 0
        %1315 = vmatprep.subr.bf16.mxu0 0
        %1316 = vmatpush1.bf16.msra.mxu0 0
        %1317 = vmatprep.subr.bf16.mxu0 0
        %1318 = vmatpush1.bf16.msra.mxu0 0
        %1319 = vmatprep.subr.bf16.mxu0 0
        %1320 = vmatpush1.bf16.msra.mxu0 0
        %1321 = vmatprep.subr.bf16.mxu0 0
        %1322 = vmatpush1.bf16.msra.mxu0 0
        %1323 = vmatprep.subr.bf16.mxu0 0
        %1324 = vmatpush1.bf16.msra.mxu0 0
        %1325 = vmatprep.subr.bf16.mxu0 0
        %1326 = vmatpush1.bf16.msra.mxu0 0
        %1327 = vmatprep.subr.bf16.mxu0 0
        %1328 = vmatpush1.bf16.msra.mxu0 0
        %1329 = vmatprep.subr.bf16.mxu0 0
        %1330 = vmatpush1.bf16.msra.mxu0 0
        %1331 = vmatprep.mubr.bf16.mxu0 0
        %1332 = vmatmul.mubr.bf16.gmra.mrb[0].mxu0 %v1285
        %v1333 = vpop.f32.mrb[0].mxu0
        %v1334 = vadd.f32 0.0, %v1333
        %v1335 = vpop.f32.mrb[0].mxu0
        %v1336 = vadd.f32 0.0, %v1335
        %v1337 = vpop.f32.mrb[0].mxu0
        %v1338 = vpop.f32.mrb[0].mxu0
        %1339 = vdwg.mxu0
        %1340 = vmatprep.subr.bf16.mxu0 %v1267
        %1341 = vmatpush1.bf16.msra.mxu0 %v1266
        %1342 = vmatprep.subr.bf16.mxu0 %v1271
        %1343 = vmatpush1.bf16.msra.mxu0 %v1270
        %1344 = vmatprep.subr.bf16.mxu0 %v1297
        %1345 = vmatpush1.bf16.msra.mxu0 %v1294
        %1346 = vmatprep.subr.bf16.mxu0 0
        %1347 = vmatpush1.bf16.msra.mxu0 0
        %1348 = vmatprep.subr.bf16.mxu0 0
        %1349 = vmatpush1.bf16.msra.mxu0 0
        %1350 = vmatprep.subr.bf16.mxu0 0
        %1351 = vmatpush1.bf16.msra.mxu0 0
        %1352 = vmatprep.subr.bf16.mxu0 0
        %1353 = vmatpush1.bf16.msra.mxu0 0
        %1354 = vmatprep.subr.bf16.mxu0 0
        %1355 = vmatpush1.bf16.msra.mxu0 0
        %1356 = vmatprep.subr.bf16.mxu0 0
        %1357 = vmatpush1.bf16.msra.mxu0 0
        %1358 = vmatprep.subr.bf16.mxu0 0
        %1359 = vmatpush1.bf16.msra.mxu0 0
        %1360 = vmatprep.subr.bf16.mxu0 0
        %1361 = vmatpush1.bf16.msra.mxu0 0
        %1362 = vmatprep.subr.bf16.mxu0 0
        %1363 = vmatpush1.bf16.msra.mxu0 0
        %1364 = vmatprep.subr.bf16.mxu0 0
        %1365 = vmatpush1.bf16.msra.mxu0 0
        %1366 = vmatprep.subr.bf16.mxu0 0
        %1367 = vmatpush1.bf16.msra.mxu0 0
        %1368 = vmatprep.subr.bf16.mxu0 0
        %1369 = vmatpush1.bf16.msra.mxu0 0
        %1370 = vmatprep.subr.bf16.mxu0 0
        %1371 = vmatpush1.bf16.msra.mxu0 0
        %1372 = vmatprep.mubr.bf16.mxu0 0
        %1373 = vmatmul.mubr.bf16.gmra.mrb[0].mxu0 %v1285
        %v1374 = vpop.f32.mrb[0].mxu0
        %v1375 = vadd.f32 0.0, %v1374
        %v1376 = vpop.f32.mrb[0].mxu0
        %v1377 = vadd.f32 0.0, %v1376
        %v1378 = vpop.f32.mrb[0].mxu0
        %v1379 = vpop.f32.mrb[0].mxu0
        %1380 = vdwg.mxu0
        %v1381 = vadd.f32 %v1211, %v1334
        %v1382 = vadd.f32 %v1212, %v1336
        %v1383 = vadd.f32 %v1213, %v1375
        %v1384 = vadd.f32 %v1214, %v1377
        %v1385 = vmul.f32 %v1381, 0.5
        %v1386 = vtanh.pop %v1385
        %v1387 = vmul.f32 %v1386, 0.5
        %v1388 = vadd.f32 %v1387, 0.5
        %v1389 = vmul.f32 %v1382, 0.5
        %v1390 = vtanh.pop %v1389
        %v1391 = vmul.f32 %v1390, 0.5
        %v1392 = vadd.f32 %v1391, 0.5
        %v1393 = vtanh.pop %v1383
        %v1394 = vmul.f32 %v1384, 0.5
        %v1395 = vtanh.pop %v1394
        %v1396 = vmul.f32 %v1395, 0.5
        %v1397 = vadd.f32 %v1396, 0.5
        %v1398 = vmul.f32 %v1392, %v1206
        %v1399 = vmul.f32 %v1388, %v1393
        %v1400 = vadd.f32 %v1398, %v1399
        %v1401 = vtanh.pop %v1400
        %v1402 = vmul.f32 %v1397, %v1401
        %s1403 = scalar_lea.vmem [#allocation3], 24
        %1404 = vst.msk [vmem:[%s1403] sm:$0xff] %vm701, %v1402
        %v1405 = vld [vmem:[#allocation2 + $0x80] sm:$0xff]
        %v1406 = vld [vmem:[#allocation2 + $0x88] sm:$0xff]
        %v1407 = vld [vmem:[#allocation2 + $0x90] sm:$0xff]
        %v1408 = vld [vmem:[#allocation2 + $0x98] sm:$0xff]
        %v1409 = vpack.c.bf16 %v1402, %v1402
        %v1410 = vld [vmem:[#allocation9] sm:$0xff]
        %v1411 = vld [vmem:[#allocation9 + $0x8] sm:$0xff]
        %v1412 = vld [vmem:[#allocation9 + $0x10] sm:$0xff]
        %v1413 = vld [vmem:[#allocation9 + $0x18] sm:$0xff]
        %v1414 = vld [vmem:[#allocation9 + $0x20] sm:$0xff]
        %v1415 = vld [vmem:[#allocation9 + $0x28] sm:$0xff]
        %v1416 = vld [vmem:[#allocation9 + $0x30] sm:$0xff]
        %v1417 = vld [vmem:[#allocation9 + $0x38] sm:$0xff]
        %v1418 = vld [vmem:[#allocation9 + $0x40] sm:$0xff]
        %v1419 = vld [vmem:[#allocation9 + $0x48] sm:$0xff]
        %v1420 = vld [vmem:[#allocation9 + $0x50] sm:$0x77]
        %v1421 = vld [vmem:[#allocation9 + $0x58] sm:$0x77]
        %v1434 = vunpack.c.l.b16 %v1410
        %v1435 = vunpack.c.h.b16 %v1410
        %v1436 = vunpack.c.l.b16 %v1411
        %v1437 = vunpack.c.h.b16 %v1411
        %v1438 = vunpack.c.l.b16 %v1412
        %v1439 = vunpack.c.h.b16 %v1412
        %v1440 = vunpack.c.l.b16 %v1413
        %v1441 = vunpack.c.h.b16 %v1413
        %v1442 = vunpack.c.l.b16 %v1414
        %v1443 = vunpack.c.h.b16 %v1414
        %v1444 = vunpack.c.l.b16 %v1415
        %v1445 = vunpack.c.h.b16 %v1415
        %v1446 = vunpack.c.l.b16 %v1416
        %v1447 = vunpack.c.h.b16 %v1416
        %v1448 = vunpack.c.l.b16 %v1417
        %v1449 = vunpack.c.h.b16 %v1417
        %v1450 = vunpack.c.l.b16 %v1418
        %v1451 = vunpack.c.h.b16 %v1418
        %v1452 = vunpack.c.l.b16 %v1419
        %v1453 = vunpack.c.h.b16 %v1419
        %v1454 = vunpack.c.l.b16 %v1420
        %v1455 = vunpack.c.h.b16 %v1420
        %v1456 = vunpack.c.l.b16 %v1421
        %v1457 = vunpack.c.h.b16 %v1421
        %v1458 = vpack.c.b16 %v1438, %v1434
        %v1459 = vpack.c.b16 %v1439, %v1435
        %v1460 = vpack.c.b16 %v1440, %v1436
        %v1461 = vpack.c.b16 %v1441, %v1437
        %v1462 = vpack.c.b16 %v1446, %v1442
        %v1463 = vpack.c.b16 %v1447, %v1443
        %v1464 = vpack.c.b16 %v1448, %v1444
        %v1465 = vpack.c.b16 %v1449, %v1445
        %v1466 = vpack.c.b16 %v1454, %v1450
        %v1467 = vpack.c.b16 %v1455, %v1451
        %v1468 = vpack.c.b16 %v1456, %v1452
        %v1469 = vpack.c.b16 %v1457, %v1453
        %v1479 = vsel %vm701, %v1409, 0
        %v1482 = vsel %vm705, %v1466, 0
        %v1485 = vsel %vm705, %v1467, 0
        %v1488 = vsel %vm705, %v1468, 0
        %v1491 = vsel %vm705, %v1469, 0
        %1493 = vmatprep.subr.bf16.mxu0 %v1459
        %1494 = vmatpush1.bf16.msra.mxu0 %v1458
        %1495 = vmatprep.subr.bf16.mxu0 %v1463
        %1496 = vmatpush1.bf16.msra.mxu0 %v1462
        %1497 = vmatprep.subr.bf16.mxu0 %v1485
        %1498 = vmatpush1.bf16.msra.mxu0 %v1482
        %1499 = vmatprep.subr.bf16.mxu0 0
        %1500 = vmatpush1.bf16.msra.mxu0 0
        %1501 = vmatprep.subr.bf16.mxu0 0
        %1502 = vmatpush1.bf16.msra.mxu0 0
        %1503 = vmatprep.subr.bf16.mxu0 0
        %1504 = vmatpush1.bf16.msra.mxu0 0
        %1505 = vmatprep.subr.bf16.mxu0 0
        %1506 = vmatpush1.bf16.msra.mxu0 0
        %1507 = vmatprep.subr.bf16.mxu0 0
        %1508 = vmatpush1.bf16.msra.mxu0 0
        %1509 = vmatprep.subr.bf16.mxu0 0
        %1510 = vmatpush1.bf16.msra.mxu0 0
        %1511 = vmatprep.subr.bf16.mxu0 0
        %1512 = vmatpush1.bf16.msra.mxu0 0
        %1513 = vmatprep.subr.bf16.mxu0 0
        %1514 = vmatpush1.bf16.msra.mxu0 0
        %1515 = vmatprep.subr.bf16.mxu0 0
        %1516 = vmatpush1.bf16.msra.mxu0 0
        %1517 = vmatprep.subr.bf16.mxu0 0
        %1518 = vmatpush1.bf16.msra.mxu0 0
        %1519 = vmatprep.subr.bf16.mxu0 0
        %1520 = vmatpush1.bf16.msra.mxu0 0
        %1521 = vmatprep.subr.bf16.mxu0 0
        %1522 = vmatpush1.bf16.msra.mxu0 0
        %1523 = vmatprep.subr.bf16.mxu0 0
        %1524 = vmatpush1.bf16.msra.mxu0 0
        %1525 = vmatprep.mubr.bf16.mxu0 0
        %1526 = vmatmul.mubr.bf16.gmra.mrb[0].mxu0 %v1479
        %v1527 = vpop.f32.mrb[0].mxu0
        %v1528 = vadd.f32 0.0, %v1527
        %v1529 = vpop.f32.mrb[0].mxu0
        %v1530 = vadd.f32 0.0, %v1529
        %v1531 = vpop.f32.mrb[0].mxu0
        %v1532 = vpop.f32.mrb[0].mxu0
        %1533 = vdwg.mxu0
        %1534 = vmatprep.subr.bf16.mxu0 %v1461
        %1535 = vmatpush1.bf16.msra.mxu0 %v1460
        %1536 = vmatprep.subr.bf16.mxu0 %v1465
        %1537 = vmatpush1.bf16.msra.mxu0 %v1464
        %1538 = vmatprep.subr.bf16.mxu0 %v1491
        %1539 = vmatpush1.bf16.msra.mxu0 %v1488
        %1540 = vmatprep.subr.bf16.mxu0 0
        %1541 = vmatpush1.bf16.msra.mxu0 0
        %1542 = vmatprep.subr.bf16.mxu0 0
        %1543 = vmatpush1.bf16.msra.mxu0 0
        %1544 = vmatprep.subr.bf16.mxu0 0
        %1545 = vmatpush1.bf16.msra.mxu0 0
        %1546 = vmatprep.subr.bf16.mxu0 0
        %1547 = vmatpush1.bf16.msra.mxu0 0
        %1548 = vmatprep.subr.bf16.mxu0 0
        %1549 = vmatpush1.bf16.msra.mxu0 0
        %1550 = vmatprep.subr.bf16.mxu0 0
        %1551 = vmatpush1.bf16.msra.mxu0 0
        %1552 = vmatprep.subr.bf16.mxu0 0
        %1553 = vmatpush1.bf16.msra.mxu0 0
        %1554 = vmatprep.subr.bf16.mxu0 0
        %1555 = vmatpush1.bf16.msra.mxu0 0
        %1556 = vmatprep.subr.bf16.mxu0 0
        %1557 = vmatpush1.bf16.msra.mxu0 0
        %1558 = vmatprep.subr.bf16.mxu0 0
        %1559 = vmatpush1.bf16.msra.mxu0 0
        %1560 = vmatprep.subr.bf16.mxu0 0
        %1561 = vmatpush1.bf16.msra.mxu0 0
        %1562 = vmatprep.subr.bf16.mxu0 0
        %1563 = vmatpush1.bf16.msra.mxu0 0
        %1564 = vmatprep.subr.bf16.mxu0 0
        %1565 = vmatpush1.bf16.msra.mxu0 0
        %1566 = vmatprep.mubr.bf16.mxu0 0
        %1567 = vmatmul.mubr.bf16.gmra.mrb[0].mxu0 %v1479
        %v1568 = vpop.f32.mrb[0].mxu0
        %v1569 = vadd.f32 0.0, %v1568
        %v1570 = vpop.f32.mrb[0].mxu0
        %v1571 = vadd.f32 0.0, %v1570
        %v1572 = vpop.f32.mrb[0].mxu0
        %v1573 = vpop.f32.mrb[0].mxu0
        %1574 = vdwg.mxu0
        %v1575 = vadd.f32 %v1405, %v1528
        %v1576 = vadd.f32 %v1406, %v1530
        %v1577 = vadd.f32 %v1407, %v1569
        %v1578 = vadd.f32 %v1408, %v1571
        %v1579 = vmul.f32 %v1575, 0.5
        %v1580 = vtanh.pop %v1579
        %v1581 = vmul.f32 %v1580, 0.5
        %v1582 = vadd.f32 %v1581, 0.5
        %v1583 = vmul.f32 %v1576, 0.5
        %v1584 = vtanh.pop %v1583
        %v1585 = vmul.f32 %v1584, 0.5
        %v1586 = vadd.f32 %v1585, 0.5
        %v1587 = vtanh.pop %v1577
        %v1588 = vmul.f32 %v1578, 0.5
        %v1589 = vtanh.pop %v1588
        %v1590 = vmul.f32 %v1589, 0.5
        %v1591 = vadd.f32 %v1590, 0.5
        %v1592 = vmul.f32 %v1586, %v1400
        %v1593 = vmul.f32 %v1582, %v1587
        %v1594 = vadd.f32 %v1592, %v1593
        %v1595 = vtanh.pop %v1594
        %v1596 = vmul.f32 %v1591, %v1595
        %s1597 = scalar_lea.vmem [#allocation3], 32
        %1598 = vst.msk [vmem:[%s1597] sm:$0xff] %vm701, %v1596
        %v1599 = vld [vmem:[#allocation2 + $0xa0] sm:$0xff]
        %v1600 = vld [vmem:[#allocation2 + $0xa8] sm:$0xff]
        %v1601 = vld [vmem:[#allocation2 + $0xb0] sm:$0xff]
        %v1602 = vld [vmem:[#allocation2 + $0xb8] sm:$0xff]
        %v1603 = vpack.c.bf16 %v1596, %v1596
        %v1604 = vld [vmem:[#allocation9] sm:$0xff]
        %v1605 = vld [vmem:[#allocation9 + $0x8] sm:$0xff]
        %v1606 = vld [vmem:[#allocation9 + $0x10] sm:$0xff]
        %v1607 = vld [vmem:[#allocation9 + $0x18] sm:$0xff]
        %v1608 = vld [vmem:[#allocation9 + $0x20] sm:$0xff]
        %v1609 = vld [vmem:[#allocation9 + $0x28] sm:$0xff]
        %v1610 = vld [vmem:[#allocation9 + $0x30] sm:$0xff]
        %v1611 = vld [vmem:[#allocation9 + $0x38] sm:$0xff]
        %v1612 = vld [vmem:[#allocation9 + $0x40] sm:$0xff]
        %v1613 = vld [vmem:[#allocation9 + $0x48] sm:$0xff]
        %v1614 = vld [vmem:[#allocation9 + $0x50] sm:$0x77]
        %v1615 = vld [vmem:[#allocation9 + $0x58] sm:$0x77]
        %v1628 = vunpack.c.l.b16 %v1604
        %v1629 = vunpack.c.h.b16 %v1604
        %v1630 = vunpack.c.l.b16 %v1605
        %v1631 = vunpack.c.h.b16 %v1605
        %v1632 = vunpack.c.l.b16 %v1606
        %v1633 = vunpack.c.h.b16 %v1606
        %v1634 = vunpack.c.l.b16 %v1607
        %v1635 = vunpack.c.h.b16 %v1607
        %v1636 = vunpack.c.l.b16 %v1608
        %v1637 = vunpack.c.h.b16 %v1608
        %v1638 = vunpack.c.l.b16 %v1609
        %v1639 = vunpack.c.h.b16 %v1609
        %v1640 = vunpack.c.l.b16 %v1610
        %v1641 = vunpack.c.h.b16 %v1610
        %v1642 = vunpack.c.l.b16 %v1611
        %v1643 = vunpack.c.h.b16 %v1611
        %v1644 = vunpack.c.l.b16 %v1612
        %v1645 = vunpack.c.h.b16 %v1612
        %v1646 = vunpack.c.l.b16 %v1613
        %v1647 = vunpack.c.h.b16 %v1613
        %v1648 = vunpack.c.l.b16 %v1614
        %v1649 = vunpack.c.h.b16 %v1614
        %v1650 = vunpack.c.l.b16 %v1615
        %v1651 = vunpack.c.h.b16 %v1615
        %v1652 = vpack.c.b16 %v1632, %v1628
        %v1653 = vpack.c.b16 %v1633, %v1629
        %v1654 = vpack.c.b16 %v1634, %v1630
        %v1655 = vpack.c.b16 %v1635, %v1631
        %v1656 = vpack.c.b16 %v1640, %v1636
        %v1657 = vpack.c.b16 %v1641, %v1637
        %v1658 = vpack.c.b16 %v1642, %v1638
        %v1659 = vpack.c.b16 %v1643, %v1639
        %v1660 = vpack.c.b16 %v1648, %v1644
        %v1661 = vpack.c.b16 %v1649, %v1645
        %v1662 = vpack.c.b16 %v1650, %v1646
        %v1663 = vpack.c.b16 %v1651, %v1647
        %v1673 = vsel %vm701, %v1603, 0
        %v1676 = vsel %vm705, %v1660, 0
        %v1679 = vsel %vm705, %v1661, 0
        %v1682 = vsel %vm705, %v1662, 0
        %v1685 = vsel %vm705, %v1663, 0
        %1687 = vmatprep.subr.bf16.mxu0 %v1653
        %1688 = vmatpush1.bf16.msra.mxu0 %v1652
        %1689 = vmatprep.subr.bf16.mxu0 %v1657
        %1690 = vmatpush1.bf16.msra.mxu0 %v1656
        %1691 = vmatprep.subr.bf16.mxu0 %v1679
        %1692 = vmatpush1.bf16.msra.mxu0 %v1676
        %1693 = vmatprep.subr.bf16.mxu0 0
        %1694 = vmatpush1.bf16.msra.mxu0 0
        %1695 = vmatprep.subr.bf16.mxu0 0
        %1696 = vmatpush1.bf16.msra.mxu0 0
        %1697 = vmatprep.subr.bf16.mxu0 0
        %1698 = vmatpush1.bf16.msra.mxu0 0
        %1699 = vmatprep.subr.bf16.mxu0 0
        %1700 = vmatpush1.bf16.msra.mxu0 0
        %1701 = vmatprep.subr.bf16.mxu0 0
        %1702 = vmatpush1.bf16.msra.mxu0 0
        %1703 = vmatprep.subr.bf16.mxu0 0
        %1704 = vmatpush1.bf16.msra.mxu0 0
        %1705 = vmatprep.subr.bf16.mxu0 0
        %1706 = vmatpush1.bf16.msra.mxu0 0
        %1707 = vmatprep.subr.bf16.mxu0 0
        %1708 = vmatpush1.bf16.msra.mxu0 0
        %1709 = vmatprep.subr.bf16.mxu0 0
        %1710 = vmatpush1.bf16.msra.mxu0 0
        %1711 = vmatprep.subr.bf16.mxu0 0
        %1712 = vmatpush1.bf16.msra.mxu0 0
        %1713 = vmatprep.subr.bf16.mxu0 0
        %1714 = vmatpush1.bf16.msra.mxu0 0
        %1715 = vmatprep.subr.bf16.mxu0 0
        %1716 = vmatpush1.bf16.msra.mxu0 0
        %1717 = vmatprep.subr.bf16.mxu0 0
        %1718 = vmatpush1.bf16.msra.mxu0 0
        %1719 = vmatprep.mubr.bf16.mxu0 0
        %1720 = vmatmul.mubr.bf16.gmra.mrb[0].mxu0 %v1673
        %v1721 = vpop.f32.mrb[0].mxu0
        %v1722 = vadd.f32 0.0, %v1721
        %v1723 = vpop.f32.mrb[0].mxu0
        %v1724 = vadd.f32 0.0, %v1723
        %v1725 = vpop.f32.mrb[0].mxu0
        %v1726 = vpop.f32.mrb[0].mxu0
        %1727 = vdwg.mxu0
        %1728 = vmatprep.subr.bf16.mxu0 %v1655
        %1729 = vmatpush1.bf16.msra.mxu0 %v1654
        %1730 = vmatprep.subr.bf16.mxu0 %v1659
        %1731 = vmatpush1.bf16.msra.mxu0 %v1658
        %1732 = vmatprep.subr.bf16.mxu0 %v1685
        %1733 = vmatpush1.bf16.msra.mxu0 %v1682
        %1734 = vmatprep.subr.bf16.mxu0 0
        %1735 = vmatpush1.bf16.msra.mxu0 0
        %1736 = vmatprep.subr.bf16.mxu0 0
        %1737 = vmatpush1.bf16.msra.mxu0 0
        %1738 = vmatprep.subr.bf16.mxu0 0
        %1739 = vmatpush1.bf16.msra.mxu0 0
        %1740 = vmatprep.subr.bf16.mxu0 0
        %1741 = vmatpush1.bf16.msra.mxu0 0
        %1742 = vmatprep.subr.bf16.mxu0 0
        %1743 = vmatpush1.bf16.msra.mxu0 0
        %1744 = vmatprep.subr.bf16.mxu0 0
        %1745 = vmatpush1.bf16.msra.mxu0 0
        %1746 = vmatprep.subr.bf16.mxu0 0
        %1747 = vmatpush1.bf16.msra.mxu0 0
        %1748 = vmatprep.subr.bf16.mxu0 0
        %1749 = vmatpush1.bf16.msra.mxu0 0
        %1750 = vmatprep.subr.bf16.mxu0 0
        %1751 = vmatpush1.bf16.msra.mxu0 0
        %1752 = vmatprep.subr.bf16.mxu0 0
        %1753 = vmatpush1.bf16.msra.mxu0 0
        %1754 = vmatprep.subr.bf16.mxu0 0
        %1755 = vmatpush1.bf16.msra.mxu0 0
        %1756 = vmatprep.subr.bf16.mxu0 0
        %1757 = vmatpush1.bf16.msra.mxu0 0
        %1758 = vmatprep.subr.bf16.mxu0 0
        %1759 = vmatpush1.bf16.msra.mxu0 0
        %1760 = vmatprep.mubr.bf16.mxu0 0
        %1761 = vmatmul.mubr.bf16.gmra.mrb[0].mxu0 %v1673
        %v1762 = vpop.f32.mrb[0].mxu0
        %v1763 = vadd.f32 0.0, %v1762
        %v1764 = vpop.f32.mrb[0].mxu0
        %v1765 = vadd.f32 0.0, %v1764
        %v1766 = vpop.f32.mrb[0].mxu0
        %v1767 = vpop.f32.mrb[0].mxu0
        %1768 = vdwg.mxu0
        %v1769 = vadd.f32 %v1599, %v1722
        %v1770 = vadd.f32 %v1600, %v1724
        %v1771 = vadd.f32 %v1601, %v1763
        %v1772 = vadd.f32 %v1602, %v1765
        %v1773 = vmul.f32 %v1769, 0.5
        %v1774 = vtanh.pop %v1773
        %v1775 = vmul.f32 %v1774, 0.5
        %v1776 = vadd.f32 %v1775, 0.5
        %v1777 = vmul.f32 %v1770, 0.5
        %v1778 = vtanh.pop %v1777
        %v1779 = vmul.f32 %v1778, 0.5
        %v1780 = vadd.f32 %v1779, 0.5
        %v1781 = vtanh.pop %v1771
        %v1782 = vmul.f32 %v1772, 0.5
        %v1783 = vtanh.pop %v1782
        %v1784 = vmul.f32 %v1783, 0.5
        %v1785 = vadd.f32 %v1784, 0.5
        %v1786 = vmul.f32 %v1780, %v1594
        %v1787 = vmul.f32 %v1776, %v1781
        %v1788 = vadd.f32 %v1786, %v1787
        %v1789 = vtanh.pop %v1788
        %v1790 = vmul.f32 %v1785, %v1789
        %s1791 = scalar_lea.vmem [#allocation3], 40
        %1792 = vst.msk [vmem:[%s1791] sm:$0xff] %vm701, %v1790
        %v1793 = vld [vmem:[#allocation2 + $0xc0] sm:$0xff]
        %v1794 = vld [vmem:[#allocation2 + $0xc8] sm:$0xff]
        %v1795 = vld [vmem:[#allocation2 + $0xd0] sm:$0xff]
        %v1796 = vld [vmem:[#allocation2 + $0xd8] sm:$0xff]
        %v1797 = vpack.c.bf16 %v1790, %v1790
        %v1798 = vld [vmem:[#allocation9] sm:$0xff]
        %v1799 = vld [vmem:[#allocation9 + $0x8] sm:$0xff]
        %v1800 = vld [vmem:[#allocation9 + $0x10] sm:$0xff]
        %v1801 = vld [vmem:[#allocation9 + $0x18] sm:$0xff]
        %v1802 = vld [vmem:[#allocation9 + $0x20] sm:$0xff]
        %v1803 = vld [vmem:[#allocation9 + $0x28] sm:$0xff]
        %v1804 = vld [vmem:[#allocation9 + $0x30] sm:$0xff]
        %v1805 = vld [vmem:[#allocation9 + $0x38] sm:$0xff]
        %v1806 = vld [vmem:[#allocation9 + $0x40] sm:$0xff]
        %v1807 = vld [vmem:[#allocation9 + $0x48] sm:$0xff]
        %v1808 = vld [vmem:[#allocation9 + $0x50] sm:$0x77]
        %v1809 = vld [vmem:[#allocation9 + $0x58] sm:$0x77]
        %v1822 = vunpack.c.l.b16 %v1798
        %v1823 = vunpack.c.h.b16 %v1798
        %v1824 = vunpack.c.l.b16 %v1799
        %v1825 = vunpack.c.h.b16 %v1799
        %v1826 = vunpack.c.l.b16 %v1800
        %v1827 = vunpack.c.h.b16 %v1800
        %v1828 = vunpack.c.l.b16 %v1801
        %v1829 = vunpack.c.h.b16 %v1801
        %v1830 = vunpack.c.l.b16 %v1802
        %v1831 = vunpack.c.h.b16 %v1802
        %v1832 = vunpack.c.l.b16 %v1803
        %v1833 = vunpack.c.h.b16 %v1803
        %v1834 = vunpack.c.l.b16 %v1804
        %v1835 = vunpack.c.h.b16 %v1804
        %v1836 = vunpack.c.l.b16 %v1805
        %v1837 = vunpack.c.h.b16 %v1805
        %v1838 = vunpack.c.l.b16 %v1806
        %v1839 = vunpack.c.h.b16 %v1806
        %v1840 = vunpack.c.l.b16 %v1807
        %v1841 = vunpack.c.h.b16 %v1807
        %v1842 = vunpack.c.l.b16 %v1808
        %v1843 = vunpack.c.h.b16 %v1808
        %v1844 = vunpack.c.l.b16 %v1809
        %v1845 = vunpack.c.h.b16 %v1809
        %v1846 = vpack.c.b16 %v1826, %v1822
        %v1847 = vpack.c.b16 %v1827, %v1823
        %v1848 = vpack.c.b16 %v1828, %v1824
        %v1849 = vpack.c.b16 %v1829, %v1825
        %v1850 = vpack.c.b16 %v1834, %v1830
        %v1851 = vpack.c.b16 %v1835, %v1831
        %v1852 = vpack.c.b16 %v1836, %v1832
        %v1853 = vpack.c.b16 %v1837, %v1833
        %v1854 = vpack.c.b16 %v1842, %v1838
        %v1855 = vpack.c.b16 %v1843, %v1839
        %v1856 = vpack.c.b16 %v1844, %v1840
        %v1857 = vpack.c.b16 %v1845, %v1841
        %v1867 = vsel %vm701, %v1797, 0
        %v1870 = vsel %vm705, %v1854, 0
        %v1873 = vsel %vm705, %v1855, 0
        %v1876 = vsel %vm705, %v1856, 0
        %v1879 = vsel %vm705, %v1857, 0
        %1881 = vmatprep.subr.bf16.mxu0 %v1847
        %1882 = vmatpush1.bf16.msra.mxu0 %v1846
        %1883 = vmatprep.subr.bf16.mxu0 %v1851
        %1884 = vmatpush1.bf16.msra.mxu0 %v1850
        %1885 = vmatprep.subr.bf16.mxu0 %v1873
        %1886 = vmatpush1.bf16.msra.mxu0 %v1870
        %1887 = vmatprep.subr.bf16.mxu0 0
        %1888 = vmatpush1.bf16.msra.mxu0 0
        %1889 = vmatprep.subr.bf16.mxu0 0
        %1890 = vmatpush1.bf16.msra.mxu0 0
        %1891 = vmatprep.subr.bf16.mxu0 0
        %1892 = vmatpush1.bf16.msra.mxu0 0
        %1893 = vmatprep.subr.bf16.mxu0 0
        %1894 = vmatpush1.bf16.msra.mxu0 0
        %1895 = vmatprep.subr.bf16.mxu0 0
        %1896 = vmatpush1.bf16.msra.mxu0 0
        %1897 = vmatprep.subr.bf16.mxu0 0
        %1898 = vmatpush1.bf16.msra.mxu0 0
        %1899 = vmatprep.subr.bf16.mxu0 0
        %1900 = vmatpush1.bf16.msra.mxu0 0
        %1901 = vmatprep.subr.bf16.mxu0 0
        %1902 = vmatpush1.bf16.msra.mxu0 0
        %1903 = vmatprep.subr.bf16.mxu0 0
        %1904 = vmatpush1.bf16.msra.mxu0 0
        %1905 = vmatprep.subr.bf16.mxu0 0
        %1906 = vmatpush1.bf16.msra.mxu0 0
        %1907 = vmatprep.subr.bf16.mxu0 0
        %1908 = vmatpush1.bf16.msra.mxu0 0
        %1909 = vmatprep.subr.bf16.mxu0 0
        %1910 = vmatpush1.bf16.msra.mxu0 0
        %1911 = vmatprep.subr.bf16.mxu0 0
        %1912 = vmatpush1.bf16.msra.mxu0 0
        %1913 = vmatprep.mubr.bf16.mxu0 0
        %1914 = vmatmul.mubr.bf16.gmra.mrb[0].mxu0 %v1867
        %v1915 = vpop.f32.mrb[0].mxu0
        %v1916 = vadd.f32 0.0, %v1915
        %v1917 = vpop.f32.mrb[0].mxu0
        %v1918 = vadd.f32 0.0, %v1917
        %v1919 = vpop.f32.mrb[0].mxu0
        %v1920 = vpop.f32.mrb[0].mxu0
        %1921 = vdwg.mxu0
        %1922 = vmatprep.subr.bf16.mxu0 %v1849
        %1923 = vmatpush1.bf16.msra.mxu0 %v1848
        %1924 = vmatprep.subr.bf16.mxu0 %v1853
        %1925 = vmatpush1.bf16.msra.mxu0 %v1852
        %1926 = vmatprep.subr.bf16.mxu0 %v1879
        %1927 = vmatpush1.bf16.msra.mxu0 %v1876
        %1928 = vmatprep.subr.bf16.mxu0 0
        %1929 = vmatpush1.bf16.msra.mxu0 0
        %1930 = vmatprep.subr.bf16.mxu0 0
        %1931 = vmatpush1.bf16.msra.mxu0 0
        %1932 = vmatprep.subr.bf16.mxu0 0
        %1933 = vmatpush1.bf16.msra.mxu0 0
        %1934 = vmatprep.subr.bf16.mxu0 0
        %1935 = vmatpush1.bf16.msra.mxu0 0
        %1936 = vmatprep.subr.bf16.mxu0 0
        %1937 = vmatpush1.bf16.msra.mxu0 0
        %1938 = vmatprep.subr.bf16.mxu0 0
        %1939 = vmatpush1.bf16.msra.mxu0 0
        %1940 = vmatprep.subr.bf16.mxu0 0
        %1941 = vmatpush1.bf16.msra.mxu0 0
        %1942 = vmatprep.subr.bf16.mxu0 0
        %1943 = vmatpush1.bf16.msra.mxu0 0
        %1944 = vmatprep.subr.bf16.mxu0 0
        %1945 = vmatpush1.bf16.msra.mxu0 0
        %1946 = vmatprep.subr.bf16.mxu0 0
        %1947 = vmatpush1.bf16.msra.mxu0 0
        %1948 = vmatprep.subr.bf16.mxu0 0
        %1949 = vmatpush1.bf16.msra.mxu0 0
        %1950 = vmatprep.subr.bf16.mxu0 0
        %1951 = vmatpush1.bf16.msra.mxu0 0
        %1952 = vmatprep.subr.bf16.mxu0 0
        %1953 = vmatpush1.bf16.msra.mxu0 0
        %1954 = vmatprep.mubr.bf16.mxu0 0
        %1955 = vmatmul.mubr.bf16.gmra.mrb[0].mxu0 %v1867
        %v1956 = vpop.f32.mrb[0].mxu0
        %v1957 = vadd.f32 0.0, %v1956
        %v1958 = vpop.f32.mrb[0].mxu0
        %v1959 = vadd.f32 0.0, %v1958
        %v1960 = vpop.f32.mrb[0].mxu0
        %v1961 = vpop.f32.mrb[0].mxu0
        %1962 = vdwg.mxu0
        %v1963 = vadd.f32 %v1793, %v1916
        %v1964 = vadd.f32 %v1794, %v1918
        %v1965 = vadd.f32 %v1795, %v1957
        %v1966 = vadd.f32 %v1796, %v1959
        %v1967 = vmul.f32 %v1963, 0.5
        %v1968 = vtanh.pop %v1967
        %v1969 = vmul.f32 %v1968, 0.5
        %v1970 = vadd.f32 %v1969, 0.5
        %v1971 = vmul.f32 %v1964, 0.5
        %v1972 = vtanh.pop %v1971
        %v1973 = vmul.f32 %v1972, 0.5
        %v1974 = vadd.f32 %v1973, 0.5
        %v1975 = vtanh.pop %v1965
        %v1976 = vmul.f32 %v1966, 0.5
        %v1977 = vtanh.pop %v1976
        %v1978 = vmul.f32 %v1977, 0.5
        %v1979 = vadd.f32 %v1978, 0.5
        %v1980 = vmul.f32 %v1974, %v1788
        %v1981 = vmul.f32 %v1970, %v1975
        %v1982 = vadd.f32 %v1980, %v1981
        %v1983 = vtanh.pop %v1982
        %v1984 = vmul.f32 %v1979, %v1983
        %s1985 = scalar_lea.vmem [#allocation3], 48
        %1986 = vst.msk [vmem:[%s1985] sm:$0xff] %vm701, %v1984
        %v1987 = vld [vmem:[#allocation2 + $0xe0] sm:$0xff]
        %v1988 = vld [vmem:[#allocation2 + $0xe8] sm:$0xff]
        %v1989 = vld [vmem:[#allocation2 + $0xf0] sm:$0xff]
        %v1990 = vld [vmem:[#allocation2 + $0xf8] sm:$0xff]
        %v1991 = vpack.c.bf16 %v1984, %v1984
        %v1992 = vld [vmem:[#allocation9] sm:$0xff]
        %v1993 = vld [vmem:[#allocation9 + $0x8] sm:$0xff]
        %v1994 = vld [vmem:[#allocation9 + $0x10] sm:$0xff]
        %v1995 = vld [vmem:[#allocation9 + $0x18] sm:$0xff]
        %v1996 = vld [vmem:[#allocation9 + $0x20] sm:$0xff]
        %v1997 = vld [vmem:[#allocation9 + $0x28] sm:$0xff]
        %v1998 = vld [vmem:[#allocation9 + $0x30] sm:$0xff]
        %v1999 = vld [vmem:[#allocation9 + $0x38] sm:$0xff]
        %v2000 = vld [vmem:[#allocation9 + $0x40] sm:$0xff]
        %v2001 = vld [vmem:[#allocation9 + $0x48] sm:$0xff]
        %v2002 = vld [vmem:[#allocation9 + $0x50] sm:$0x77]
        %v2003 = vld [vmem:[#allocation9 + $0x58] sm:$0x77]
        %v2016 = vunpack.c.l.b16 %v1992
        %v2017 = vunpack.c.h.b16 %v1992
        %v2018 = vunpack.c.l.b16 %v1993
        %v2019 = vunpack.c.h.b16 %v1993
        %v2020 = vunpack.c.l.b16 %v1994
        %v2021 = vunpack.c.h.b16 %v1994
        %v2022 = vunpack.c.l.b16 %v1995
        %v2023 = vunpack.c.h.b16 %v1995
        %v2024 = vunpack.c.l.b16 %v1996
        %v2025 = vunpack.c.h.b16 %v1996
        %v2026 = vunpack.c.l.b16 %v1997
        %v2027 = vunpack.c.h.b16 %v1997
        %v2028 = vunpack.c.l.b16 %v1998
        %v2029 = vunpack.c.h.b16 %v1998
        %v2030 = vunpack.c.l.b16 %v1999
        %v2031 = vunpack.c.h.b16 %v1999
        %v2032 = vunpack.c.l.b16 %v2000
        %v2033 = vunpack.c.h.b16 %v2000
        %v2034 = vunpack.c.l.b16 %v2001
        %v2035 = vunpack.c.h.b16 %v2001
        %v2036 = vunpack.c.l.b16 %v2002
        %v2037 = vunpack.c.h.b16 %v2002
        %v2038 = vunpack.c.l.b16 %v2003
        %v2039 = vunpack.c.h.b16 %v2003
        %v2040 = vpack.c.b16 %v2020, %v2016
        %v2041 = vpack.c.b16 %v2021, %v2017
        %v2042 = vpack.c.b16 %v2022, %v2018
        %v2043 = vpack.c.b16 %v2023, %v2019
        %v2044 = vpack.c.b16 %v2028, %v2024
        %v2045 = vpack.c.b16 %v2029, %v2025
        %v2046 = vpack.c.b16 %v2030, %v2026
        %v2047 = vpack.c.b16 %v2031, %v2027
        %v2048 = vpack.c.b16 %v2036, %v2032
        %v2049 = vpack.c.b16 %v2037, %v2033
        %v2050 = vpack.c.b16 %v2038, %v2034
        %v2051 = vpack.c.b16 %v2039, %v2035
        %v2061 = vsel %vm701, %v1991, 0
        %v2064 = vsel %vm705, %v2048, 0
        %v2067 = vsel %vm705, %v2049, 0
        %v2070 = vsel %vm705, %v2050, 0
        %v2073 = vsel %vm705, %v2051, 0
        %2075 = vmatprep.subr.bf16.mxu0 %v2041
        %2076 = vmatpush1.bf16.msra.mxu0 %v2040
        %2077 = vmatprep.subr.bf16.mxu0 %v2045
        %2078 = vmatpush1.bf16.msra.mxu0 %v2044
        %2079 = vmatprep.subr.bf16.mxu0 %v2067
        %2080 = vmatpush1.bf16.msra.mxu0 %v2064
        %2081 = vmatprep.subr.bf16.mxu0 0
        %2082 = vmatpush1.bf16.msra.mxu0 0
        %2083 = vmatprep.subr.bf16.mxu0 0
        %2084 = vmatpush1.bf16.msra.mxu0 0
        %2085 = vmatprep.subr.bf16.mxu0 0
        %2086 = vmatpush1.bf16.msra.mxu0 0
        %2087 = vmatprep.subr.bf16.mxu0 0
        %2088 = vmatpush1.bf16.msra.mxu0 0
        %2089 = vmatprep.subr.bf16.mxu0 0
        %2090 = vmatpush1.bf16.msra.mxu0 0
        %2091 = vmatprep.subr.bf16.mxu0 0
        %2092 = vmatpush1.bf16.msra.mxu0 0
        %2093 = vmatprep.subr.bf16.mxu0 0
        %2094 = vmatpush1.bf16.msra.mxu0 0
        %2095 = vmatprep.subr.bf16.mxu0 0
        %2096 = vmatpush1.bf16.msra.mxu0 0
        %2097 = vmatprep.subr.bf16.mxu0 0
        %2098 = vmatpush1.bf16.msra.mxu0 0
        %2099 = vmatprep.subr.bf16.mxu0 0
        %2100 = vmatpush1.bf16.msra.mxu0 0
        %2101 = vmatprep.subr.bf16.mxu0 0
        %2102 = vmatpush1.bf16.msra.mxu0 0
        %2103 = vmatprep.subr.bf16.mxu0 0
        %2104 = vmatpush1.bf16.msra.mxu0 0
        %2105 = vmatprep.subr.bf16.mxu0 0
        %2106 = vmatpush1.bf16.msra.mxu0 0
        %2107 = vmatprep.mubr.bf16.mxu0 0
        %2108 = vmatmul.mubr.bf16.gmra.mrb[0].mxu0 %v2061
        %v2109 = vpop.f32.mrb[0].mxu0
        %v2110 = vadd.f32 0.0, %v2109
        %v2111 = vpop.f32.mrb[0].mxu0
        %v2112 = vadd.f32 0.0, %v2111
        %v2113 = vpop.f32.mrb[0].mxu0
        %v2114 = vpop.f32.mrb[0].mxu0
        %2115 = vdwg.mxu0
        %2116 = vmatprep.subr.bf16.mxu0 %v2043
        %2117 = vmatpush1.bf16.msra.mxu0 %v2042
        %2118 = vmatprep.subr.bf16.mxu0 %v2047
        %2119 = vmatpush1.bf16.msra.mxu0 %v2046
        %2120 = vmatprep.subr.bf16.mxu0 %v2073
        %2121 = vmatpush1.bf16.msra.mxu0 %v2070
        %2122 = vmatprep.subr.bf16.mxu0 0
        %2123 = vmatpush1.bf16.msra.mxu0 0
        %2124 = vmatprep.subr.bf16.mxu0 0
        %2125 = vmatpush1.bf16.msra.mxu0 0
        %2126 = vmatprep.subr.bf16.mxu0 0
        %2127 = vmatpush1.bf16.msra.mxu0 0
        %2128 = vmatprep.subr.bf16.mxu0 0
        %2129 = vmatpush1.bf16.msra.mxu0 0
        %2130 = vmatprep.subr.bf16.mxu0 0
        %2131 = vmatpush1.bf16.msra.mxu0 0
        %2132 = vmatprep.subr.bf16.mxu0 0
        %2133 = vmatpush1.bf16.msra.mxu0 0
        %2134 = vmatprep.subr.bf16.mxu0 0
        %2135 = vmatpush1.bf16.msra.mxu0 0
        %2136 = vmatprep.subr.bf16.mxu0 0
        %2137 = vmatpush1.bf16.msra.mxu0 0
        %2138 = vmatprep.subr.bf16.mxu0 0
        %2139 = vmatpush1.bf16.msra.mxu0 0
        %2140 = vmatprep.subr.bf16.mxu0 0
        %2141 = vmatpush1.bf16.msra.mxu0 0
        %2142 = vmatprep.subr.bf16.mxu0 0
        %2143 = vmatpush1.bf16.msra.mxu0 0
        %2144 = vmatprep.subr.bf16.mxu0 0
        %2145 = vmatpush1.bf16.msra.mxu0 0
        %2146 = vmatprep.subr.bf16.mxu0 0
        %2147 = vmatpush1.bf16.msra.mxu0 0
        %2148 = vmatprep.mubr.bf16.mxu0 0
        %2149 = vmatmul.mubr.bf16.gmra.mrb[0].mxu0 %v2061
        %v2150 = vpop.f32.mrb[0].mxu0
        %v2151 = vadd.f32 0.0, %v2150
        %v2152 = vpop.f32.mrb[0].mxu0
        %v2153 = vadd.f32 0.0, %v2152
        %v2154 = vpop.f32.mrb[0].mxu0
        %v2155 = vpop.f32.mrb[0].mxu0
        %2156 = vdwg.mxu0
        %v2157 = vadd.f32 %v1987, %v2110
        %v2158 = vadd.f32 %v1988, %v2112
        %v2159 = vadd.f32 %v1989, %v2151
        %v2160 = vadd.f32 %v1990, %v2153
        %v2161 = vmul.f32 %v2157, 0.5
        %v2162 = vtanh.pop %v2161
        %v2163 = vmul.f32 %v2162, 0.5
        %v2164 = vadd.f32 %v2163, 0.5
        %v2165 = vmul.f32 %v2158, 0.5
        %v2166 = vtanh.pop %v2165
        %v2167 = vmul.f32 %v2166, 0.5
        %v2168 = vadd.f32 %v2167, 0.5
        %v2169 = vtanh.pop %v2159
        %v2170 = vmul.f32 %v2160, 0.5
        %v2171 = vtanh.pop %v2170
        %v2172 = vmul.f32 %v2171, 0.5
        %v2173 = vadd.f32 %v2172, 0.5
        %v2174 = vmul.f32 %v2168, %v1982
        %v2175 = vmul.f32 %v2164, %v2169
        %v2176 = vadd.f32 %v2174, %v2175
        %v2177 = vtanh.pop %v2176
        %v2178 = vmul.f32 %v2173, %v2177
        %s2179 = scalar_lea.vmem [#allocation3], 56
        %2180 = vst.msk [vmem:[%s2179] sm:$0xff] %vm701, %v2178
        %v2181 = vld [vmem:[#allocation3] sm:$0xff]
        %v2182 = vld [vmem:[#allocation3 + $0x8] sm:$0xff]
        %v2183 = vld [vmem:[#allocation3 + $0x10] sm:$0xff]
        %v2184 = vld [vmem:[#allocation3 + $0x18] sm:$0xff]
        %v2185 = vld [vmem:[#allocation3 + $0x20] sm:$0xff]
        %v2186 = vld [vmem:[#allocation3 + $0x28] sm:$0xff]
        %v2187 = vld [vmem:[#allocation3 + $0x30] sm:$0xff]
        %v2188 = vld [vmem:[#allocation3 + $0x38] sm:$0xff]
        %v2189 = vsel %vm701, %v2181, 0.0
        %v2190 = vsel %vm701, %v2182, 0.0
        %v2191 = vadd.f32 %v2189, %v2190
        %v2192 = vsel %vm701, %v2183, 0.0
        %v2193 = vadd.f32 %v2191, %v2192
        %v2194 = vsel %vm701, %v2184, 0.0
        %v2195 = vadd.f32 %v2193, %v2194
        %v2196 = vsel %vm701, %v2185, 0.0
        %v2197 = vadd.f32 %v2195, %v2196
        %v2198 = vsel %vm701, %v2186, 0.0
        %v2199 = vadd.f32 %v2197, %v2198
        %v2200 = vsel %vm701, %v2187, 0.0
        %v2201 = vadd.f32 %v2199, %v2200
        %v2202 = vsel %vm701, %v2188, 0.0
        %v2203 = vadd.f32 %v2201, %v2202
        %v2204 = vrcp.pop 8.0
        %v2205 = vmul.f32 %v2203, %v2204
        %v2206 = vsub.f32 %v2181, %v2205
        %v2207 = vsub.f32 %v2182, %v2205
        %v2208 = vsub.f32 %v2183, %v2205
        %v2209 = vsub.f32 %v2184, %v2205
        %v2210 = vsub.f32 %v2185, %v2205
        %v2211 = vsub.f32 %v2186, %v2205
        %v2212 = vsub.f32 %v2187, %v2205
        %v2213 = vsub.f32 %v2188, %v2205
        %v2214 = vmul.f32 %v2206, %v2206
        %v2215 = vmul.f32 %v2207, %v2207
        %v2216 = vmul.f32 %v2208, %v2208
        %v2217 = vmul.f32 %v2209, %v2209
        %v2218 = vmul.f32 %v2210, %v2210
        %v2219 = vmul.f32 %v2211, %v2211
        %v2220 = vmul.f32 %v2212, %v2212
        %v2221 = vmul.f32 %v2213, %v2213
        %v2222 = vsel %vm701, %v2214, 0.0
        %v2223 = vsel %vm701, %v2215, 0.0
        %v2224 = vadd.f32 %v2222, %v2223
        %v2225 = vsel %vm701, %v2216, 0.0
        %v2226 = vadd.f32 %v2224, %v2225
        %v2227 = vsel %vm701, %v2217, 0.0
        %v2228 = vadd.f32 %v2226, %v2227
        %v2229 = vsel %vm701, %v2218, 0.0
        %v2230 = vadd.f32 %v2228, %v2229
        %v2231 = vsel %vm701, %v2219, 0.0
        %v2232 = vadd.f32 %v2230, %v2231
        %v2233 = vsel %vm701, %v2220, 0.0
        %v2234 = vadd.f32 %v2232, %v2233
        %v2235 = vsel %vm701, %v2221, 0.0
        %v2236 = vadd.f32 %v2234, %v2235
        %v2237 = vmul.f32 %v2236, %v2204
        %v2238 = vld [vmem:[%s4] sm:$0x1]
        %v2239 = vadd.f32 %v2237, 1e-05
        %v2240 = vrsqrt.pop %v2239
        %v2242 = vlaneseq
        %v2243 = vshrl.u32 %v2242, 7
        %v2244 = vsub.s32 0, %v2243
        %v2245 = vrot.slane %v2238, %v2244
        %v2247 = vmul.f32 %v2245, %v2240
        %v2248 = vld [vmem:[%s6] sm:$0x1]
        %v2250 = vlaneseq
        %v2251 = vshrl.u32 %v2250, 7
        %v2252 = vsub.s32 0, %v2251
        %v2253 = vrot.slane %v2248, %v2252
        %v2255 = vmul.f32 %v2247, %v2253
        %v2256 = vld [vmem:[#allocation4] sm:$0x1]
        %v2257 = vld [vmem:[%s5] sm:$0x1]
        %v2258 = vmul.f32 %v2205, %v2247
        %v2260 = vlaneseq
        %v2261 = vshrl.u32 %v2260, 7
        %v2262 = vsub.s32 0, %v2261
        %v2263 = vrot.slane %v2257, %v2262
        %v2265 = vsub.f32 %v2263, %v2258
        %v2266 = vmul.f32 %v2265, %v2253
        %v2267 = vsel %vm701, %v2266, 0.0
        %2268 = vadd.xlane.f32.xlu0 %v2267
        %v2269 = vpop.xlane.xlu0 %2268
        %2271 = vset.pattern.permute.xlu0 0
        %2272 = vperm.xlu0 %2271, %v2256
        %v2273 = vpop.permute.xlu0 %2272
        %v2275 = vlaneseq
        %v2276 = vshrl.u32 %v2275, 7
        %v2277 = vsub.s32 0, %v2276
        %v2278 = vrot.slane %v2273, %v2277
        %v2279 = vadd.f32 %v2278, %v2269
        %v2280 = vmul.f32 %v2181, %v2255
        %v2281 = vmul.f32 %v2182, %v2255
        %v2282 = vmul.f32 %v2183, %v2255
        %v2283 = vmul.f32 %v2184, %v2255
        %v2284 = vmul.f32 %v2185, %v2255
        %v2285 = vmul.f32 %v2186, %v2255
        %v2286 = vmul.f32 %v2187, %v2255
        %v2287 = vmul.f32 %v2188, %v2255
        %v2288 = vsel %vm701, %v2280, 0.0
        %2289 = vadd.xlane.f32.xlu0 %v2288
        %v2290 = vpop.xlane.xlu0 %2289
        %v2291 = vsel %vm701, %v2281, 0.0
        %2292 = vadd.xlane.f32.xlu0 %v2291
        %v2293 = vpop.xlane.xlu0 %2292
        %v2294 = vsel %vm701, %v2282, 0.0
        %2295 = vadd.xlane.f32.xlu0 %v2294
        %v2296 = vpop.xlane.xlu0 %2295
        %v2297 = vsel %vm701, %v2283, 0.0
        %2298 = vadd.xlane.f32.xlu0 %v2297
        %v2299 = vpop.xlane.xlu0 %2298
        %v2300 = vsel %vm701, %v2284, 0.0
        %2301 = vadd.xlane.f32.xlu0 %v2300
        %v2302 = vpop.xlane.xlu0 %2301
        %v2303 = vsel %vm701, %v2285, 0.0
        %2304 = vadd.xlane.f32.xlu0 %v2303
        %v2305 = vpop.xlane.xlu0 %2304
        %v2306 = vsel %vm701, %v2286, 0.0
        %2307 = vadd.xlane.f32.xlu0 %v2306
        %v2308 = vpop.xlane.xlu0 %2307
        %v2309 = vsel %vm701, %v2287, 0.0
        %2310 = vadd.xlane.f32.xlu0 %v2309
        %v2311 = vpop.xlane.xlu0 %2310
        %v2312 = vadd.f32 %v2290, %v2279
        %v2313 = vadd.f32 %v2293, %v2279
        %v2314 = vadd.f32 %v2296, %v2279
        %v2315 = vadd.f32 %v2299, %v2279
        %v2316 = vadd.f32 %v2302, %v2279
        %v2317 = vadd.f32 %v2305, %v2279
        %v2318 = vadd.f32 %v2308, %v2279
        %v2319 = vadd.f32 %v2311, %v2279
        %v2320 = vmul.f32 %v2312, 0.5
        %v2321 = vmul.f32 %v2313, 0.5
        %v2322 = vmul.f32 %v2314, 0.5
        %v2323 = vmul.f32 %v2315, 0.5
        %v2324 = vmul.f32 %v2316, 0.5
        %v2325 = vmul.f32 %v2317, 0.5
        %v2326 = vmul.f32 %v2318, 0.5
        %v2327 = vmul.f32 %v2319, 0.5
        %v2328 = vtanh.pop %v2320
        %v2329 = vtanh.pop %v2321
        %v2330 = vtanh.pop %v2322
        %v2331 = vtanh.pop %v2323
        %v2332 = vtanh.pop %v2324
        %v2333 = vtanh.pop %v2325
        %v2334 = vtanh.pop %v2326
        %v2335 = vtanh.pop %v2327
        %v2336 = vmul.f32 %v2328, 0.5
        %v2337 = vmul.f32 %v2329, 0.5
        %v2338 = vmul.f32 %v2330, 0.5
        %v2339 = vmul.f32 %v2331, 0.5
        %v2340 = vmul.f32 %v2332, 0.5
        %v2341 = vmul.f32 %v2333, 0.5
        %v2342 = vmul.f32 %v2334, 0.5
        %v2343 = vmul.f32 %v2335, 0.5
        %v2344 = vadd.f32 %v2336, 0.5
        %v2345 = vadd.f32 %v2337, 0.5
        %v2346 = vadd.f32 %v2338, 0.5
        %v2347 = vadd.f32 %v2339, 0.5
        %v2348 = vadd.f32 %v2340, 0.5
        %v2349 = vadd.f32 %v2341, 0.5
        %v2350 = vadd.f32 %v2342, 0.5
        %v2351 = vadd.f32 %v2343, 0.5
        %v2360 = vlaneseq
        %v2361 = vand.u32 %v2360, 127
        %v2362 = vlaneseq
        %v2363 = vshrl.u32 %v2362, 7
        %v2364 = vsub.s32 %v2361, %v2363
        %v2365 = vrot.slane %v2344, %v2364
        %v2366 = vlaneseq
        %v2367 = vshrl.u32 %v2366, 7
        %v2368 = vsub.s32 %v2361, %v2367
        %v2369 = vrot.slane %v2345, %v2368
        %v2370 = vlaneseq
        %v2371 = vshrl.u32 %v2370, 7
        %v2372 = vsub.s32 %v2361, %v2371
        %v2373 = vrot.slane %v2346, %v2372
        %v2374 = vlaneseq
        %v2375 = vshrl.u32 %v2374, 7
        %v2376 = vsub.s32 %v2361, %v2375
        %v2377 = vrot.slane %v2347, %v2376
        %v2378 = vlaneseq
        %v2379 = vshrl.u32 %v2378, 7
        %v2380 = vsub.s32 %v2361, %v2379
        %v2381 = vrot.slane %v2348, %v2380
        %v2382 = vlaneseq
        %v2383 = vshrl.u32 %v2382, 7
        %v2384 = vsub.s32 %v2361, %v2383
        %v2385 = vrot.slane %v2349, %v2384
        %v2386 = vlaneseq
        %v2387 = vshrl.u32 %v2386, 7
        %v2388 = vsub.s32 %v2361, %v2387
        %v2389 = vrot.slane %v2350, %v2388
        %v2390 = vlaneseq
        %v2391 = vshrl.u32 %v2390, 7
        %v2392 = vsub.s32 %v2361, %v2391
        %v2393 = vrot.slane %v2351, %v2392
        %vm2394 = vcmask 1041409
        %v2395 = vsel %vm2394, %v2369, %v2365
        %vm2396 = vcmask 1042434
        %v2397 = vsel %vm2396, %v2373, %v2395
        %vm2398 = vcmask 1043459
        %v2399 = vsel %vm2398, %v2377, %v2397
        %vm2400 = vcmask 1044484
        %v2401 = vsel %vm2400, %v2381, %v2399
        %vm2402 = vcmask 1045509
        %v2403 = vsel %vm2402, %v2385, %v2401
        %vm2404 = vcmask 1046534
        %v2405 = vsel %vm2404, %v2389, %v2403
        %vm2406 = vcmask 1047559
        %v2407 = vsel %vm2406, %v2393, %v2405
        %2409 = vxpose.xlu0.b32.start [1/16] %v2407, 128
        %2410 = vxpose.xlu0.b32.cont [2/16] 0.0, 128
        %2411 = vxpose.xlu0.b32.cont [3/16] 0.0, 128
        %2412 = vxpose.xlu0.b32.cont [4/16] 0.0, 128
        %2413 = vxpose.xlu0.b32.cont [5/16] 0.0, 128
        %2414 = vxpose.xlu0.b32.cont [6/16] 0.0, 128
        %2415 = vxpose.xlu0.b32.cont [7/16] 0.0, 128
        %2416 = vxpose.xlu0.b32.cont [8/16] 0.0, 128
        %2417 = vxpose.xlu0.b32.cont [9/16] 0.0, 128
        %2418 = vxpose.xlu0.b32.cont [10/16] 0.0, 128
        %2419 = vxpose.xlu0.b32.cont [11/16] 0.0, 128
        %2420 = vxpose.xlu0.b32.cont [12/16] 0.0, 128
        %2421 = vxpose.xlu0.b32.cont [13/16] 0.0, 128
        %2422 = vxpose.xlu0.b32.cont [14/16] 0.0, 128
        %2423 = vxpose.xlu0.b32.cont [15/16] 0.0, 128
        %2424 = vxpose.xlu0.b32.end [16/16] 0.0, 128
        %v2425 = vpop.trf.xlu0
        %v2426 = vpop.trf.xlu0
        %v2427 = vpop.trf.xlu0
        %v2428 = vpop.trf.xlu0
        %v2429 = vpop.trf.xlu0
        %v2430 = vpop.trf.xlu0
        %v2431 = vpop.trf.xlu0
        %v2432 = vpop.trf.xlu0
        %v2433 = vpop.trf.xlu0
        %v2434 = vpop.trf.xlu0
        %v2435 = vpop.trf.xlu0
        %v2436 = vpop.trf.xlu0
        %v2437 = vpop.trf.xlu0
        %v2438 = vpop.trf.xlu0
        %v2439 = vpop.trf.xlu0
        %v2440 = vpop.trf.xlu0
        %vm2441 = vcmask 64512
        %2442 = vst.msk [vmem:[%s353] sm:$0xff] %vm2441, %v2425
        %p2443 = scmp.lt.s32.totalorder %s25, 1
        %s2444 = scalar_select %p2443, %s25, 1
        %s2445 = smul.addr %s2444, 8
        %s2446 = scalar_lea.vmem %s8, %s2445
        // Predicated region
        $region65: #{tpu_custom_call.1} parent=51 // pred_check
          %p2447 = pneg %p216
        $region66: #{tpu_custom_call.1} parent=51 // pred_check_branch
          %2449 = sbr.rel (%p2447) target = $region68
        $region67: #{tpu_custom_call.1} parent=51 // pred_region
          _
        $region68: #{tpu_custom_call.1} parent=51 // pred_fallthru
          _
      $region52: #{tpu_custom_call.1} parent=5 // pred_fallthru
        _
      %p2450 = scmp.le.s32.totalorder 2, %s20
      // Predicated region
      $region69: #{tpu_custom_call.1} parent=5 // pred_check
        %p2451 = pneg %p2450
      $region70: #{tpu_custom_call.1} parent=5 // pred_check_branch
        %2453 = sbr.rel (%p2451) target = $region72
      $region71: #{tpu_custom_call.1} parent=5 // pred_region
        %s2454 = ssub.s32 %s20, 2
        // Predicated region
        $region73: #{tpu_custom_call.1} parent=71 // pred_check
          %p2455 = pneg %p222
        $region74: #{tpu_custom_call.1} parent=71 // pred_check_branch
          %2457 = sbr.rel (%p2455) target = $region76
        $region75: #{tpu_custom_call.1} parent=71 // pred_region
          %p2458 = scmp.lt.s32.totalorder %s26, 1
          %s2459 = scalar_select %p2458, %s26, 1
          %s2460 = smul.addr %s2459, 8
          %s2461 = scalar_lea.vmem %s8, %s2460
        $region76: #{tpu_custom_call.1} parent=71 // pred_fallthru
          _
      $region72: #{tpu_custom_call.1} parent=5 // pred_fallthru
        _
    $region6: #{tpu_custom_call.1} parent=1 // loop_footer
      %s24 = sadd.s32 1, %s20
    $region7: #{tpu_custom_call.1} parent=1 // loop_footer_branch
      %19 = sbr.rel target = $region3
    $region8: #{tpu_custom_call.1} parent=1 // loop_exit
      _
    %2462 = vsyncpa [#allocation6], 1
    %s2463 = scalar_lea.sflag [#allocation6], 1
    %2464 = vsyncpa %s2463, 1
    %2465 = vsyncpa [#allocation8], 1

</llo_original>
